<compile_context>
chip_gen: v7x
topology: tpu7x:2x2x1
jax: 0.10.0
libtpu: 0.0.40
codegen_flags: <defaults>
</compile_context>

<pallas_src>
import functools

import jax
import jax.numpy as jnp
from jax.experimental import pallas as pl
from jax.experimental.pallas import tpu as pltpu


# --------------------------- kernel ---------------------------

def _sgmae_fused_kernel(adj_ref, x_ref, w1_ref, b1_ref, w2_ref, b2_ref,
                        wc_ref, bc_ref, out_ref, *, num_tiles):
    """Fused 2-layer GCN encoder + linear classifier for one row tile.

    H1 (full graph) is computed on-chip per program (needed for the 2-hop
    dependency); the layer-2 aggregation + classifier are done only for this
    program's row tile of the output.
    """
    tm = out_ref.shape[0]
    bf16 = jnp.bfloat16

    adj = adj_ref[...]                                     # (n, n) bf16, read once

    # Pre-fold layer-1 feature transform: XW1 = X @ W1   (tiny: n x f_in x h)
    xw1 = jnp.dot(x_ref[...], w1_ref[...],
                  preferred_element_type=jnp.float32)

    # Layer-1 aggregation over the FULL graph: H1 = relu(A_hat @ XW1 + b1)
    h1 = jnp.maximum(
        jnp.dot(adj, xw1.astype(bf16), preferred_element_type=jnp.float32)
        + b1_ref[...], 0.0)

    # Pre-fold layer-2 feature transform: H1W2 = H1 @ W2  (tiny: n x h x h)
    h1w2 = jnp.dot(h1.astype(bf16), w2_ref[...],
                   preferred_element_type=jnp.float32)

    # Layer-2 aggregation only for this program's row tile.
    if num_tiles == 1:
        adj_rows = adj
    else:
        row0 = pl.multiple_of(pl.program_id(0) * tm, tm)
        adj_rows = adj_ref[pl.ds(row0, tm), :]

    rep = jnp.maximum(
        jnp.dot(adj_rows, h1w2.astype(bf16), preferred_element_type=jnp.float32)
        + b2_ref[...], 0.0)

    # Classifier head: OUT = REP @ Wc + bc   (written directly, no padding)
    out_ref[...] = (jnp.dot(rep.astype(bf16), wc_ref[...],
                            preferred_element_type=jnp.float32)
                    + bc_ref[...])


# --------------------------- wrapper ---------------------------

def _num_row_tiles(n):
    # v7x exposes 2 TensorCores per chip: use a 2-point "parallel" row-tile
    # axis there.  Single-TC chips (v5e/v6e) get one full-block grid step.
    try:
        kind = jax.devices()[0].device_kind.lower()
    except Exception:  # pragma: no cover - defensive
        kind = ""
    two_core = ("v7" in kind) or ("7x" in kind)
    if two_core and n % 2 == 0 and (n // 2) % 8 == 0:
        return 2
    return 1


def sgmae_forward(adj_hat, x, w1, b1, w2, b2, wc, bc):
    """SGMAE forward: 2-layer GCN encoder (gmae.embed) + linear classifier (clf)."""
    n, f_in = x.shape
    hidden = w1.shape[1]
    n_classes = wc.shape[1]

    bf16 = jnp.bfloat16
    adj_b = adj_hat.astype(bf16)
    x_b = x.astype(bf16)
    w1_b = w1.astype(bf16)
    w2_b = w2.astype(bf16)
    wc_b = wc.astype(bf16)
    b1_p = b1.reshape(1, hidden).astype(jnp.float32)
    b2_p = b2.reshape(1, hidden).astype(jnp.float32)
    bc_p = bc.reshape(1, n_classes).astype(jnp.float32)

    num_tiles = _num_row_tiles(n)
    tm = n // num_tiles

    # Advisory cost estimate (includes the duplicated layer-1 prologue per tile).
    flops = (num_tiles * (2 * n * f_in * hidden      # X @ W1
                          + 2 * n * n * hidden       # A_hat @ XW1
                          + 2 * n * hidden * hidden) # H1 @ W2
             + 2 * n * n * hidden                    # A_hat_rows @ H1W2 (total)
             + 2 * n * hidden * n_classes)           # REP @ Wc
    bytes_accessed = (adj_b.size * 2 + x_b.size * 2 + w1_b.size * 2
                      + w2_b.size * 2 + wc_b.size * 2
                      + (b1_p.size + b2_p.size + bc_p.size) * 4
                      + n * n_classes * 4)
    cost = pl.CostEstimate(flops=int(flops), transcendentals=0,
                           bytes_accessed=int(bytes_accessed))

    # Constant (grid-invariant) full-array blocks.  All residents are tiny
    # (< 1 MiB total) so default buffering is harmless here.
    def full(shape):
        return pl.BlockSpec(shape, lambda i: (0, 0))

    out = pl.pallas_call(
        functools.partial(_sgmae_fused_kernel, num_tiles=num_tiles),
        out_shape=jax.ShapeDtypeStruct((n, n_classes), jnp.float32),
        grid_spec=pltpu.PrefetchScalarGridSpec(
            num_scalar_prefetch=0,
            grid=(num_tiles,),
            in_specs=[
                full((n, n)),               # A_hat (read once, resident)
                full((n, f_in)),            # X
                full((f_in, hidden)),       # W1
                full((1, hidden)),          # b1
                full((hidden, hidden)),     # W2
                full((1, hidden)),          # b2
                full((hidden, n_classes)),  # Wc
                full((1, n_classes)),       # bc
            ],
            out_specs=pl.BlockSpec((tm, n_classes), lambda i: (i, 0)),
        ),
        compiler_params=pltpu.CompilerParams(
            dimension_semantics=("parallel",),   # shards row tiles across TCs on v7x
            vmem_limit_bytes=48 << 20,           # safe on v7x (64 MiB phys), ample here
        ),
        cost_estimate=cost,
    )(adj_b, x_b, w1_b, b1_p, w2_b, b2_p, wc_b, bc_p)
    return out


# --------------------------- references & data ---------------------------

def _reference_f32(adj, x, w1, b1, w2, b2, wc, bc):
    h1 = jnp.maximum(adj @ (x @ w1) + b1, 0.0)
    rep = jnp.maximum(adj @ (h1 @ w2) + b2, 0.0)
    return rep @ wc + bc


def _reference_bf16_matched(adj, x, w1, b1, w2, b2, wc, bc):
    # Mirrors the kernel exactly: bf16 matmul operands, f32 accumulation,
    # same association A @ (X @ W).
    bf16 = jnp.bfloat16
    dotf = lambda a, b: jnp.dot(a.astype(bf16), b.astype(bf16),
                                preferred_element_type=jnp.float32)
    xw1 = dotf(x, w1)
    h1 = jnp.maximum(dotf(adj, xw1) + b1, 0.0)
    h1w2 = dotf(h1, w2)
    rep = jnp.maximum(dotf(adj, h1w2) + b2, 0.0)
    return dotf(rep, wc) + bc


def _build_norm_adj(key, n):
    """Random undirected graph -> D^-1/2 (A + I) D^-1/2, dense [n, n]."""
    logits = jax.random.uniform(key, (n, n))
    a = (logits < 0.08).astype(jnp.float32)
    a = jnp.maximum(a, a.T)                      # symmetrize
    a = a + jnp.eye(n, dtype=jnp.float32)        # self loops
    a = jnp.minimum(a, 1.0)
    deg = jnp.sum(a, axis=1)
    d_inv_sqrt = 1.0 / jnp.sqrt(deg)
    return a * d_inv_sqrt[:, None] * d_inv_sqrt[None, :]


if __name__ == "__main__":
    # 512 nodes, 32 input feats, 32 hidden, 8 classes.
    N, F_IN, HIDDEN, N_CLASSES = 512, 32, 32, 8

    key = jax.random.PRNGKey(0)
    k_adj, k_x, k_w1, k_b1, k_w2, k_b2, k_wc, k_bc = jax.random.split(key, 8)

    adj_hat = _build_norm_adj(k_adj, N)
    x = jax.random.normal(k_x, (N, F_IN), jnp.float32)

    w1 = jax.random.normal(k_w1, (F_IN, HIDDEN), jnp.float32) / jnp.sqrt(F_IN)
    b1 = 0.1 * jax.random.normal(k_b1, (HIDDEN,), jnp.float32)
    w2 = jax.random.normal(k_w2, (HIDDEN, HIDDEN), jnp.float32) / jnp.sqrt(HIDDEN)
    b2 = 0.1 * jax.random.normal(k_b2, (HIDDEN,), jnp.float32)
    wc = jax.random.normal(k_wc, (HIDDEN, N_CLASSES), jnp.float32) / jnp.sqrt(HIDDEN)
    bc = 0.1 * jax.random.normal(k_bc, (N_CLASSES,), jnp.float32)

    fwd = jax.jit(sgmae_forward)
    out = jax.block_until_ready(fwd(adj_hat, x, w1, b1, w2, b2, wc, bc))
    assert out.shape == (N, N_CLASSES)
    assert out.dtype == jnp.float32

    # Tight check against a precision-matched (bf16 operands, f32 accum) reference.
    ref_matched = _reference_bf16_matched(adj_hat, x, w1, b1, w2, b2, wc, bc)
    assert jnp.allclose(out, ref_matched, atol=2e-3, rtol=2e-3), "mismatch vs bf16-matched ref"

    # Loose check against the pure-f32 semantic reference (bf16 cast tolerance).
    ref_f32 = _reference_f32(adj_hat, x, w1, b1, w2, b2, wc, bc)
    assert jnp.allclose(out, ref_f32, atol=5e-2, rtol=5e-2), "mismatch vs f32 ref"

    # TODO(synk): the real PreModel/clf architectures (e.g. GAT encoder, edge-wise
    # attention, dropout, feature masking, sparse DGL graph ops) were not provided;
    # a 2-layer GCN encoder + linear probe over a dense normalized adjacency is
    # used as the representative SGMAE forward.
    print("KERNEL_OK")
</pallas_src>

<mosaic_0001>
module attributes {stable_mosaic.version = 11 : i64} {
  func.func @_sgmae_fused_kernel(%arg0: i32, %arg1: memref<512x512xbf16, #tpu.memory_space<vmem>>, %arg2: memref<512x32xbf16, #tpu.memory_space<vmem>>, %arg3: memref<32x32xbf16, #tpu.memory_space<vmem>>, %arg4: memref<1x32xf32, #tpu.memory_space<vmem>>, %arg5: memref<32x32xbf16, #tpu.memory_space<vmem>>, %arg6: memref<1x32xf32, #tpu.memory_space<vmem>>, %arg7: memref<32x8xbf16, #tpu.memory_space<vmem>>, %arg8: memref<1x8xf32, #tpu.memory_space<vmem>>, %arg9: memref<512x8xf32, #tpu.memory_space<vmem>>) attributes {dimension_semantics = [#tpu.dimension_semantics<parallel>], iteration_bounds = array<i64: 1>, scalar_prefetch = 0 : i64, scratch_operands = 0 : i64, tpu.core_type = #tpu.core_type<tc>, window_params = [{pipeline_mode = #tpu.pipeline_mode<synchronous>, transform_indices = @transform_0, window_bounds = array<i64: 512, 512>}, {pipeline_mode = #tpu.pipeline_mode<synchronous>, transform_indices = @transform_1, window_bounds = array<i64: 512, 32>}, {pipeline_mode = #tpu.pipeline_mode<synchronous>, transform_indices = @transform_2, window_bounds = array<i64: 32, 32>}, {pipeline_mode = #tpu.pipeline_mode<synchronous>, transform_indices = @transform_3, window_bounds = array<i64: 1, 32>}, {pipeline_mode = #tpu.pipeline_mode<synchronous>, transform_indices = @transform_4, window_bounds = array<i64: 32, 32>}, {pipeline_mode = #tpu.pipeline_mode<synchronous>, transform_indices = @transform_5, window_bounds = array<i64: 1, 32>}, {pipeline_mode = #tpu.pipeline_mode<synchronous>, transform_indices = @transform_6, window_bounds = array<i64: 32, 8>}, {pipeline_mode = #tpu.pipeline_mode<synchronous>, transform_indices = @transform_7, window_bounds = array<i64: 1, 8>}, {transform_indices = @transform_8, window_bounds = array<i64: 512, 8>}]} {
    %c0 = arith.constant 0 : index
    %c0_0 = arith.constant 0 : index
    %0 = vector.load %arg1[%c0, %c0_0] : memref<512x512xbf16, #tpu.memory_space<vmem>>, vector<512x512xbf16>
    %c0_1 = arith.constant 0 : index
    %c0_2 = arith.constant 0 : index
    %1 = vector.load %arg2[%c0_1, %c0_2] : memref<512x32xbf16, #tpu.memory_space<vmem>>, vector<512x32xbf16>
    %c0_3 = arith.constant 0 : index
    %c0_4 = arith.constant 0 : index
    %2 = vector.load %arg3[%c0_3, %c0_4] : memref<32x32xbf16, #tpu.memory_space<vmem>>, vector<32x32xbf16>
    %cst = arith.constant dense<0.000000e+00> : vector<512x32xf32>
    %3 = tpu.matmul %1, %2, %cst {dimension_numbers = #tpu.dot_dimension_numbers<[1], [0], [0], [1], [0, 0, 1, 1], [], []>} : vector<512x32xbf16>, vector<32x32xbf16>, vector<512x32xf32> -> vector<512x32xf32>
    %4 = arith.truncf %3 : vector<512x32xf32> to vector<512x32xbf16>
    %cst_5 = arith.constant dense<0.000000e+00> : vector<512x32xf32>
    %5 = tpu.matmul %0, %4, %cst_5 {dimension_numbers = #tpu.dot_dimension_numbers<[1], [0], [0], [1], [0, 0, 1, 1], [], []>} : vector<512x512xbf16>, vector<512x32xbf16>, vector<512x32xf32> -> vector<512x32xf32>
    %c0_6 = arith.constant 0 : index
    %c0_7 = arith.constant 0 : index
    %6 = vector.load %arg4[%c0_6, %c0_7] : memref<1x32xf32, #tpu.memory_space<vmem>>, vector<1x32xf32>
    %7 = vector.broadcast %6 : vector<1x32xf32> to vector<512x32xf32>
    %8 = arith.addf %5, %7 : vector<512x32xf32>
    %cst_8 = arith.constant 0.000000e+00 : f32
    %9 = vector.broadcast %cst_8 : f32 to vector<512x32xf32>
    %10 = arith.maximumf %8, %9 : vector<512x32xf32>
    %11 = arith.truncf %10 : vector<512x32xf32> to vector<512x32xbf16>
    %c0_9 = arith.constant 0 : index
    %c0_10 = arith.constant 0 : index
    %12 = vector.load %arg5[%c0_9, %c0_10] : memref<32x32xbf16, #tpu.memory_space<vmem>>, vector<32x32xbf16>
    %cst_11 = arith.constant dense<0.000000e+00> : vector<512x32xf32>
    %13 = tpu.matmul %11, %12, %cst_11 {dimension_numbers = #tpu.dot_dimension_numbers<[1], [0], [0], [1], [0, 0, 1, 1], [], []>} : vector<512x32xbf16>, vector<32x32xbf16>, vector<512x32xf32> -> vector<512x32xf32>
    %14 = arith.truncf %13 : vector<512x32xf32> to vector<512x32xbf16>
    %cst_12 = arith.constant dense<0.000000e+00> : vector<512x32xf32>
    %15 = tpu.matmul %0, %14, %cst_12 {dimension_numbers = #tpu.dot_dimension_numbers<[1], [0], [0], [1], [0, 0, 1, 1], [], []>} : vector<512x512xbf16>, vector<512x32xbf16>, vector<512x32xf32> -> vector<512x32xf32>
    %c0_13 = arith.constant 0 : index
    %c0_14 = arith.constant 0 : index
    %16 = vector.load %arg6[%c0_13, %c0_14] : memref<1x32xf32, #tpu.memory_space<vmem>>, vector<1x32xf32>
    %17 = vector.broadcast %16 : vector<1x32xf32> to vector<512x32xf32>
    %18 = arith.addf %15, %17 : vector<512x32xf32>
    %cst_15 = arith.constant 0.000000e+00 : f32
    %19 = vector.broadcast %cst_15 : f32 to vector<512x32xf32>
    %20 = arith.maximumf %18, %19 : vector<512x32xf32>
    %21 = arith.truncf %20 : vector<512x32xf32> to vector<512x32xbf16>
    %c0_16 = arith.constant 0 : index
    %c0_17 = arith.constant 0 : index
    %22 = vector.load %arg7[%c0_16, %c0_17] : memref<32x8xbf16, #tpu.memory_space<vmem>>, vector<32x8xbf16>
    %cst_18 = arith.constant dense<0.000000e+00> : vector<512x8xf32>
    %23 = tpu.matmul %21, %22, %cst_18 {dimension_numbers = #tpu.dot_dimension_numbers<[1], [0], [0], [1], [0, 0, 1, 1], [], []>} : vector<512x32xbf16>, vector<32x8xbf16>, vector<512x8xf32> -> vector<512x8xf32>
    %c0_19 = arith.constant 0 : index
    %c0_20 = arith.constant 0 : index
    %24 = vector.load %arg8[%c0_19, %c0_20] : memref<1x8xf32, #tpu.memory_space<vmem>>, vector<1x8xf32>
    %25 = vector.broadcast %24 : vector<1x8xf32> to vector<512x8xf32>
    %26 = arith.addf %23, %25 : vector<512x8xf32>
    %c0_21 = arith.constant 0 : index
    %c0_22 = arith.constant 0 : index
    %27 = vector.load %arg9[%c0_21, %c0_22] : memref<512x8xf32, #tpu.memory_space<vmem>>, vector<512x8xf32>
    tpu.vector_store %arg9[%c0_21, %c0_22], %26 {strides = array<i32>} : memref<512x8xf32, #tpu.memory_space<vmem>>, vector<512x8xf32>,
    return
  }
  func.func @transform_0(%arg0: i32) -> (i32, i32) {
    %c0_i32 = arith.constant 0 : i32
    %c0_i32_0 = arith.constant 0 : i32
    %c0_i32_1 = arith.constant 0 : i32
    return %c0_i32, %c0_i32_0 : i32, i32
  }
  func.func @transform_1(%arg0: i32) -> (i32, i32) {
    %c0_i32 = arith.constant 0 : i32
    %c0_i32_0 = arith.constant 0 : i32
    %c0_i32_1 = arith.constant 0 : i32
    return %c0_i32, %c0_i32_0 : i32, i32
  }
  func.func @transform_2(%arg0: i32) -> (i32, i32) {
    %c0_i32 = arith.constant 0 : i32
    %c0_i32_0 = arith.constant 0 : i32
    %c0_i32_1 = arith.constant 0 : i32
    return %c0_i32, %c0_i32_0 : i32, i32
  }
  func.func @transform_3(%arg0: i32) -> (i32, i32) {
    %c0_i32 = arith.constant 0 : i32
    %c0_i32_0 = arith.constant 0 : i32
    %c0_i32_1 = arith.constant 0 : i32
    return %c0_i32, %c0_i32_0 : i32, i32
  }
  func.func @transform_4(%arg0: i32) -> (i32, i32) {
    %c0_i32 = arith.constant 0 : i32
    %c0_i32_0 = arith.constant 0 : i32
    %c0_i32_1 = arith.constant 0 : i32
    return %c0_i32, %c0_i32_0 : i32, i32
  }
  func.func @transform_5(%arg0: i32) -> (i32, i32) {
    %c0_i32 = arith.constant 0 : i32
    %c0_i32_0 = arith.constant 0 : i32
    %c0_i32_1 = arith.constant 0 : i32
    return %c0_i32, %c0_i32_0 : i32, i32
  }
  func.func @transform_6(%arg0: i32) -> (i32, i32) {
    %c0_i32 = arith.constant 0 : i32
    %c0_i32_0 = arith.constant 0 : i32
    %c0_i32_1 = arith.constant 0 : i32
    return %c0_i32, %c0_i32_0 : i32, i32
  }
  func.func @transform_7(%arg0: i32) -> (i32, i32) {
    %c0_i32 = arith.constant 0 : i32
    %c0_i32_0 = arith.constant 0 : i32
    %c0_i32_1 = arith.constant 0 : i32
    return %c0_i32, %c0_i32_0 : i32, i32
  }
  func.func @transform_8(%arg0: i32) -> (i32, i32) {
    %c0_i32 = arith.constant 0 : i32
    %c0_i32_0 = arith.constant 0 : i32
    return %arg0, %c0_i32 : i32, i32
  }
}

</mosaic_0001>

<llo_original>
// kernel: sgmae_forward.1
$region0: #{sgmae_forward.1}
  #allocation0 [shape = 'u32[]', space=smem, size = 0x4, offset = 0x4, fixed_abs, tag = 'smem constant byte address 0x4 - core index']
  #allocation1 [shape = 'u32[144,128]{1,0:T(1,128)}', space=vmem, size = 0x12000, scoped, tag = 'internal scratch']
  %s0 = inlined_call_operand.vmem [shape: bf16[512,512], index: 0, kind: input, shape index: {}]
  %s1 = inlined_call_operand.vmem [shape: bf16[512,32], index: 1, kind: input, shape index: {}]
  %s2 = inlined_call_operand.vmem [shape: bf16[32,32], index: 2, kind: input, shape index: {}]
  %s3 = inlined_call_operand.vmem [shape: f32[1,32], index: 3, kind: input, shape index: {}]
  %s4 = inlined_call_operand.vmem [shape: bf16[32,32], index: 4, kind: input, shape index: {}]
  %s5 = inlined_call_operand.vmem [shape: f32[1,32], index: 5, kind: input, shape index: {}]
  %s6 = inlined_call_operand.vmem [shape: bf16[32,8], index: 6, kind: input, shape index: {}]
  %s7 = inlined_call_operand.vmem [shape: f32[1,8], index: 7, kind: input, shape index: {}]
  %s8 = inlined_call_operand.vmem [shape: f32[512,8], index: 8, kind: output, shape index: {}]
  %s9 = sld [smem:[#allocation0]]
  $region42: #{sgmae_forward.1} parent=0
    _
  %s11 = ssub.s32 1, %s9
  %s12 = scalar_select 0, %s11, %s9
  // Predicated region
  $region2: #{sgmae_forward.1} parent=0 // pred_check
    _
  $region3: #{sgmae_forward.1} parent=0 // pred_check_branch
    %14 = sbr.rel (0) target = $region5
  $region4: #{sgmae_forward.1} parent=0 // pred_region
    _
  $region5: #{sgmae_forward.1} parent=0 // pred_fallthru
    _
  // Predicated region
  $region6: #{sgmae_forward.1} parent=0 // pred_check
    _
  $region7: #{sgmae_forward.1} parent=0 // pred_check_branch
    %16 = sbr.rel (0) target = $region9
  $region8: #{sgmae_forward.1} parent=0 // pred_region
    _
  $region9: #{sgmae_forward.1} parent=0 // pred_fallthru
    _
  // Predicated region
  $region10: #{sgmae_forward.1} parent=0 // pred_check
    _
  $region11: #{sgmae_forward.1} parent=0 // pred_check_branch
    %18 = sbr.rel (0) target = $region13
  $region12: #{sgmae_forward.1} parent=0 // pred_region
    _
  $region13: #{sgmae_forward.1} parent=0 // pred_fallthru
    _
  // Predicated region
  $region14: #{sgmae_forward.1} parent=0 // pred_check
    _
  $region15: #{sgmae_forward.1} parent=0 // pred_check_branch
    %20 = sbr.rel (0) target = $region17
  $region16: #{sgmae_forward.1} parent=0 // pred_region
    _
  $region17: #{sgmae_forward.1} parent=0 // pred_fallthru
    _
  // Predicated region
  $region18: #{sgmae_forward.1} parent=0 // pred_check
    _
  $region19: #{sgmae_forward.1} parent=0 // pred_check_branch
    %22 = sbr.rel (0) target = $region21
  $region20: #{sgmae_forward.1} parent=0 // pred_region
    _
  $region21: #{sgmae_forward.1} parent=0 // pred_fallthru
    _
  // Predicated region
  $region22: #{sgmae_forward.1} parent=0 // pred_check
    _
  $region23: #{sgmae_forward.1} parent=0 // pred_check_branch
    %24 = sbr.rel (0) target = $region25
  $region24: #{sgmae_forward.1} parent=0 // pred_region
    _
  $region25: #{sgmae_forward.1} parent=0 // pred_fallthru
    _
  // Predicated region
  $region26: #{sgmae_forward.1} parent=0 // pred_check
    _
  $region27: #{sgmae_forward.1} parent=0 // pred_check_branch
    %26 = sbr.rel (0) target = $region29
  $region28: #{sgmae_forward.1} parent=0 // pred_region
    _
  $region29: #{sgmae_forward.1} parent=0 // pred_fallthru
    _
  // Predicated region
  $region30: #{sgmae_forward.1} parent=0 // pred_check
    _
  $region31: #{sgmae_forward.1} parent=0 // pred_check_branch
    %28 = sbr.rel (0) target = $region33
  $region32: #{sgmae_forward.1} parent=0 // pred_region
    _
  $region33: #{sgmae_forward.1} parent=0 // pred_fallthru
    _
  %v30 = vld [vmem:[%s0] sm:$0xff]
  %v31 = vld [vmem:[%s0 + $0x8] sm:$0xff]
  %v32 = vld [vmem:[%s0 + $0x10] sm:$0xff]
  %v33 = vld [vmem:[%s0 + $0x18] sm:$0xff]
  %v34 = vld [vmem:[%s0 + $0x20] sm:$0xff]
  %v35 = vld [vmem:[%s0 + $0x28] sm:$0xff]
  %v36 = vld [vmem:[%s0 + $0x30] sm:$0xff]
  %v37 = vld [vmem:[%s0 + $0x38] sm:$0xff]
  %v38 = vld [vmem:[%s0 + $0x40] sm:$0xff]
  %v39 = vld [vmem:[%s0 + $0x48] sm:$0xff]
  %v40 = vld [vmem:[%s0 + $0x50] sm:$0xff]
  %v41 = vld [vmem:[%s0 + $0x58] sm:$0xff]
  %v42 = vld [vmem:[%s0 + $0x60] sm:$0xff]
  %v43 = vld [vmem:[%s0 + $0x68] sm:$0xff]
  %v44 = vld [vmem:[%s0 + $0x70] sm:$0xff]
  %v45 = vld [vmem:[%s0 + $0x78] sm:$0xff]
  %v46 = vld [vmem:[%s0 + $0x80] sm:$0xff]
  %v47 = vld [vmem:[%s0 + $0x88] sm:$0xff]
  %v48 = vld [vmem:[%s0 + $0x90] sm:$0xff]
  %v49 = vld [vmem:[%s0 + $0x98] sm:$0xff]
  %v50 = vld [vmem:[%s0 + $0xa0] sm:$0xff]
  %v51 = vld [vmem:[%s0 + $0xa8] sm:$0xff]
  %v52 = vld [vmem:[%s0 + $0xb0] sm:$0xff]
  %v53 = vld [vmem:[%s0 + $0xb8] sm:$0xff]
  %v54 = vld [vmem:[%s0 + $0xc0] sm:$0xff]
  %v55 = vld [vmem:[%s0 + $0xc8] sm:$0xff]
  %v56 = vld [vmem:[%s0 + $0xd0] sm:$0xff]
  %v57 = vld [vmem:[%s0 + $0xd8] sm:$0xff]
  %v58 = vld [vmem:[%s0 + $0xe0] sm:$0xff]
  %v59 = vld [vmem:[%s0 + $0xe8] sm:$0xff]
  %v60 = vld [vmem:[%s0 + $0xf0] sm:$0xff]
  %v61 = vld [vmem:[%s0 + $0xf8] sm:$0xff]
  %v62 = vld [vmem:[%s0 + $0x100] sm:$0xff]
  %v63 = vld [vmem:[%s0 + $0x108] sm:$0xff]
  %v64 = vld [vmem:[%s0 + $0x110] sm:$0xff]
  %v65 = vld [vmem:[%s0 + $0x118] sm:$0xff]
  %v66 = vld [vmem:[%s0 + $0x120] sm:$0xff]
  %v67 = vld [vmem:[%s0 + $0x128] sm:$0xff]
  %v68 = vld [vmem:[%s0 + $0x130] sm:$0xff]
  %v69 = vld [vmem:[%s0 + $0x138] sm:$0xff]
  %v70 = vld [vmem:[%s0 + $0x140] sm:$0xff]
  %v71 = vld [vmem:[%s0 + $0x148] sm:$0xff]
  %v72 = vld [vmem:[%s0 + $0x150] sm:$0xff]
  %v73 = vld [vmem:[%s0 + $0x158] sm:$0xff]
  %v74 = vld [vmem:[%s0 + $0x160] sm:$0xff]
  %v75 = vld [vmem:[%s0 + $0x168] sm:$0xff]
  %v76 = vld [vmem:[%s0 + $0x170] sm:$0xff]
  %v77 = vld [vmem:[%s0 + $0x178] sm:$0xff]
  %v78 = vld [vmem:[%s0 + $0x180] sm:$0xff]
  %v79 = vld [vmem:[%s0 + $0x188] sm:$0xff]
  %v80 = vld [vmem:[%s0 + $0x190] sm:$0xff]
  %v81 = vld [vmem:[%s0 + $0x198] sm:$0xff]
  %v82 = vld [vmem:[%s0 + $0x1a0] sm:$0xff]
  %v83 = vld [vmem:[%s0 + $0x1a8] sm:$0xff]
  %v84 = vld [vmem:[%s0 + $0x1b0] sm:$0xff]
  %v85 = vld [vmem:[%s0 + $0x1b8] sm:$0xff]
  %v86 = vld [vmem:[%s0 + $0x1c0] sm:$0xff]
  %v87 = vld [vmem:[%s0 + $0x1c8] sm:$0xff]
  %v88 = vld [vmem:[%s0 + $0x1d0] sm:$0xff]
  %v89 = vld [vmem:[%s0 + $0x1d8] sm:$0xff]
  %v90 = vld [vmem:[%s0 + $0x1e0] sm:$0xff]
  %v91 = vld [vmem:[%s0 + $0x1e8] sm:$0xff]
  %v92 = vld [vmem:[%s0 + $0x1f0] sm:$0xff]
  %v93 = vld [vmem:[%s0 + $0x1f8] sm:$0xff]
  %v94 = vld [vmem:[%s0 + $0x200] sm:$0xff]
  %v95 = vld [vmem:[%s0 + $0x208] sm:$0xff]
  %v96 = vld [vmem:[%s0 + $0x210] sm:$0xff]
  %v97 = vld [vmem:[%s0 + $0x218] sm:$0xff]
  %v98 = vld [vmem:[%s0 + $0x220] sm:$0xff]
  %v99 = vld [vmem:[%s0 + $0x228] sm:$0xff]
  %v100 = vld [vmem:[%s0 + $0x230] sm:$0xff]
  %v101 = vld [vmem:[%s0 + $0x238] sm:$0xff]
  %v102 = vld [vmem:[%s0 + $0x240] sm:$0xff]
  %v103 = vld [vmem:[%s0 + $0x248] sm:$0xff]
  %v104 = vld [vmem:[%s0 + $0x250] sm:$0xff]
  %v105 = vld [vmem:[%s0 + $0x258] sm:$0xff]
  %v106 = vld [vmem:[%s0 + $0x260] sm:$0xff]
  %v107 = vld [vmem:[%s0 + $0x268] sm:$0xff]
  %v108 = vld [vmem:[%s0 + $0x270] sm:$0xff]
  %v109 = vld [vmem:[%s0 + $0x278] sm:$0xff]
  %v110 = vld [vmem:[%s0 + $0x280] sm:$0xff]
  %v111 = vld [vmem:[%s0 + $0x288] sm:$0xff]
  %v112 = vld [vmem:[%s0 + $0x290] sm:$0xff]
  %v113 = vld [vmem:[%s0 + $0x298] sm:$0xff]
  %v114 = vld [vmem:[%s0 + $0x2a0] sm:$0xff]
  %v115 = vld [vmem:[%s0 + $0x2a8] sm:$0xff]
  %v116 = vld [vmem:[%s0 + $0x2b0] sm:$0xff]
  %v117 = vld [vmem:[%s0 + $0x2b8] sm:$0xff]
  %v118 = vld [vmem:[%s0 + $0x2c0] sm:$0xff]
  %v119 = vld [vmem:[%s0 + $0x2c8] sm:$0xff]
  %v120 = vld [vmem:[%s0 + $0x2d0] sm:$0xff]
  %v121 = vld [vmem:[%s0 + $0x2d8] sm:$0xff]
  %v122 = vld [vmem:[%s0 + $0x2e0] sm:$0xff]
  %v123 = vld [vmem:[%s0 + $0x2e8] sm:$0xff]
  %v124 = vld [vmem:[%s0 + $0x2f0] sm:$0xff]
  %v125 = vld [vmem:[%s0 + $0x2f8] sm:$0xff]
  %v126 = vld [vmem:[%s0 + $0x300] sm:$0xff]
  %v127 = vld [vmem:[%s0 + $0x308] sm:$0xff]
  %v128 = vld [vmem:[%s0 + $0x310] sm:$0xff]
  %v129 = vld [vmem:[%s0 + $0x318] sm:$0xff]
  %v130 = vld [vmem:[%s0 + $0x320] sm:$0xff]
  %v131 = vld [vmem:[%s0 + $0x328] sm:$0xff]
  %v132 = vld [vmem:[%s0 + $0x330] sm:$0xff]
  %v133 = vld [vmem:[%s0 + $0x338] sm:$0xff]
  %v134 = vld [vmem:[%s0 + $0x340] sm:$0xff]
  %v135 = vld [vmem:[%s0 + $0x348] sm:$0xff]
  %v136 = vld [vmem:[%s0 + $0x350] sm:$0xff]
  %v137 = vld [vmem:[%s0 + $0x358] sm:$0xff]
  %v138 = vld [vmem:[%s0 + $0x360] sm:$0xff]
  %v139 = vld [vmem:[%s0 + $0x368] sm:$0xff]
  %v140 = vld [vmem:[%s0 + $0x370] sm:$0xff]
  %v141 = vld [vmem:[%s0 + $0x378] sm:$0xff]
  %v142 = vld [vmem:[%s0 + $0x380] sm:$0xff]
  %v143 = vld [vmem:[%s0 + $0x388] sm:$0xff]
  %v144 = vld [vmem:[%s0 + $0x390] sm:$0xff]
  %v145 = vld [vmem:[%s0 + $0x398] sm:$0xff]
  %v146 = vld [vmem:[%s0 + $0x3a0] sm:$0xff]
  %v147 = vld [vmem:[%s0 + $0x3a8] sm:$0xff]
  %v148 = vld [vmem:[%s0 + $0x3b0] sm:$0xff]
  %v149 = vld [vmem:[%s0 + $0x3b8] sm:$0xff]
  %v150 = vld [vmem:[%s0 + $0x3c0] sm:$0xff]
  %v151 = vld [vmem:[%s0 + $0x3c8] sm:$0xff]
  %v152 = vld [vmem:[%s0 + $0x3d0] sm:$0xff]
  %v153 = vld [vmem:[%s0 + $0x3d8] sm:$0xff]
  %v154 = vld [vmem:[%s0 + $0x3e0] sm:$0xff]
  %v155 = vld [vmem:[%s0 + $0x3e8] sm:$0xff]
  %v156 = vld [vmem:[%s0 + $0x3f0] sm:$0xff]
  %v157 = vld [vmem:[%s0 + $0x3f8] sm:$0xff]
  %v158 = vld [vmem:[%s1] sm:$0xf]
  %v159 = vld [vmem:[%s1 + $0x4] sm:$0xf]
  %v160 = vld [vmem:[%s1 + $0x8] sm:$0xf]
  %v161 = vld [vmem:[%s1 + $0xc] sm:$0xf]
  %v162 = vld [vmem:[%s1 + $0x10] sm:$0xf]
  %v163 = vld [vmem:[%s1 + $0x14] sm:$0xf]
  %v164 = vld [vmem:[%s1 + $0x18] sm:$0xf]
  %v165 = vld [vmem:[%s1 + $0x1c] sm:$0xf]
  %v166 = vld [vmem:[%s1 + $0x20] sm:$0xf]
  %v167 = vld [vmem:[%s1 + $0x24] sm:$0xf]
  %v168 = vld [vmem:[%s1 + $0x28] sm:$0xf]
  %v169 = vld [vmem:[%s1 + $0x2c] sm:$0xf]
  %v170 = vld [vmem:[%s1 + $0x30] sm:$0xf]
  %v171 = vld [vmem:[%s1 + $0x34] sm:$0xf]
  %v172 = vld [vmem:[%s1 + $0x38] sm:$0xf]
  %v173 = vld [vmem:[%s1 + $0x3c] sm:$0xf]
  %v174 = vld [vmem:[%s1 + $0x40] sm:$0xf]
  %v175 = vld [vmem:[%s1 + $0x44] sm:$0xf]
  %v176 = vld [vmem:[%s1 + $0x48] sm:$0xf]
  %v177 = vld [vmem:[%s1 + $0x4c] sm:$0xf]
  %v178 = vld [vmem:[%s1 + $0x50] sm:$0xf]
  %v179 = vld [vmem:[%s1 + $0x54] sm:$0xf]
  %v180 = vld [vmem:[%s1 + $0x58] sm:$0xf]
  %v181 = vld [vmem:[%s1 + $0x5c] sm:$0xf]
  %v182 = vld [vmem:[%s1 + $0x60] sm:$0xf]
  %v183 = vld [vmem:[%s1 + $0x64] sm:$0xf]
  %v184 = vld [vmem:[%s1 + $0x68] sm:$0xf]
  %v185 = vld [vmem:[%s1 + $0x6c] sm:$0xf]
  %v186 = vld [vmem:[%s1 + $0x70] sm:$0xf]
  %v187 = vld [vmem:[%s1 + $0x74] sm:$0xf]
  %v188 = vld [vmem:[%s1 + $0x78] sm:$0xf]
  %v189 = vld [vmem:[%s1 + $0x7c] sm:$0xf]
  %v190 = vld [vmem:[%s1 + $0x80] sm:$0xf]
  %v191 = vld [vmem:[%s1 + $0x84] sm:$0xf]
  %v192 = vld [vmem:[%s1 + $0x88] sm:$0xf]
  %v193 = vld [vmem:[%s1 + $0x8c] sm:$0xf]
  %v194 = vld [vmem:[%s1 + $0x90] sm:$0xf]
  %v195 = vld [vmem:[%s1 + $0x94] sm:$0xf]
  %v196 = vld [vmem:[%s1 + $0x98] sm:$0xf]
  %v197 = vld [vmem:[%s1 + $0x9c] sm:$0xf]
  %v198 = vld [vmem:[%s1 + $0xa0] sm:$0xf]
  %v199 = vld [vmem:[%s1 + $0xa4] sm:$0xf]
  %v200 = vld [vmem:[%s1 + $0xa8] sm:$0xf]
  %v201 = vld [vmem:[%s1 + $0xac] sm:$0xf]
  %v202 = vld [vmem:[%s1 + $0xb0] sm:$0xf]
  %v203 = vld [vmem:[%s1 + $0xb4] sm:$0xf]
  %v204 = vld [vmem:[%s1 + $0xb8] sm:$0xf]
  %v205 = vld [vmem:[%s1 + $0xbc] sm:$0xf]
  %v206 = vld [vmem:[%s1 + $0xc0] sm:$0xf]
  %v207 = vld [vmem:[%s1 + $0xc4] sm:$0xf]
  %v208 = vld [vmem:[%s1 + $0xc8] sm:$0xf]
  %v209 = vld [vmem:[%s1 + $0xcc] sm:$0xf]
  %v210 = vld [vmem:[%s1 + $0xd0] sm:$0xf]
  %v211 = vld [vmem:[%s1 + $0xd4] sm:$0xf]
  %v212 = vld [vmem:[%s1 + $0xd8] sm:$0xf]
  %v213 = vld [vmem:[%s1 + $0xdc] sm:$0xf]
  %v214 = vld [vmem:[%s1 + $0xe0] sm:$0xf]
  %v215 = vld [vmem:[%s1 + $0xe4] sm:$0xf]
  %v216 = vld [vmem:[%s1 + $0xe8] sm:$0xf]
  %v217 = vld [vmem:[%s1 + $0xec] sm:$0xf]
  %v218 = vld [vmem:[%s1 + $0xf0] sm:$0xf]
  %v219 = vld [vmem:[%s1 + $0xf4] sm:$0xf]
  %v220 = vld [vmem:[%s1 + $0xf8] sm:$0xf]
  %v221 = vld [vmem:[%s1 + $0xfc] sm:$0xf]
  %v222 = vld [vmem:[%s2] sm:$0xf]
  %v223 = vld [vmem:[%s2 + $0x4] sm:$0xf]
  %v224 = vld [vmem:[%s2 + $0x8] sm:$0xf]
  %v225 = vld [vmem:[%s2 + $0xc] sm:$0xf]
  %v290 = vunpack.c.l.b16 %v158
  %v291 = vunpack.c.l.b16 %v159
  %v292 = vunpack.c.l.b16 %v160
  %v293 = vunpack.c.l.b16 %v161
  %v294 = vunpack.c.l.b16 %v162
  %v295 = vunpack.c.l.b16 %v163
  %v296 = vunpack.c.l.b16 %v164
  %v297 = vunpack.c.l.b16 %v165
  %v298 = vunpack.c.l.b16 %v166
  %v299 = vunpack.c.l.b16 %v167
  %v300 = vunpack.c.l.b16 %v168
  %v301 = vunpack.c.l.b16 %v169
  %v302 = vunpack.c.l.b16 %v170
  %v303 = vunpack.c.l.b16 %v171
  %v304 = vunpack.c.l.b16 %v172
  %v305 = vunpack.c.l.b16 %v173
  %v306 = vunpack.c.l.b16 %v174
  %v307 = vunpack.c.l.b16 %v175
  %v308 = vunpack.c.l.b16 %v176
  %v309 = vunpack.c.l.b16 %v177
  %v310 = vunpack.c.l.b16 %v178
  %v311 = vunpack.c.l.b16 %v179
  %v312 = vunpack.c.l.b16 %v180
  %v313 = vunpack.c.l.b16 %v181
  %v314 = vunpack.c.l.b16 %v182
  %v315 = vunpack.c.l.b16 %v183
  %v316 = vunpack.c.l.b16 %v184
  %v317 = vunpack.c.l.b16 %v185
  %v318 = vunpack.c.l.b16 %v186
  %v319 = vunpack.c.l.b16 %v187
  %v320 = vunpack.c.l.b16 %v188
  %v321 = vunpack.c.l.b16 %v189
  %v322 = vunpack.c.l.b16 %v190
  %v323 = vunpack.c.l.b16 %v191
  %v324 = vunpack.c.l.b16 %v192
  %v325 = vunpack.c.l.b16 %v193
  %v326 = vunpack.c.l.b16 %v194
  %v327 = vunpack.c.l.b16 %v195
  %v328 = vunpack.c.l.b16 %v196
  %v329 = vunpack.c.l.b16 %v197
  %v330 = vunpack.c.l.b16 %v198
  %v331 = vunpack.c.l.b16 %v199
  %v332 = vunpack.c.l.b16 %v200
  %v333 = vunpack.c.l.b16 %v201
  %v334 = vunpack.c.l.b16 %v202
  %v335 = vunpack.c.l.b16 %v203
  %v336 = vunpack.c.l.b16 %v204
  %v337 = vunpack.c.l.b16 %v205
  %v338 = vunpack.c.l.b16 %v206
  %v339 = vunpack.c.l.b16 %v207
  %v340 = vunpack.c.l.b16 %v208
  %v341 = vunpack.c.l.b16 %v209
  %v342 = vunpack.c.l.b16 %v210
  %v343 = vunpack.c.l.b16 %v211
  %v344 = vunpack.c.l.b16 %v212
  %v345 = vunpack.c.l.b16 %v213
  %v346 = vunpack.c.l.b16 %v214
  %v347 = vunpack.c.l.b16 %v215
  %v348 = vunpack.c.l.b16 %v216
  %v349 = vunpack.c.l.b16 %v217
  %v350 = vunpack.c.l.b16 %v218
  %v351 = vunpack.c.l.b16 %v219
  %v352 = vunpack.c.l.b16 %v220
  %v353 = vunpack.c.l.b16 %v221
  %v354 = vpack.c.b16 %v291, %v290
  %v355 = vpack.c.b16 %v293, %v292
  %v356 = vpack.c.b16 %v295, %v294
  %v357 = vpack.c.b16 %v297, %v296
  %v358 = vpack.c.b16 %v299, %v298
  %v359 = vpack.c.b16 %v301, %v300
  %v360 = vpack.c.b16 %v303, %v302
  %v361 = vpack.c.b16 %v305, %v304
  %v362 = vpack.c.b16 %v307, %v306
  %v363 = vpack.c.b16 %v309, %v308
  %v364 = vpack.c.b16 %v311, %v310
  %v365 = vpack.c.b16 %v313, %v312
  %v366 = vpack.c.b16 %v315, %v314
  %v367 = vpack.c.b16 %v317, %v316
  %v368 = vpack.c.b16 %v319, %v318
  %v369 = vpack.c.b16 %v321, %v320
  %v370 = vpack.c.b16 %v323, %v322
  %v371 = vpack.c.b16 %v325, %v324
  %v372 = vpack.c.b16 %v327, %v326
  %v373 = vpack.c.b16 %v329, %v328
  %v374 = vpack.c.b16 %v331, %v330
  %v375 = vpack.c.b16 %v333, %v332
  %v376 = vpack.c.b16 %v335, %v334
  %v377 = vpack.c.b16 %v337, %v336
  %v378 = vpack.c.b16 %v339, %v338
  %v379 = vpack.c.b16 %v341, %v340
  %v380 = vpack.c.b16 %v343, %v342
  %v381 = vpack.c.b16 %v345, %v344
  %v382 = vpack.c.b16 %v347, %v346
  %v383 = vpack.c.b16 %v349, %v348
  %v384 = vpack.c.b16 %v351, %v350
  %v385 = vpack.c.b16 %v353, %v352
  %v390 = vunpack.c.l.b16 %v222
  %v391 = vunpack.c.l.b16 %v223
  %v392 = vunpack.c.l.b16 %v224
  %v393 = vunpack.c.l.b16 %v225
  %v394 = vpack.c.b16 %v391, %v390
  %v395 = vpack.c.b16 %v393, %v392
  %vm398 = vcmask 261120
  %v400 = vsel %vm398, %v354, 0
  %v403 = vsel %vm398, %v355, 0
  %v406 = vsel %vm398, %v356, 0
  %v409 = vsel %vm398, %v357, 0
  %v412 = vsel %vm398, %v358, 0
  %v415 = vsel %vm398, %v359, 0
  %v418 = vsel %vm398, %v360, 0
  %v421 = vsel %vm398, %v361, 0
  %v424 = vsel %vm398, %v362, 0
  %v427 = vsel %vm398, %v363, 0
  %v430 = vsel %vm398, %v364, 0
  %v433 = vsel %vm398, %v365, 0
  %v436 = vsel %vm398, %v366, 0
  %v439 = vsel %vm398, %v367, 0
  %v442 = vsel %vm398, %v368, 0
  %v445 = vsel %vm398, %v369, 0
  %v448 = vsel %vm398, %v370, 0
  %v451 = vsel %vm398, %v371, 0
  %v454 = vsel %vm398, %v372, 0
  %v457 = vsel %vm398, %v373, 0
  %v460 = vsel %vm398, %v374, 0
  %v463 = vsel %vm398, %v375, 0
  %v466 = vsel %vm398, %v376, 0
  %v469 = vsel %vm398, %v377, 0
  %v472 = vsel %vm398, %v378, 0
  %v475 = vsel %vm398, %v379, 0
  %v478 = vsel %vm398, %v380, 0
  %v481 = vsel %vm398, %v381, 0
  %v484 = vsel %vm398, %v382, 0
  %v487 = vsel %vm398, %v383, 0
  %v490 = vsel %vm398, %v384, 0
  %v493 = vsel %vm398, %v385, 0
  %495 = vmatprep.subr.bf16.mxu0 0
  %496 = vmatpush1.bf16.msra.mxu0 %v394
  %497 = vmatprep.subr.bf16.mxu0 0
  %498 = vmatpush1.bf16.msra.mxu0 %v395
  %499 = vmatprep.subr.bf16.mxu0 0
  %500 = vmatpush1.bf16.msra.mxu0 0
  %501 = vmatprep.subr.bf16.mxu0 0
  %502 = vmatpush1.bf16.msra.mxu0 0
  %503 = vmatprep.subr.bf16.mxu0 0
  %504 = vmatpush1.bf16.msra.mxu0 0
  %505 = vmatprep.subr.bf16.mxu0 0
  %506 = vmatpush1.bf16.msra.mxu0 0
  %507 = vmatprep.subr.bf16.mxu0 0
  %508 = vmatpush1.bf16.msra.mxu0 0
  %509 = vmatprep.subr.bf16.mxu0 0
  %510 = vmatpush1.bf16.msra.mxu0 0
  %511 = vmatprep.subr.bf16.mxu0 0
  %512 = vmatpush1.bf16.msra.mxu0 0
  %513 = vmatprep.subr.bf16.mxu0 0
  %514 = vmatpush1.bf16.msra.mxu0 0
  %515 = vmatprep.subr.bf16.mxu0 0
  %516 = vmatpush1.bf16.msra.mxu0 0
  %517 = vmatprep.subr.bf16.mxu0 0
  %518 = vmatpush1.bf16.msra.mxu0 0
  %519 = vmatprep.subr.bf16.mxu0 0
  %520 = vmatpush1.bf16.msra.mxu0 0
  %521 = vmatprep.subr.bf16.mxu0 0
  %522 = vmatpush1.bf16.msra.mxu0 0
  %523 = vmatprep.subr.bf16.mxu0 0
  %524 = vmatpush1.bf16.msra.mxu0 0
  %525 = vmatprep.subr.bf16.mxu0 0
  %526 = vmatpush1.bf16.msra.mxu0 0
  %527 = vmatprep.mubr.bf16.mxu0 0
  %528 = vmatmul.mubr.bf16.gmra.mrb[0].mxu0 %v400
  %v529 = vpop.f32.mrb[0].mxu0
  %v530 = vadd.f32 0.0, %v529
  %v531 = vpop.f32.mrb[0].mxu0
  %v532 = vpop.f32.mrb[0].mxu0
  %v533 = vadd.f32 0.0, %v532
  %v534 = vpop.f32.mrb[0].mxu0
  %535 = vmatprep.mubr.bf16.mxu0 0
  %536 = vmatmul.mubr.bf16.gmra.mrb[0].mxu0 %v403
  %v537 = vpop.f32.mrb[0].mxu0
  %v538 = vadd.f32 0.0, %v537
  %v539 = vpop.f32.mrb[0].mxu0
  %v540 = vpop.f32.mrb[0].mxu0
  %v541 = vadd.f32 0.0, %v540
  %v542 = vpop.f32.mrb[0].mxu0
  %543 = vmatprep.mubr.bf16.mxu0 0
  %544 = vmatmul.mubr.bf16.gmra.mrb[0].mxu0 %v406
  %v545 = vpop.f32.mrb[0].mxu0
  %v546 = vadd.f32 0.0, %v545
  %v547 = vpop.f32.mrb[0].mxu0
  %v548 = vpop.f32.mrb[0].mxu0
  %v549 = vadd.f32 0.0, %v548
  %v550 = vpop.f32.mrb[0].mxu0
  %551 = vmatprep.mubr.bf16.mxu0 0
  %552 = vmatmul.mubr.bf16.gmra.mrb[0].mxu0 %v409
  %v553 = vpop.f32.mrb[0].mxu0
  %v554 = vadd.f32 0.0, %v553
  %v555 = vpop.f32.mrb[0].mxu0
  %v556 = vpop.f32.mrb[0].mxu0
  %v557 = vadd.f32 0.0, %v556
  %v558 = vpop.f32.mrb[0].mxu0
  %559 = vmatprep.mubr.bf16.mxu0 0
  %560 = vmatmul.mubr.bf16.gmra.mrb[0].mxu0 %v412
  %v561 = vpop.f32.mrb[0].mxu0
  %v562 = vadd.f32 0.0, %v561
  %v563 = vpop.f32.mrb[0].mxu0
  %v564 = vpop.f32.mrb[0].mxu0
  %v565 = vadd.f32 0.0, %v564
  %v566 = vpop.f32.mrb[0].mxu0
  %567 = vmatprep.mubr.bf16.mxu0 0
  %568 = vmatmul.mubr.bf16.gmra.mrb[0].mxu0 %v415
  %v569 = vpop.f32.mrb[0].mxu0
  %v570 = vadd.f32 0.0, %v569
  %v571 = vpop.f32.mrb[0].mxu0
  %v572 = vpop.f32.mrb[0].mxu0
  %v573 = vadd.f32 0.0, %v572
  %v574 = vpop.f32.mrb[0].mxu0
  %575 = vmatprep.mubr.bf16.mxu0 0
  %576 = vmatmul.mubr.bf16.gmra.mrb[0].mxu0 %v418
  %v577 = vpop.f32.mrb[0].mxu0
  %v578 = vadd.f32 0.0, %v577
  %v579 = vpop.f32.mrb[0].mxu0
  %v580 = vpop.f32.mrb[0].mxu0
  %v581 = vadd.f32 0.0, %v580
  %v582 = vpop.f32.mrb[0].mxu0
  %583 = vmatprep.mubr.bf16.mxu0 0
  %584 = vmatmul.mubr.bf16.gmra.mrb[0].mxu0 %v421
  %v585 = vpop.f32.mrb[0].mxu0
  %v586 = vadd.f32 0.0, %v585
  %v587 = vpop.f32.mrb[0].mxu0
  %v588 = vpop.f32.mrb[0].mxu0
  %v589 = vadd.f32 0.0, %v588
  %v590 = vpop.f32.mrb[0].mxu0
  %591 = vmatprep.mubr.bf16.mxu0 0
  %592 = vmatmul.mubr.bf16.gmra.mrb[0].mxu0 %v424
  %v593 = vpop.f32.mrb[0].mxu0
  %v594 = vadd.f32 0.0, %v593
  %v595 = vpop.f32.mrb[0].mxu0
  %v596 = vpop.f32.mrb[0].mxu0
  %v597 = vadd.f32 0.0, %v596
  %v598 = vpop.f32.mrb[0].mxu0
  %599 = vmatprep.mubr.bf16.mxu0 0
  %600 = vmatmul.mubr.bf16.gmra.mrb[0].mxu0 %v427
  %v601 = vpop.f32.mrb[0].mxu0
  %v602 = vadd.f32 0.0, %v601
  %v603 = vpop.f32.mrb[0].mxu0
  %v604 = vpop.f32.mrb[0].mxu0
  %v605 = vadd.f32 0.0, %v604
  %v606 = vpop.f32.mrb[0].mxu0
  %607 = vmatprep.mubr.bf16.mxu0 0
  %608 = vmatmul.mubr.bf16.gmra.mrb[0].mxu0 %v430
  %v609 = vpop.f32.mrb[0].mxu0
  %v610 = vadd.f32 0.0, %v609
  %v611 = vpop.f32.mrb[0].mxu0
  %v612 = vpop.f32.mrb[0].mxu0
  %v613 = vadd.f32 0.0, %v612
  %v614 = vpop.f32.mrb[0].mxu0
  %615 = vmatprep.mubr.bf16.mxu0 0
  %616 = vmatmul.mubr.bf16.gmra.mrb[0].mxu0 %v433
  %v617 = vpop.f32.mrb[0].mxu0
  %v618 = vadd.f32 0.0, %v617
  %v619 = vpop.f32.mrb[0].mxu0
  %v620 = vpop.f32.mrb[0].mxu0
  %v621 = vadd.f32 0.0, %v620
  %v622 = vpop.f32.mrb[0].mxu0
  %623 = vmatprep.mubr.bf16.mxu0 0
  %624 = vmatmul.mubr.bf16.gmra.mrb[0].mxu0 %v436
  %v625 = vpop.f32.mrb[0].mxu0
  %v626 = vadd.f32 0.0, %v625
  %v627 = vpop.f32.mrb[0].mxu0
  %v628 = vpop.f32.mrb[0].mxu0
  %v629 = vadd.f32 0.0, %v628
  %v630 = vpop.f32.mrb[0].mxu0
  %631 = vmatprep.mubr.bf16.mxu0 0
  %632 = vmatmul.mubr.bf16.gmra.mrb[0].mxu0 %v439
  %v633 = vpop.f32.mrb[0].mxu0
  %v634 = vadd.f32 0.0, %v633
  %v635 = vpop.f32.mrb[0].mxu0
  %v636 = vpop.f32.mrb[0].mxu0
  %v637 = vadd.f32 0.0, %v636
  %v638 = vpop.f32.mrb[0].mxu0
  %639 = vmatprep.mubr.bf16.mxu0 0
  %640 = vmatmul.mubr.bf16.gmra.mrb[0].mxu0 %v442
  %v641 = vpop.f32.mrb[0].mxu0
  %v642 = vadd.f32 0.0, %v641
  %v643 = vpop.f32.mrb[0].mxu0
  %v644 = vpop.f32.mrb[0].mxu0
  %v645 = vadd.f32 0.0, %v644
  %v646 = vpop.f32.mrb[0].mxu0
  %647 = vmatprep.mubr.bf16.mxu0 0
  %648 = vmatmul.mubr.bf16.gmra.mrb[0].mxu0 %v445
  %v649 = vpop.f32.mrb[0].mxu0
  %v650 = vadd.f32 0.0, %v649
  %v651 = vpop.f32.mrb[0].mxu0
  %v652 = vpop.f32.mrb[0].mxu0
  %v653 = vadd.f32 0.0, %v652
  %v654 = vpop.f32.mrb[0].mxu0
  %655 = vmatprep.mubr.bf16.mxu0 0
  %656 = vmatmul.mubr.bf16.gmra.mrb[0].mxu0 %v448
  %v657 = vpop.f32.mrb[0].mxu0
  %v658 = vadd.f32 0.0, %v657
  %v659 = vpop.f32.mrb[0].mxu0
  %v660 = vpop.f32.mrb[0].mxu0
  %v661 = vadd.f32 0.0, %v660
  %v662 = vpop.f32.mrb[0].mxu0
  %663 = vmatprep.mubr.bf16.mxu0 0
  %664 = vmatmul.mubr.bf16.gmra.mrb[0].mxu0 %v451
  %v665 = vpop.f32.mrb[0].mxu0
  %v666 = vadd.f32 0.0, %v665
  %v667 = vpop.f32.mrb[0].mxu0
  %v668 = vpop.f32.mrb[0].mxu0
  %v669 = vadd.f32 0.0, %v668
  %v670 = vpop.f32.mrb[0].mxu0
  %671 = vmatprep.mubr.bf16.mxu0 0
  %672 = vmatmul.mubr.bf16.gmra.mrb[0].mxu0 %v454
  %v673 = vpop.f32.mrb[0].mxu0
  %v674 = vadd.f32 0.0, %v673
  %v675 = vpop.f32.mrb[0].mxu0
  %v676 = vpop.f32.mrb[0].mxu0
  %v677 = vadd.f32 0.0, %v676
  %v678 = vpop.f32.mrb[0].mxu0
  %679 = vmatprep.mubr.bf16.mxu0 0
  %680 = vmatmul.mubr.bf16.gmra.mrb[0].mxu0 %v457
  %v681 = vpop.f32.mrb[0].mxu0
  %v682 = vadd.f32 0.0, %v681
  %v683 = vpop.f32.mrb[0].mxu0
  %v684 = vpop.f32.mrb[0].mxu0
  %v685 = vadd.f32 0.0, %v684
  %v686 = vpop.f32.mrb[0].mxu0
  %687 = vmatprep.mubr.bf16.mxu0 0
  %688 = vmatmul.mubr.bf16.gmra.mrb[0].mxu0 %v460
  %v689 = vpop.f32.mrb[0].mxu0
  %v690 = vadd.f32 0.0, %v689
  %v691 = vpop.f32.mrb[0].mxu0
  %v692 = vpop.f32.mrb[0].mxu0
  %v693 = vadd.f32 0.0, %v692
  %v694 = vpop.f32.mrb[0].mxu0
  %695 = vmatprep.mubr.bf16.mxu0 0
  %696 = vmatmul.mubr.bf16.gmra.mrb[0].mxu0 %v463
  %v697 = vpop.f32.mrb[0].mxu0
  %v698 = vadd.f32 0.0, %v697
  %v699 = vpop.f32.mrb[0].mxu0
  %v700 = vpop.f32.mrb[0].mxu0
  %v701 = vadd.f32 0.0, %v700
  %v702 = vpop.f32.mrb[0].mxu0
  %703 = vmatprep.mubr.bf16.mxu0 0
  %704 = vmatmul.mubr.bf16.gmra.mrb[0].mxu0 %v466
  %v705 = vpop.f32.mrb[0].mxu0
  %v706 = vadd.f32 0.0, %v705
  %v707 = vpop.f32.mrb[0].mxu0
  %v708 = vpop.f32.mrb[0].mxu0
  %v709 = vadd.f32 0.0, %v708
  %v710 = vpop.f32.mrb[0].mxu0
  %711 = vmatprep.mubr.bf16.mxu0 0
  %712 = vmatmul.mubr.bf16.gmra.mrb[0].mxu0 %v469
  %v713 = vpop.f32.mrb[0].mxu0
  %v714 = vadd.f32 0.0, %v713
  %v715 = vpop.f32.mrb[0].mxu0
  %v716 = vpop.f32.mrb[0].mxu0
  %v717 = vadd.f32 0.0, %v716
  %v718 = vpop.f32.mrb[0].mxu0
  %719 = vmatprep.mubr.bf16.mxu0 0
  %720 = vmatmul.mubr.bf16.gmra.mrb[0].mxu0 %v472
  %v721 = vpop.f32.mrb[0].mxu0
  %v722 = vadd.f32 0.0, %v721
  %v723 = vpop.f32.mrb[0].mxu0
  %v724 = vpop.f32.mrb[0].mxu0
  %v725 = vadd.f32 0.0, %v724
  %v726 = vpop.f32.mrb[0].mxu0
  %727 = vmatprep.mubr.bf16.mxu0 0
  %728 = vmatmul.mubr.bf16.gmra.mrb[0].mxu0 %v475
  %v729 = vpop.f32.mrb[0].mxu0
  %v730 = vadd.f32 0.0, %v729
  %v731 = vpop.f32.mrb[0].mxu0
  %v732 = vpop.f32.mrb[0].mxu0
  %v733 = vadd.f32 0.0, %v732
  %v734 = vpop.f32.mrb[0].mxu0
  %735 = vmatprep.mubr.bf16.mxu0 0
  %736 = vmatmul.mubr.bf16.gmra.mrb[0].mxu0 %v478
  %v737 = vpop.f32.mrb[0].mxu0
  %v738 = vadd.f32 0.0, %v737
  %v739 = vpop.f32.mrb[0].mxu0
  %v740 = vpop.f32.mrb[0].mxu0
  %v741 = vadd.f32 0.0, %v740
  %v742 = vpop.f32.mrb[0].mxu0
  %743 = vmatprep.mubr.bf16.mxu0 0
  %744 = vmatmul.mubr.bf16.gmra.mrb[0].mxu0 %v481
  %v745 = vpop.f32.mrb[0].mxu0
  %v746 = vadd.f32 0.0, %v745
  %v747 = vpop.f32.mrb[0].mxu0
  %v748 = vpop.f32.mrb[0].mxu0
  %v749 = vadd.f32 0.0, %v748
  %v750 = vpop.f32.mrb[0].mxu0
  %751 = vmatprep.mubr.bf16.mxu0 0
  %752 = vmatmul.mubr.bf16.gmra.mrb[0].mxu0 %v484
  %v753 = vpop.f32.mrb[0].mxu0
  %v754 = vadd.f32 0.0, %v753
  %v755 = vpop.f32.mrb[0].mxu0
  %v756 = vpop.f32.mrb[0].mxu0
  %v757 = vadd.f32 0.0, %v756
  %v758 = vpop.f32.mrb[0].mxu0
  %759 = vmatprep.mubr.bf16.mxu0 0
  %760 = vmatmul.mubr.bf16.gmra.mrb[0].mxu0 %v487
  %v761 = vpop.f32.mrb[0].mxu0
  %v762 = vadd.f32 0.0, %v761
  %v763 = vpop.f32.mrb[0].mxu0
  %v764 = vpop.f32.mrb[0].mxu0
  %v765 = vadd.f32 0.0, %v764
  %v766 = vpop.f32.mrb[0].mxu0
  %767 = vmatprep.mubr.bf16.mxu0 0
  %768 = vmatmul.mubr.bf16.gmra.mrb[0].mxu0 %v490
  %v769 = vpop.f32.mrb[0].mxu0
  %v770 = vadd.f32 0.0, %v769
  %v771 = vpop.f32.mrb[0].mxu0
  %v772 = vpop.f32.mrb[0].mxu0
  %v773 = vadd.f32 0.0, %v772
  %v774 = vpop.f32.mrb[0].mxu0
  %775 = vmatprep.mubr.bf16.mxu0 0
  %776 = vmatmul.mubr.bf16.gmra.mrb[0].mxu0 %v493
  %v777 = vpop.f32.mrb[0].mxu0
  %v778 = vadd.f32 0.0, %v777
  %v779 = vpop.f32.mrb[0].mxu0
  %v780 = vpop.f32.mrb[0].mxu0
  %v781 = vadd.f32 0.0, %v780
  %v782 = vpop.f32.mrb[0].mxu0
  %783 = vdwg.mxu0
  %v784 = vpack.c.bf16 %v533, %v530
  %v785 = vpack.c.bf16 %v541, %v538
  %v786 = vpack.c.bf16 %v549, %v546
  %v787 = vpack.c.bf16 %v557, %v554
  %v788 = vpack.c.bf16 %v565, %v562
  %v789 = vpack.c.bf16 %v573, %v570
  %v790 = vpack.c.bf16 %v581, %v578
  %v791 = vpack.c.bf16 %v589, %v586
  %v792 = vpack.c.bf16 %v597, %v594
  %v793 = vpack.c.bf16 %v605, %v602
  %v794 = vpack.c.bf16 %v613, %v610
  %v795 = vpack.c.bf16 %v621, %v618
  %v796 = vpack.c.bf16 %v629, %v626
  %v797 = vpack.c.bf16 %v637, %v634
  %v798 = vpack.c.bf16 %v645, %v642
  %v799 = vpack.c.bf16 %v653, %v650
  %v800 = vpack.c.bf16 %v661, %v658
  %v801 = vpack.c.bf16 %v669, %v666
  %v802 = vpack.c.bf16 %v677, %v674
  %v803 = vpack.c.bf16 %v685, %v682
  %v804 = vpack.c.bf16 %v693, %v690
  %v805 = vpack.c.bf16 %v701, %v698
  %v806 = vpack.c.bf16 %v709, %v706
  %v807 = vpack.c.bf16 %v717, %v714
  %v808 = vpack.c.bf16 %v725, %v722
  %v809 = vpack.c.bf16 %v733, %v730
  %v810 = vpack.c.bf16 %v741, %v738
  %v811 = vpack.c.bf16 %v749, %v746
  %v812 = vpack.c.bf16 %v757, %v754
  %v813 = vpack.c.bf16 %v765, %v762
  %v814 = vpack.c.bf16 %v773, %v770
  %v815 = vpack.c.bf16 %v781, %v778
  %v816 = vld [vmem:[%s3] sm:$0x1]
  %v818 = vlaneseq
  %v819 = vshrl.u32 %v818, 7
  %v820 = vsub.s32 0, %v819
  %v821 = vrot.slane %v816, %v820
  %v951 = vunpack.c.l.b16 %v30
  %v952 = vunpack.c.h.b16 %v30
  %v953 = vunpack.c.l.b16 %v31
  %v954 = vunpack.c.h.b16 %v31
  %v955 = vunpack.c.l.b16 %v32
  %v956 = vunpack.c.h.b16 %v32
  %v957 = vunpack.c.l.b16 %v33
  %v958 = vunpack.c.h.b16 %v33
  %v959 = vunpack.c.l.b16 %v34
  %v960 = vunpack.c.h.b16 %v34
  %v961 = vunpack.c.l.b16 %v35
  %v962 = vunpack.c.h.b16 %v35
  %v963 = vunpack.c.l.b16 %v36
  %v964 = vunpack.c.h.b16 %v36
  %v965 = vunpack.c.l.b16 %v37
  %v966 = vunpack.c.h.b16 %v37
  %v967 = vunpack.c.l.b16 %v38
  %v968 = vunpack.c.h.b16 %v38
  %v969 = vunpack.c.l.b16 %v39
  %v970 = vunpack.c.h.b16 %v39
  %v971 = vunpack.c.l.b16 %v40
  %v972 = vunpack.c.h.b16 %v40
  %v973 = vunpack.c.l.b16 %v41
  %v974 = vunpack.c.h.b16 %v41
  %v975 = vunpack.c.l.b16 %v42
  %v976 = vunpack.c.h.b16 %v42
  %v977 = vunpack.c.l.b16 %v43
  %v978 = vunpack.c.h.b16 %v43
  %v979 = vunpack.c.l.b16 %v44
  %v980 = vunpack.c.h.b16 %v44
  %v981 = vunpack.c.l.b16 %v45
  %v982 = vunpack.c.h.b16 %v45
  %v983 = vunpack.c.l.b16 %v46
  %v984 = vunpack.c.h.b16 %v46
  %v985 = vunpack.c.l.b16 %v47
  %v986 = vunpack.c.h.b16 %v47
  %v987 = vunpack.c.l.b16 %v48
  %v988 = vunpack.c.h.b16 %v48
  %v989 = vunpack.c.l.b16 %v49
  %v990 = vunpack.c.h.b16 %v49
  %v991 = vunpack.c.l.b16 %v50
  %v992 = vunpack.c.h.b16 %v50
  %v993 = vunpack.c.l.b16 %v51
  %v994 = vunpack.c.h.b16 %v51
  %v995 = vunpack.c.l.b16 %v52
  %v996 = vunpack.c.h.b16 %v52
  %v997 = vunpack.c.l.b16 %v53
  %v998 = vunpack.c.h.b16 %v53
  %v999 = vunpack.c.l.b16 %v54
  %v1000 = vunpack.c.h.b16 %v54
  %v1001 = vunpack.c.l.b16 %v55
  %v1002 = vunpack.c.h.b16 %v55
  %v1003 = vunpack.c.l.b16 %v56
  %v1004 = vunpack.c.h.b16 %v56
  %v1005 = vunpack.c.l.b16 %v57
  %v1006 = vunpack.c.h.b16 %v57
  %v1007 = vunpack.c.l.b16 %v58
  %v1008 = vunpack.c.h.b16 %v58
  %v1009 = vunpack.c.l.b16 %v59
  %v1010 = vunpack.c.h.b16 %v59
  %v1011 = vunpack.c.l.b16 %v60
  %v1012 = vunpack.c.h.b16 %v60
  %v1013 = vunpack.c.l.b16 %v61
  %v1014 = vunpack.c.h.b16 %v61
  %v1015 = vunpack.c.l.b16 %v62
  %v1016 = vunpack.c.h.b16 %v62
  %v1017 = vunpack.c.l.b16 %v63
  %v1018 = vunpack.c.h.b16 %v63
  %v1019 = vunpack.c.l.b16 %v64
  %v1020 = vunpack.c.h.b16 %v64
  %v1021 = vunpack.c.l.b16 %v65
  %v1022 = vunpack.c.h.b16 %v65
  %v1023 = vunpack.c.l.b16 %v66
  %v1024 = vunpack.c.h.b16 %v66
  %v1025 = vunpack.c.l.b16 %v67
  %v1026 = vunpack.c.h.b16 %v67
  %v1027 = vunpack.c.l.b16 %v68
  %v1028 = vunpack.c.h.b16 %v68
  %v1029 = vunpack.c.l.b16 %v69
  %v1030 = vunpack.c.h.b16 %v69
  %v1031 = vunpack.c.l.b16 %v70
  %v1032 = vunpack.c.h.b16 %v70
  %v1033 = vunpack.c.l.b16 %v71
  %v1034 = vunpack.c.h.b16 %v71
  %v1035 = vunpack.c.l.b16 %v72
  %v1036 = vunpack.c.h.b16 %v72
  %v1037 = vunpack.c.l.b16 %v73
  %v1038 = vunpack.c.h.b16 %v73
  %v1039 = vunpack.c.l.b16 %v74
  %v1040 = vunpack.c.h.b16 %v74
  %v1041 = vunpack.c.l.b16 %v75
  %v1042 = vunpack.c.h.b16 %v75
  %v1043 = vunpack.c.l.b16 %v76
  %v1044 = vunpack.c.h.b16 %v76
  %v1045 = vunpack.c.l.b16 %v77
  %v1046 = vunpack.c.h.b16 %v77
  %v1047 = vunpack.c.l.b16 %v78
  %v1048 = vunpack.c.h.b16 %v78
  %v1049 = vunpack.c.l.b16 %v79
  %v1050 = vunpack.c.h.b16 %v79
  %v1051 = vunpack.c.l.b16 %v80
  %v1052 = vunpack.c.h.b16 %v80
  %v1053 = vunpack.c.l.b16 %v81
  %v1054 = vunpack.c.h.b16 %v81
  %v1055 = vunpack.c.l.b16 %v82
  %v1056 = vunpack.c.h.b16 %v82
  %v1057 = vunpack.c.l.b16 %v83
  %v1058 = vunpack.c.h.b16 %v83
  %v1059 = vunpack.c.l.b16 %v84
  %v1060 = vunpack.c.h.b16 %v84
  %v1061 = vunpack.c.l.b16 %v85
  %v1062 = vunpack.c.h.b16 %v85
  %v1063 = vunpack.c.l.b16 %v86
  %v1064 = vunpack.c.h.b16 %v86
  %v1065 = vunpack.c.l.b16 %v87
  %v1066 = vunpack.c.h.b16 %v87
  %v1067 = vunpack.c.l.b16 %v88
  %v1068 = vunpack.c.h.b16 %v88
  %v1069 = vunpack.c.l.b16 %v89
  %v1070 = vunpack.c.h.b16 %v89
  %v1071 = vunpack.c.l.b16 %v90
  %v1072 = vunpack.c.h.b16 %v90
  %v1073 = vunpack.c.l.b16 %v91
  %v1074 = vunpack.c.h.b16 %v91
  %v1075 = vunpack.c.l.b16 %v92
  %v1076 = vunpack.c.h.b16 %v92
  %v1077 = vunpack.c.l.b16 %v93
  %v1078 = vunpack.c.h.b16 %v93
  %v1079 = vunpack.c.l.b16 %v94
  %v1080 = vunpack.c.h.b16 %v94
  %v1081 = vunpack.c.l.b16 %v95
  %v1082 = vunpack.c.h.b16 %v95
  %v1083 = vunpack.c.l.b16 %v96
  %v1084 = vunpack.c.h.b16 %v96
  %v1085 = vunpack.c.l.b16 %v97
  %v1086 = vunpack.c.h.b16 %v97
  %v1087 = vunpack.c.l.b16 %v98
  %v1088 = vunpack.c.h.b16 %v98
  %v1089 = vunpack.c.l.b16 %v99
  %v1090 = vunpack.c.h.b16 %v99
  %v1091 = vunpack.c.l.b16 %v100
  %v1092 = vunpack.c.h.b16 %v100
  %v1093 = vunpack.c.l.b16 %v101
  %v1094 = vunpack.c.h.b16 %v101
  %v1095 = vunpack.c.l.b16 %v102
  %v1096 = vunpack.c.h.b16 %v102
  %v1097 = vunpack.c.l.b16 %v103
  %v1098 = vunpack.c.h.b16 %v103
  %v1099 = vunpack.c.l.b16 %v104
  %v1100 = vunpack.c.h.b16 %v104
  %v1101 = vunpack.c.l.b16 %v105
  %v1102 = vunpack.c.h.b16 %v105
  %v1103 = vunpack.c.l.b16 %v106
  %v1104 = vunpack.c.h.b16 %v106
  %v1105 = vunpack.c.l.b16 %v107
  %v1106 = vunpack.c.h.b16 %v107
  %v1107 = vunpack.c.l.b16 %v108
  %v1108 = vunpack.c.h.b16 %v108
  %v1109 = vunpack.c.l.b16 %v109
  %v1110 = vunpack.c.h.b16 %v109
  %v1111 = vunpack.c.l.b16 %v110
  %v1112 = vunpack.c.h.b16 %v110
  %v1113 = vunpack.c.l.b16 %v111
  %v1114 = vunpack.c.h.b16 %v111
  %v1115 = vunpack.c.l.b16 %v112
  %v1116 = vunpack.c.h.b16 %v112
  %v1117 = vunpack.c.l.b16 %v113
  %v1118 = vunpack.c.h.b16 %v113
  %v1119 = vunpack.c.l.b16 %v114
  %v1120 = vunpack.c.h.b16 %v114
  %v1121 = vunpack.c.l.b16 %v115
  %v1122 = vunpack.c.h.b16 %v115
  %v1123 = vunpack.c.l.b16 %v116
  %v1124 = vunpack.c.h.b16 %v116
  %v1125 = vunpack.c.l.b16 %v117
  %v1126 = vunpack.c.h.b16 %v117
  %v1127 = vunpack.c.l.b16 %v118
  %v1128 = vunpack.c.h.b16 %v118
  %v1129 = vunpack.c.l.b16 %v119
  %v1130 = vunpack.c.h.b16 %v119
  %v1131 = vunpack.c.l.b16 %v120
  %v1132 = vunpack.c.h.b16 %v120
  %v1133 = vunpack.c.l.b16 %v121
  %v1134 = vunpack.c.h.b16 %v121
  %v1135 = vunpack.c.l.b16 %v122
  %v1136 = vunpack.c.h.b16 %v122
  %v1137 = vunpack.c.l.b16 %v123
  %v1138 = vunpack.c.h.b16 %v123
  %v1139 = vunpack.c.l.b16 %v124
  %v1140 = vunpack.c.h.b16 %v124
  %v1141 = vunpack.c.l.b16 %v125
  %v1142 = vunpack.c.h.b16 %v125
  %v1143 = vunpack.c.l.b16 %v126
  %v1144 = vunpack.c.h.b16 %v126
  %v1145 = vunpack.c.l.b16 %v127
  %v1146 = vunpack.c.h.b16 %v127
  %v1147 = vunpack.c.l.b16 %v128
  %v1148 = vunpack.c.h.b16 %v128
  %v1149 = vunpack.c.l.b16 %v129
  %v1150 = vunpack.c.h.b16 %v129
  %v1151 = vunpack.c.l.b16 %v130
  %v1152 = vunpack.c.h.b16 %v130
  %v1153 = vunpack.c.l.b16 %v131
  %v1154 = vunpack.c.h.b16 %v131
  %v1155 = vunpack.c.l.b16 %v132
  %v1156 = vunpack.c.h.b16 %v132
  %v1157 = vunpack.c.l.b16 %v133
  %v1158 = vunpack.c.h.b16 %v133
  %v1159 = vunpack.c.l.b16 %v134
  %v1160 = vunpack.c.h.b16 %v134
  %v1161 = vunpack.c.l.b16 %v135
  %v1162 = vunpack.c.h.b16 %v135
  %v1163 = vunpack.c.l.b16 %v136
  %v1164 = vunpack.c.h.b16 %v136
  %v1165 = vunpack.c.l.b16 %v137
  %v1166 = vunpack.c.h.b16 %v137
  %v1167 = vunpack.c.l.b16 %v138
  %v1168 = vunpack.c.h.b16 %v138
  %v1169 = vunpack.c.l.b16 %v139
  %v1170 = vunpack.c.h.b16 %v139
  %v1171 = vunpack.c.l.b16 %v140
  %v1172 = vunpack.c.h.b16 %v140
  %v1173 = vunpack.c.l.b16 %v141
  %v1174 = vunpack.c.h.b16 %v141
  %v1175 = vunpack.c.l.b16 %v142
  %v1176 = vunpack.c.h.b16 %v142
  %v1177 = vunpack.c.l.b16 %v143
  %v1178 = vunpack.c.h.b16 %v143
  %v1179 = vunpack.c.l.b16 %v144
  %v1180 = vunpack.c.h.b16 %v144
  %v1181 = vunpack.c.l.b16 %v145
  %v1182 = vunpack.c.h.b16 %v145
  %v1183 = vunpack.c.l.b16 %v146
  %v1184 = vunpack.c.h.b16 %v146
  %v1185 = vunpack.c.l.b16 %v147
  %v1186 = vunpack.c.h.b16 %v147
  %v1187 = vunpack.c.l.b16 %v148
  %v1188 = vunpack.c.h.b16 %v148
  %v1189 = vunpack.c.l.b16 %v149
  %v1190 = vunpack.c.h.b16 %v149
  %v1191 = vunpack.c.l.b16 %v150
  %v1192 = vunpack.c.h.b16 %v150
  %v1193 = vunpack.c.l.b16 %v151
  %v1194 = vunpack.c.h.b16 %v151
  %v1195 = vunpack.c.l.b16 %v152
  %v1196 = vunpack.c.h.b16 %v152
  %v1197 = vunpack.c.l.b16 %v153
  %v1198 = vunpack.c.h.b16 %v153
  %v1199 = vunpack.c.l.b16 %v154
  %v1200 = vunpack.c.h.b16 %v154
  %v1201 = vunpack.c.l.b16 %v155
  %v1202 = vunpack.c.h.b16 %v155
  %v1203 = vunpack.c.l.b16 %v156
  %v1204 = vunpack.c.h.b16 %v156
  %v1205 = vunpack.c.l.b16 %v157
  %v1206 = vunpack.c.h.b16 %v157
  %v1207 = vpack.c.b16 %v955, %v951
  %v1208 = vpack.c.b16 %v956, %v952
  %v1209 = vpack.c.b16 %v957, %v953
  %v1210 = vpack.c.b16 %v958, %v954
  %v1211 = vpack.c.b16 %v963, %v959
  %v1212 = vpack.c.b16 %v964, %v960
  %v1213 = vpack.c.b16 %v965, %v961
  %v1214 = vpack.c.b16 %v966, %v962
  %v1215 = vpack.c.b16 %v971, %v967
  %v1216 = vpack.c.b16 %v972, %v968
  %v1217 = vpack.c.b16 %v973, %v969
  %v1218 = vpack.c.b16 %v974, %v970
  %v1219 = vpack.c.b16 %v979, %v975
  %v1220 = vpack.c.b16 %v980, %v976
  %v1221 = vpack.c.b16 %v981, %v977
  %v1222 = vpack.c.b16 %v982, %v978
  %v1223 = vpack.c.b16 %v987, %v983
  %v1224 = vpack.c.b16 %v988, %v984
  %v1225 = vpack.c.b16 %v989, %v985
  %v1226 = vpack.c.b16 %v990, %v986
  %v1227 = vpack.c.b16 %v995, %v991
  %v1228 = vpack.c.b16 %v996, %v992
  %v1229 = vpack.c.b16 %v997, %v993
  %v1230 = vpack.c.b16 %v998, %v994
  %v1231 = vpack.c.b16 %v1003, %v999
  %v1232 = vpack.c.b16 %v1004, %v1000
  %v1233 = vpack.c.b16 %v1005, %v1001
  %v1234 = vpack.c.b16 %v1006, %v1002
  %v1235 = vpack.c.b16 %v1011, %v1007
  %v1236 = vpack.c.b16 %v1012, %v1008
  %v1237 = vpack.c.b16 %v1013, %v1009
  %v1238 = vpack.c.b16 %v1014, %v1010
  %v1239 = vpack.c.b16 %v1019, %v1015
  %v1240 = vpack.c.b16 %v1020, %v1016
  %v1241 = vpack.c.b16 %v1021, %v1017
  %v1242 = vpack.c.b16 %v1022, %v1018
  %v1243 = vpack.c.b16 %v1027, %v1023
  %v1244 = vpack.c.b16 %v1028, %v1024
  %v1245 = vpack.c.b16 %v1029, %v1025
  %v1246 = vpack.c.b16 %v1030, %v1026
  %v1247 = vpack.c.b16 %v1035, %v1031
  %v1248 = vpack.c.b16 %v1036, %v1032
  %v1249 = vpack.c.b16 %v1037, %v1033
  %v1250 = vpack.c.b16 %v1038, %v1034
  %v1251 = vpack.c.b16 %v1043, %v1039
  %v1252 = vpack.c.b16 %v1044, %v1040
  %v1253 = vpack.c.b16 %v1045, %v1041
  %v1254 = vpack.c.b16 %v1046, %v1042
  %v1255 = vpack.c.b16 %v1051, %v1047
  %v1256 = vpack.c.b16 %v1052, %v1048
  %v1257 = vpack.c.b16 %v1053, %v1049
  %v1258 = vpack.c.b16 %v1054, %v1050
  %v1259 = vpack.c.b16 %v1059, %v1055
  %v1260 = vpack.c.b16 %v1060, %v1056
  %v1261 = vpack.c.b16 %v1061, %v1057
  %v1262 = vpack.c.b16 %v1062, %v1058
  %v1263 = vpack.c.b16 %v1067, %v1063
  %v1264 = vpack.c.b16 %v1068, %v1064
  %v1265 = vpack.c.b16 %v1069, %v1065
  %v1266 = vpack.c.b16 %v1070, %v1066
  %v1267 = vpack.c.b16 %v1075, %v1071
  %v1268 = vpack.c.b16 %v1076, %v1072
  %v1269 = vpack.c.b16 %v1077, %v1073
  %v1270 = vpack.c.b16 %v1078, %v1074
  %v1271 = vpack.c.b16 %v1083, %v1079
  %v1272 = vpack.c.b16 %v1084, %v1080
  %v1273 = vpack.c.b16 %v1085, %v1081
  %v1274 = vpack.c.b16 %v1086, %v1082
  %v1275 = vpack.c.b16 %v1091, %v1087
  %v1276 = vpack.c.b16 %v1092, %v1088
  %v1277 = vpack.c.b16 %v1093, %v1089
  %v1278 = vpack.c.b16 %v1094, %v1090
  %v1279 = vpack.c.b16 %v1099, %v1095
  %v1280 = vpack.c.b16 %v1100, %v1096
  %v1281 = vpack.c.b16 %v1101, %v1097
  %v1282 = vpack.c.b16 %v1102, %v1098
  %v1283 = vpack.c.b16 %v1107, %v1103
  %v1284 = vpack.c.b16 %v1108, %v1104
  %v1285 = vpack.c.b16 %v1109, %v1105
  %v1286 = vpack.c.b16 %v1110, %v1106
  %v1287 = vpack.c.b16 %v1115, %v1111
  %v1288 = vpack.c.b16 %v1116, %v1112
  %v1289 = vpack.c.b16 %v1117, %v1113
  %v1290 = vpack.c.b16 %v1118, %v1114
  %v1291 = vpack.c.b16 %v1123, %v1119
  %v1292 = vpack.c.b16 %v1124, %v1120
  %v1293 = vpack.c.b16 %v1125, %v1121
  %v1294 = vpack.c.b16 %v1126, %v1122
  %v1295 = vpack.c.b16 %v1131, %v1127
  %v1296 = vpack.c.b16 %v1132, %v1128
  %v1297 = vpack.c.b16 %v1133, %v1129
  %v1298 = vpack.c.b16 %v1134, %v1130
  %v1299 = vpack.c.b16 %v1139, %v1135
  %v1300 = vpack.c.b16 %v1140, %v1136
  %v1301 = vpack.c.b16 %v1141, %v1137
  %v1302 = vpack.c.b16 %v1142, %v1138
  %v1303 = vpack.c.b16 %v1147, %v1143
  %v1304 = vpack.c.b16 %v1148, %v1144
  %v1305 = vpack.c.b16 %v1149, %v1145
  %v1306 = vpack.c.b16 %v1150, %v1146
  %v1307 = vpack.c.b16 %v1155, %v1151
  %v1308 = vpack.c.b16 %v1156, %v1152
  %v1309 = vpack.c.b16 %v1157, %v1153
  %v1310 = vpack.c.b16 %v1158, %v1154
  %v1311 = vpack.c.b16 %v1163, %v1159
  %v1312 = vpack.c.b16 %v1164, %v1160
  %v1313 = vpack.c.b16 %v1165, %v1161
  %v1314 = vpack.c.b16 %v1166, %v1162
  %v1315 = vpack.c.b16 %v1171, %v1167
  %v1316 = vpack.c.b16 %v1172, %v1168
  %v1317 = vpack.c.b16 %v1173, %v1169
  %v1318 = vpack.c.b16 %v1174, %v1170
  %v1319 = vpack.c.b16 %v1179, %v1175
  %v1320 = vpack.c.b16 %v1180, %v1176
  %v1321 = vpack.c.b16 %v1181, %v1177
  %v1322 = vpack.c.b16 %v1182, %v1178
  %v1323 = vpack.c.b16 %v1187, %v1183
  %v1324 = vpack.c.b16 %v1188, %v1184
  %v1325 = vpack.c.b16 %v1189, %v1185
  %v1326 = vpack.c.b16 %v1190, %v1186
  %v1327 = vpack.c.b16 %v1195, %v1191
  %v1328 = vpack.c.b16 %v1196, %v1192
  %v1329 = vpack.c.b16 %v1197, %v1193
  %v1330 = vpack.c.b16 %v1198, %v1194
  %v1331 = vpack.c.b16 %v1203, %v1199
  %v1332 = vpack.c.b16 %v1204, %v1200
  %v1333 = vpack.c.b16 %v1205, %v1201
  %v1334 = vpack.c.b16 %v1206, %v1202
  %1463 = vmatprep.subr.bf16.mxu0 0
  %1464 = vmatpush1.bf16.msra.mxu0 %v784
  %1465 = vmatprep.subr.bf16.mxu0 0
  %1466 = vmatpush1.bf16.msra.mxu0 %v785
  %1467 = vmatprep.subr.bf16.mxu0 0
  %1468 = vmatpush1.bf16.msra.mxu0 %v786
  %1469 = vmatprep.subr.bf16.mxu0 0
  %1470 = vmatpush1.bf16.msra.mxu0 %v787
  %1471 = vmatprep.subr.bf16.mxu0 0
  %1472 = vmatpush1.bf16.msra.mxu0 %v788
  %1473 = vmatprep.subr.bf16.mxu0 0
  %1474 = vmatpush1.bf16.msra.mxu0 %v789
  %1475 = vmatprep.subr.bf16.mxu0 0
  %1476 = vmatpush1.bf16.msra.mxu0 %v790
  %1477 = vmatprep.subr.bf16.mxu0 0
  %1478 = vmatpush1.bf16.msra.mxu0 %v791
  %1479 = vmatprep.subr.bf16.mxu0 0
  %1480 = vmatpush1.bf16.msra.mxu0 %v792
  %1481 = vmatprep.subr.bf16.mxu0 0
  %1482 = vmatpush1.bf16.msra.mxu0 %v793
  %1483 = vmatprep.subr.bf16.mxu0 0
  %1484 = vmatpush1.bf16.msra.mxu0 %v794
  %1485 = vmatprep.subr.bf16.mxu0 0
  %1486 = vmatpush1.bf16.msra.mxu0 %v795
  %1487 = vmatprep.subr.bf16.mxu0 0
  %1488 = vmatpush1.bf16.msra.mxu0 %v796
  %1489 = vmatprep.subr.bf16.mxu0 0
  %1490 = vmatpush1.bf16.msra.mxu0 %v797
  %1491 = vmatprep.subr.bf16.mxu0 0
  %1492 = vmatpush1.bf16.msra.mxu0 %v798
  %1493 = vmatprep.subr.bf16.mxu0 0
  %1494 = vmatpush1.bf16.msra.mxu0 %v799
  %1495 = vmatprep.mubr.bf16.mxu0 %v1208
  %1496 = vmatmul.mubr.bf16.gmra.mrb[0].mxu0 %v1207
  %v1497 = vpop.f32.mrb[0].mxu0
  %v1498 = vadd.f32 %v821, %v1497
  %v1499 = vpop.f32.mrb[0].mxu0
  %v1500 = vpop.f32.mrb[0].mxu0
  %v1501 = vadd.f32 %v821, %v1500
  %v1502 = vpop.f32.mrb[0].mxu0
  %1503 = vmatprep.mubr.bf16.mxu0 %v1212
  %1504 = vmatmul.mubr.bf16.gmra.mrb[0].mxu0 %v1211
  %v1505 = vpop.f32.mrb[0].mxu0
  %v1506 = vadd.f32 %v821, %v1505
  %v1507 = vpop.f32.mrb[0].mxu0
  %v1508 = vpop.f32.mrb[0].mxu0
  %v1509 = vadd.f32 %v821, %v1508
  %v1510 = vpop.f32.mrb[0].mxu0
  %1511 = vmatprep.mubr.bf16.mxu0 %v1216
  %1512 = vmatmul.mubr.bf16.gmra.mrb[0].mxu0 %v1215
  %v1513 = vpop.f32.mrb[0].mxu0
  %v1514 = vadd.f32 %v821, %v1513
  %v1515 = vpop.f32.mrb[0].mxu0
  %v1516 = vpop.f32.mrb[0].mxu0
  %v1517 = vadd.f32 %v821, %v1516
  %v1518 = vpop.f32.mrb[0].mxu0
  %1519 = vmatprep.mubr.bf16.mxu0 %v1220
  %1520 = vmatmul.mubr.bf16.gmra.mrb[0].mxu0 %v1219
  %v1521 = vpop.f32.mrb[0].mxu0
  %v1522 = vadd.f32 %v821, %v1521
  %v1523 = vpop.f32.mrb[0].mxu0
  %v1524 = vpop.f32.mrb[0].mxu0
  %v1525 = vadd.f32 %v821, %v1524
  %v1526 = vpop.f32.mrb[0].mxu0
  %1527 = vmatprep.mubr.bf16.mxu0 %v1224
  %1528 = vmatmul.mubr.bf16.gmra.mrb[0].mxu0 %v1223
  %v1529 = vpop.f32.mrb[0].mxu0
  %v1530 = vadd.f32 %v821, %v1529
  %v1531 = vpop.f32.mrb[0].mxu0
  %v1532 = vpop.f32.mrb[0].mxu0
  %v1533 = vadd.f32 %v821, %v1532
  %v1534 = vpop.f32.mrb[0].mxu0
  %1535 = vmatprep.mubr.bf16.mxu0 %v1228
  %1536 = vmatmul.mubr.bf16.gmra.mrb[0].mxu0 %v1227
  %v1537 = vpop.f32.mrb[0].mxu0
  %v1538 = vadd.f32 %v821, %v1537
  %v1539 = vpop.f32.mrb[0].mxu0
  %v1540 = vpop.f32.mrb[0].mxu0
  %v1541 = vadd.f32 %v821, %v1540
  %v1542 = vpop.f32.mrb[0].mxu0
  %1543 = vmatprep.mubr.bf16.mxu0 %v1232
  %1544 = vmatmul.mubr.bf16.gmra.mrb[0].mxu0 %v1231
  %v1545 = vpop.f32.mrb[0].mxu0
  %v1546 = vadd.f32 %v821, %v1545
  %v1547 = vpop.f32.mrb[0].mxu0
  %v1548 = vpop.f32.mrb[0].mxu0
  %v1549 = vadd.f32 %v821, %v1548
  %v1550 = vpop.f32.mrb[0].mxu0
  %1551 = vmatprep.mubr.bf16.mxu0 %v1236
  %1552 = vmatmul.mubr.bf16.gmra.mrb[0].mxu0 %v1235
  %v1553 = vpop.f32.mrb[0].mxu0
  %v1554 = vadd.f32 %v821, %v1553
  %v1555 = vpop.f32.mrb[0].mxu0
  %v1556 = vpop.f32.mrb[0].mxu0
  %v1557 = vadd.f32 %v821, %v1556
  %v1558 = vpop.f32.mrb[0].mxu0
  %1559 = vmatprep.mubr.bf16.mxu0 %v1240
  %1560 = vmatmul.mubr.bf16.gmra.mrb[0].mxu0 %v1239
  %v1561 = vpop.f32.mrb[0].mxu0
  %v1562 = vadd.f32 %v821, %v1561
  %v1563 = vpop.f32.mrb[0].mxu0
  %v1564 = vpop.f32.mrb[0].mxu0
  %v1565 = vadd.f32 %v821, %v1564
  %v1566 = vpop.f32.mrb[0].mxu0
  %1567 = vmatprep.mubr.bf16.mxu0 %v1244
  %1568 = vmatmul.mubr.bf16.gmra.mrb[0].mxu0 %v1243
  %v1569 = vpop.f32.mrb[0].mxu0
  %v1570 = vadd.f32 %v821, %v1569
  %v1571 = vpop.f32.mrb[0].mxu0
  %v1572 = vpop.f32.mrb[0].mxu0
  %v1573 = vadd.f32 %v821, %v1572
  %v1574 = vpop.f32.mrb[0].mxu0
  %1575 = vmatprep.mubr.bf16.mxu0 %v1248
  %1576 = vmatmul.mubr.bf16.gmra.mrb[0].mxu0 %v1247
  %v1577 = vpop.f32.mrb[0].mxu0
  %v1578 = vadd.f32 %v821, %v1577
  %v1579 = vpop.f32.mrb[0].mxu0
  %v1580 = vpop.f32.mrb[0].mxu0
  %v1581 = vadd.f32 %v821, %v1580
  %v1582 = vpop.f32.mrb[0].mxu0
  %1583 = vmatprep.mubr.bf16.mxu0 %v1252
  %1584 = vmatmul.mubr.bf16.gmra.mrb[0].mxu0 %v1251
  %v1585 = vpop.f32.mrb[0].mxu0
  %v1586 = vadd.f32 %v821, %v1585
  %v1587 = vpop.f32.mrb[0].mxu0
  %v1588 = vpop.f32.mrb[0].mxu0
  %v1589 = vadd.f32 %v821, %v1588
  %v1590 = vpop.f32.mrb[0].mxu0
  %1591 = vmatprep.mubr.bf16.mxu0 %v1256
  %1592 = vmatmul.mubr.bf16.gmra.mrb[0].mxu0 %v1255
  %v1593 = vpop.f32.mrb[0].mxu0
  %v1594 = vadd.f32 %v821, %v1593
  %v1595 = vpop.f32.mrb[0].mxu0
  %v1596 = vpop.f32.mrb[0].mxu0
  %v1597 = vadd.f32 %v821, %v1596
  %v1598 = vpop.f32.mrb[0].mxu0
  %1599 = vmatprep.mubr.bf16.mxu0 %v1260
  %1600 = vmatmul.mubr.bf16.gmra.mrb[0].mxu0 %v1259
  %v1601 = vpop.f32.mrb[0].mxu0
  %v1602 = vadd.f32 %v821, %v1601
  %v1603 = vpop.f32.mrb[0].mxu0
  %v1604 = vpop.f32.mrb[0].mxu0
  %v1605 = vadd.f32 %v821, %v1604
  %v1606 = vpop.f32.mrb[0].mxu0
  %1607 = vmatprep.mubr.bf16.mxu0 %v1264
  %1608 = vmatmul.mubr.bf16.gmra.mrb[0].mxu0 %v1263
  %v1609 = vpop.f32.mrb[0].mxu0
  %v1610 = vadd.f32 %v821, %v1609
  %v1611 = vpop.f32.mrb[0].mxu0
  %v1612 = vpop.f32.mrb[0].mxu0
  %v1613 = vadd.f32 %v821, %v1612
  %v1614 = vpop.f32.mrb[0].mxu0
  %1615 = vmatprep.mubr.bf16.mxu0 %v1268
  %1616 = vmatmul.mubr.bf16.gmra.mrb[0].mxu0 %v1267
  %v1617 = vpop.f32.mrb[0].mxu0
  %v1618 = vadd.f32 %v821, %v1617
  %v1619 = vpop.f32.mrb[0].mxu0
  %v1620 = vpop.f32.mrb[0].mxu0
  %v1621 = vadd.f32 %v821, %v1620
  %v1622 = vpop.f32.mrb[0].mxu0
  %1623 = vmatprep.mubr.bf16.mxu0 %v1272
  %1624 = vmatmul.mubr.bf16.gmra.mrb[0].mxu0 %v1271
  %v1625 = vpop.f32.mrb[0].mxu0
  %v1626 = vadd.f32 %v821, %v1625
  %v1627 = vpop.f32.mrb[0].mxu0
  %v1628 = vpop.f32.mrb[0].mxu0
  %v1629 = vadd.f32 %v821, %v1628
  %v1630 = vpop.f32.mrb[0].mxu0
  %1631 = vmatprep.mubr.bf16.mxu0 %v1276
  %1632 = vmatmul.mubr.bf16.gmra.mrb[0].mxu0 %v1275
  %v1633 = vpop.f32.mrb[0].mxu0
  %v1634 = vadd.f32 %v821, %v1633
  %v1635 = vpop.f32.mrb[0].mxu0
  %v1636 = vpop.f32.mrb[0].mxu0
  %v1637 = vadd.f32 %v821, %v1636
  %v1638 = vpop.f32.mrb[0].mxu0
  %1639 = vmatprep.mubr.bf16.mxu0 %v1280
  %1640 = vmatmul.mubr.bf16.gmra.mrb[0].mxu0 %v1279
  %v1641 = vpop.f32.mrb[0].mxu0
  %v1642 = vadd.f32 %v821, %v1641
  %v1643 = vpop.f32.mrb[0].mxu0
  %v1644 = vpop.f32.mrb[0].mxu0
  %v1645 = vadd.f32 %v821, %v1644
  %v1646 = vpop.f32.mrb[0].mxu0
  %1647 = vmatprep.mubr.bf16.mxu0 %v1284
  %1648 = vmatmul.mubr.bf16.gmra.mrb[0].mxu0 %v1283
  %v1649 = vpop.f32.mrb[0].mxu0
  %v1650 = vadd.f32 %v821, %v1649
  %v1651 = vpop.f32.mrb[0].mxu0
  %v1652 = vpop.f32.mrb[0].mxu0
  %v1653 = vadd.f32 %v821, %v1652
  %v1654 = vpop.f32.mrb[0].mxu0
  %1655 = vmatprep.mubr.bf16.mxu0 %v1288
  %1656 = vmatmul.mubr.bf16.gmra.mrb[0].mxu0 %v1287
  %v1657 = vpop.f32.mrb[0].mxu0
  %v1658 = vadd.f32 %v821, %v1657
  %v1659 = vpop.f32.mrb[0].mxu0
  %v1660 = vpop.f32.mrb[0].mxu0
  %v1661 = vadd.f32 %v821, %v1660
  %v1662 = vpop.f32.mrb[0].mxu0
  %1663 = vmatprep.mubr.bf16.mxu0 %v1292
  %1664 = vmatmul.mubr.bf16.gmra.mrb[0].mxu0 %v1291
  %v1665 = vpop.f32.mrb[0].mxu0
  %v1666 = vadd.f32 %v821, %v1665
  %v1667 = vpop.f32.mrb[0].mxu0
  %v1668 = vpop.f32.mrb[0].mxu0
  %v1669 = vadd.f32 %v821, %v1668
  %v1670 = vpop.f32.mrb[0].mxu0
  %1671 = vmatprep.mubr.bf16.mxu0 %v1296
  %1672 = vmatmul.mubr.bf16.gmra.mrb[0].mxu0 %v1295
  %v1673 = vpop.f32.mrb[0].mxu0
  %v1674 = vadd.f32 %v821, %v1673
  %v1675 = vpop.f32.mrb[0].mxu0
  %v1676 = vpop.f32.mrb[0].mxu0
  %v1677 = vadd.f32 %v821, %v1676
  %v1678 = vpop.f32.mrb[0].mxu0
  %1679 = vmatprep.mubr.bf16.mxu0 %v1300
  %1680 = vmatmul.mubr.bf16.gmra.mrb[0].mxu0 %v1299
  %v1681 = vpop.f32.mrb[0].mxu0
  %v1682 = vadd.f32 %v821, %v1681
  %v1683 = vpop.f32.mrb[0].mxu0
  %v1684 = vpop.f32.mrb[0].mxu0
  %v1685 = vadd.f32 %v821, %v1684
  %v1686 = vpop.f32.mrb[0].mxu0
  %1687 = vmatprep.mubr.bf16.mxu0 %v1304
  %1688 = vmatmul.mubr.bf16.gmra.mrb[0].mxu0 %v1303
  %v1689 = vpop.f32.mrb[0].mxu0
  %v1690 = vadd.f32 %v821, %v1689
  %v1691 = vpop.f32.mrb[0].mxu0
  %v1692 = vpop.f32.mrb[0].mxu0
  %v1693 = vadd.f32 %v821, %v1692
  %v1694 = vpop.f32.mrb[0].mxu0
  %1695 = vmatprep.mubr.bf16.mxu0 %v1308
  %1696 = vmatmul.mubr.bf16.gmra.mrb[0].mxu0 %v1307
  %v1697 = vpop.f32.mrb[0].mxu0
  %v1698 = vadd.f32 %v821, %v1697
  %v1699 = vpop.f32.mrb[0].mxu0
  %v1700 = vpop.f32.mrb[0].mxu0
  %v1701 = vadd.f32 %v821, %v1700
  %v1702 = vpop.f32.mrb[0].mxu0
  %1703 = vmatprep.mubr.bf16.mxu0 %v1312
  %1704 = vmatmul.mubr.bf16.gmra.mrb[0].mxu0 %v1311
  %v1705 = vpop.f32.mrb[0].mxu0
  %v1706 = vadd.f32 %v821, %v1705
  %v1707 = vpop.f32.mrb[0].mxu0
  %v1708 = vpop.f32.mrb[0].mxu0
  %v1709 = vadd.f32 %v821, %v1708
  %v1710 = vpop.f32.mrb[0].mxu0
  %1711 = vmatprep.mubr.bf16.mxu0 %v1316
  %1712 = vmatmul.mubr.bf16.gmra.mrb[0].mxu0 %v1315
  %v1713 = vpop.f32.mrb[0].mxu0
  %v1714 = vadd.f32 %v821, %v1713
  %v1715 = vpop.f32.mrb[0].mxu0
  %v1716 = vpop.f32.mrb[0].mxu0
  %v1717 = vadd.f32 %v821, %v1716
  %v1718 = vpop.f32.mrb[0].mxu0
  %1719 = vmatprep.mubr.bf16.mxu0 %v1320
  %1720 = vmatmul.mubr.bf16.gmra.mrb[0].mxu0 %v1319
  %v1721 = vpop.f32.mrb[0].mxu0
  %v1722 = vadd.f32 %v821, %v1721
  %v1723 = vpop.f32.mrb[0].mxu0
  %v1724 = vpop.f32.mrb[0].mxu0
  %v1725 = vadd.f32 %v821, %v1724
  %v1726 = vpop.f32.mrb[0].mxu0
  %1727 = vmatprep.mubr.bf16.mxu0 %v1324
  %1728 = vmatmul.mubr.bf16.gmra.mrb[0].mxu0 %v1323
  %v1729 = vpop.f32.mrb[0].mxu0
  %v1730 = vadd.f32 %v821, %v1729
  %v1731 = vpop.f32.mrb[0].mxu0
  %v1732 = vpop.f32.mrb[0].mxu0
  %v1733 = vadd.f32 %v821, %v1732
  %v1734 = vpop.f32.mrb[0].mxu0
  %1735 = vmatprep.mubr.bf16.mxu0 %v1328
  %1736 = vmatmul.mubr.bf16.gmra.mrb[0].mxu0 %v1327
  %v1737 = vpop.f32.mrb[0].mxu0
  %v1738 = vadd.f32 %v821, %v1737
  %v1739 = vpop.f32.mrb[0].mxu0
  %v1740 = vpop.f32.mrb[0].mxu0
  %v1741 = vadd.f32 %v821, %v1740
  %v1742 = vpop.f32.mrb[0].mxu0
  %1743 = vmatprep.mubr.bf16.mxu0 %v1332
  %1744 = vmatmul.mubr.bf16.gmra.mrb[0].mxu0 %v1331
  %v1745 = vpop.f32.mrb[0].mxu0
  %v1746 = vadd.f32 %v821, %v1745
  %v1747 = vpop.f32.mrb[0].mxu0
  %v1748 = vpop.f32.mrb[0].mxu0
  %v1749 = vadd.f32 %v821, %v1748
  %v1750 = vpop.f32.mrb[0].mxu0
  %1751 = vdwg.mxu0
  %1752 = vmatprep.subr.bf16.mxu0 0
  %1753 = vmatpush1.bf16.msra.mxu0 %v800
  %1754 = vmatprep.subr.bf16.mxu0 0
  %1755 = vmatpush1.bf16.msra.mxu0 %v801
  %1756 = vmatprep.subr.bf16.mxu0 0
  %1757 = vmatpush1.bf16.msra.mxu0 %v802
  %1758 = vmatprep.subr.bf16.mxu0 0
  %1759 = vmatpush1.bf16.msra.mxu0 %v803
  %1760 = vmatprep.subr.bf16.mxu0 0
  %1761 = vmatpush1.bf16.msra.mxu0 %v804
  %1762 = vmatprep.subr.bf16.mxu0 0
  %1763 = vmatpush1.bf16.msra.mxu0 %v805
  %1764 = vmatprep.subr.bf16.mxu0 0
  %1765 = vmatpush1.bf16.msra.mxu0 %v806
  %1766 = vmatprep.subr.bf16.mxu0 0
  %1767 = vmatpush1.bf16.msra.mxu0 %v807
  %1768 = vmatprep.subr.bf16.mxu0 0
  %1769 = vmatpush1.bf16.msra.mxu0 %v808
  %1770 = vmatprep.subr.bf16.mxu0 0
  %1771 = vmatpush1.bf16.msra.mxu0 %v809
  %1772 = vmatprep.subr.bf16.mxu0 0
  %1773 = vmatpush1.bf16.msra.mxu0 %v810
  %1774 = vmatprep.subr.bf16.mxu0 0
  %1775 = vmatpush1.bf16.msra.mxu0 %v811
  %1776 = vmatprep.subr.bf16.mxu0 0
  %1777 = vmatpush1.bf16.msra.mxu0 %v812
  %1778 = vmatprep.subr.bf16.mxu0 0
  %1779 = vmatpush1.bf16.msra.mxu0 %v813
  %1780 = vmatprep.subr.bf16.mxu0 0
  %1781 = vmatpush1.bf16.msra.mxu0 %v814
  %1782 = vmatprep.subr.bf16.mxu0 0
  %1783 = vmatpush1.bf16.msra.mxu0 %v815
  %1784 = vmatprep.mubr.bf16.mxu0 %v1210
  %1785 = vmatmul.mubr.bf16.gmra.mrb[0].mxu0 %v1209
  %v1786 = vpop.f32.mrb[0].mxu0
  %v1787 = vadd.f32 %v1498, %v1786
  %v1788 = vpop.f32.mrb[0].mxu0
  %v1789 = vpop.f32.mrb[0].mxu0
  %v1790 = vadd.f32 %v1501, %v1789
  %v1791 = vpop.f32.mrb[0].mxu0
  %1792 = vmatprep.mubr.bf16.mxu0 %v1214
  %1793 = vmatmul.mubr.bf16.gmra.mrb[0].mxu0 %v1213
  %v1794 = vpop.f32.mrb[0].mxu0
  %v1795 = vadd.f32 %v1506, %v1794
  %v1796 = vpop.f32.mrb[0].mxu0
  %v1797 = vpop.f32.mrb[0].mxu0
  %v1798 = vadd.f32 %v1509, %v1797
  %v1799 = vpop.f32.mrb[0].mxu0
  %1800 = vmatprep.mubr.bf16.mxu0 %v1218
  %1801 = vmatmul.mubr.bf16.gmra.mrb[0].mxu0 %v1217
  %v1802 = vpop.f32.mrb[0].mxu0
  %v1803 = vadd.f32 %v1514, %v1802
  %v1804 = vpop.f32.mrb[0].mxu0
  %v1805 = vpop.f32.mrb[0].mxu0
  %v1806 = vadd.f32 %v1517, %v1805
  %v1807 = vpop.f32.mrb[0].mxu0
  %1808 = vmatprep.mubr.bf16.mxu0 %v1222
  %1809 = vmatmul.mubr.bf16.gmra.mrb[0].mxu0 %v1221
  %v1810 = vpop.f32.mrb[0].mxu0
  %v1811 = vadd.f32 %v1522, %v1810
  %v1812 = vpop.f32.mrb[0].mxu0
  %v1813 = vpop.f32.mrb[0].mxu0
  %v1814 = vadd.f32 %v1525, %v1813
  %v1815 = vpop.f32.mrb[0].mxu0
  %1816 = vmatprep.mubr.bf16.mxu0 %v1226
  %1817 = vmatmul.mubr.bf16.gmra.mrb[0].mxu0 %v1225
  %v1818 = vpop.f32.mrb[0].mxu0
  %v1819 = vadd.f32 %v1530, %v1818
  %v1820 = vpop.f32.mrb[0].mxu0
  %v1821 = vpop.f32.mrb[0].mxu0
  %v1822 = vadd.f32 %v1533, %v1821
  %v1823 = vpop.f32.mrb[0].mxu0
  %1824 = vmatprep.mubr.bf16.mxu0 %v1230
  %1825 = vmatmul.mubr.bf16.gmra.mrb[0].mxu0 %v1229
  %v1826 = vpop.f32.mrb[0].mxu0
  %v1827 = vadd.f32 %v1538, %v1826
  %v1828 = vpop.f32.mrb[0].mxu0
  %v1829 = vpop.f32.mrb[0].mxu0
  %v1830 = vadd.f32 %v1541, %v1829
  %v1831 = vpop.f32.mrb[0].mxu0
  %1832 = vmatprep.mubr.bf16.mxu0 %v1234
  %1833 = vmatmul.mubr.bf16.gmra.mrb[0].mxu0 %v1233
  %v1834 = vpop.f32.mrb[0].mxu0
  %v1835 = vadd.f32 %v1546, %v1834
  %v1836 = vpop.f32.mrb[0].mxu0
  %v1837 = vpop.f32.mrb[0].mxu0
  %v1838 = vadd.f32 %v1549, %v1837
  %v1839 = vpop.f32.mrb[0].mxu0
  %1840 = vmatprep.mubr.bf16.mxu0 %v1238
  %1841 = vmatmul.mubr.bf16.gmra.mrb[0].mxu0 %v1237
  %v1842 = vpop.f32.mrb[0].mxu0
  %v1843 = vadd.f32 %v1554, %v1842
  %v1844 = vpop.f32.mrb[0].mxu0
  %v1845 = vpop.f32.mrb[0].mxu0
  %v1846 = vadd.f32 %v1557, %v1845
  %v1847 = vpop.f32.mrb[0].mxu0
  %1848 = vmatprep.mubr.bf16.mxu0 %v1242
  %1849 = vmatmul.mubr.bf16.gmra.mrb[0].mxu0 %v1241
  %v1850 = vpop.f32.mrb[0].mxu0
  %v1851 = vadd.f32 %v1562, %v1850
  %v1852 = vpop.f32.mrb[0].mxu0
  %v1853 = vpop.f32.mrb[0].mxu0
  %v1854 = vadd.f32 %v1565, %v1853
  %v1855 = vpop.f32.mrb[0].mxu0
  %1856 = vmatprep.mubr.bf16.mxu0 %v1246
  %1857 = vmatmul.mubr.bf16.gmra.mrb[0].mxu0 %v1245
  %v1858 = vpop.f32.mrb[0].mxu0
  %v1859 = vadd.f32 %v1570, %v1858
  %v1860 = vpop.f32.mrb[0].mxu0
  %v1861 = vpop.f32.mrb[0].mxu0
  %v1862 = vadd.f32 %v1573, %v1861
  %v1863 = vpop.f32.mrb[0].mxu0
  %1864 = vmatprep.mubr.bf16.mxu0 %v1250
  %1865 = vmatmul.mubr.bf16.gmra.mrb[0].mxu0 %v1249
  %v1866 = vpop.f32.mrb[0].mxu0
  %v1867 = vadd.f32 %v1578, %v1866
  %v1868 = vpop.f32.mrb[0].mxu0
  %v1869 = vpop.f32.mrb[0].mxu0
  %v1870 = vadd.f32 %v1581, %v1869
  %v1871 = vpop.f32.mrb[0].mxu0
  %1872 = vmatprep.mubr.bf16.mxu0 %v1254
  %1873 = vmatmul.mubr.bf16.gmra.mrb[0].mxu0 %v1253
  %v1874 = vpop.f32.mrb[0].mxu0
  %v1875 = vadd.f32 %v1586, %v1874
  %v1876 = vpop.f32.mrb[0].mxu0
  %v1877 = vpop.f32.mrb[0].mxu0
  %v1878 = vadd.f32 %v1589, %v1877
  %v1879 = vpop.f32.mrb[0].mxu0
  %1880 = vmatprep.mubr.bf16.mxu0 %v1258
  %1881 = vmatmul.mubr.bf16.gmra.mrb[0].mxu0 %v1257
  %v1882 = vpop.f32.mrb[0].mxu0
  %v1883 = vadd.f32 %v1594, %v1882
  %v1884 = vpop.f32.mrb[0].mxu0
  %v1885 = vpop.f32.mrb[0].mxu0
  %v1886 = vadd.f32 %v1597, %v1885
  %v1887 = vpop.f32.mrb[0].mxu0
  %1888 = vmatprep.mubr.bf16.mxu0 %v1262
  %1889 = vmatmul.mubr.bf16.gmra.mrb[0].mxu0 %v1261
  %v1890 = vpop.f32.mrb[0].mxu0
  %v1891 = vadd.f32 %v1602, %v1890
  %v1892 = vpop.f32.mrb[0].mxu0
  %v1893 = vpop.f32.mrb[0].mxu0
  %v1894 = vadd.f32 %v1605, %v1893
  %v1895 = vpop.f32.mrb[0].mxu0
  %1896 = vmatprep.mubr.bf16.mxu0 %v1266
  %1897 = vmatmul.mubr.bf16.gmra.mrb[0].mxu0 %v1265
  %v1898 = vpop.f32.mrb[0].mxu0
  %v1899 = vadd.f32 %v1610, %v1898
  %v1900 = vpop.f32.mrb[0].mxu0
  %v1901 = vpop.f32.mrb[0].mxu0
  %v1902 = vadd.f32 %v1613, %v1901
  %v1903 = vpop.f32.mrb[0].mxu0
  %1904 = vmatprep.mubr.bf16.mxu0 %v1270
  %1905 = vmatmul.mubr.bf16.gmra.mrb[0].mxu0 %v1269
  %v1906 = vpop.f32.mrb[0].mxu0
  %v1907 = vadd.f32 %v1618, %v1906
  %v1908 = vpop.f32.mrb[0].mxu0
  %v1909 = vpop.f32.mrb[0].mxu0
  %v1910 = vadd.f32 %v1621, %v1909
  %v1911 = vpop.f32.mrb[0].mxu0
  %1912 = vmatprep.mubr.bf16.mxu0 %v1274
  %1913 = vmatmul.mubr.bf16.gmra.mrb[0].mxu0 %v1273
  %v1914 = vpop.f32.mrb[0].mxu0
  %v1915 = vadd.f32 %v1626, %v1914
  %v1916 = vpop.f32.mrb[0].mxu0
  %v1917 = vpop.f32.mrb[0].mxu0
  %v1918 = vadd.f32 %v1629, %v1917
  %v1919 = vpop.f32.mrb[0].mxu0
  %1920 = vmatprep.mubr.bf16.mxu0 %v1278
  %1921 = vmatmul.mubr.bf16.gmra.mrb[0].mxu0 %v1277
  %v1922 = vpop.f32.mrb[0].mxu0
  %v1923 = vadd.f32 %v1634, %v1922
  %v1924 = vpop.f32.mrb[0].mxu0
  %v1925 = vpop.f32.mrb[0].mxu0
  %v1926 = vadd.f32 %v1637, %v1925
  %v1927 = vpop.f32.mrb[0].mxu0
  %1928 = vmatprep.mubr.bf16.mxu0 %v1282
  %1929 = vmatmul.mubr.bf16.gmra.mrb[0].mxu0 %v1281
  %v1930 = vpop.f32.mrb[0].mxu0
  %v1931 = vadd.f32 %v1642, %v1930
  %v1932 = vpop.f32.mrb[0].mxu0
  %v1933 = vpop.f32.mrb[0].mxu0
  %v1934 = vadd.f32 %v1645, %v1933
  %v1935 = vpop.f32.mrb[0].mxu0
  %1936 = vmatprep.mubr.bf16.mxu0 %v1286
  %1937 = vmatmul.mubr.bf16.gmra.mrb[0].mxu0 %v1285
  %v1938 = vpop.f32.mrb[0].mxu0
  %v1939 = vadd.f32 %v1650, %v1938
  %v1940 = vpop.f32.mrb[0].mxu0
  %v1941 = vpop.f32.mrb[0].mxu0
  %v1942 = vadd.f32 %v1653, %v1941
  %v1943 = vpop.f32.mrb[0].mxu0
  %1944 = vmatprep.mubr.bf16.mxu0 %v1290
  %1945 = vmatmul.mubr.bf16.gmra.mrb[0].mxu0 %v1289
  %v1946 = vpop.f32.mrb[0].mxu0
  %v1947 = vadd.f32 %v1658, %v1946
  %v1948 = vpop.f32.mrb[0].mxu0
  %v1949 = vpop.f32.mrb[0].mxu0
  %v1950 = vadd.f32 %v1661, %v1949
  %v1951 = vpop.f32.mrb[0].mxu0
  %1952 = vmatprep.mubr.bf16.mxu0 %v1294
  %1953 = vmatmul.mubr.bf16.gmra.mrb[0].mxu0 %v1293
  %v1954 = vpop.f32.mrb[0].mxu0
  %v1955 = vadd.f32 %v1666, %v1954
  %v1956 = vpop.f32.mrb[0].mxu0
  %v1957 = vpop.f32.mrb[0].mxu0
  %v1958 = vadd.f32 %v1669, %v1957
  %v1959 = vpop.f32.mrb[0].mxu0
  %1960 = vmatprep.mubr.bf16.mxu0 %v1298
  %1961 = vmatmul.mubr.bf16.gmra.mrb[0].mxu0 %v1297
  %v1962 = vpop.f32.mrb[0].mxu0
  %v1963 = vadd.f32 %v1674, %v1962
  %v1964 = vpop.f32.mrb[0].mxu0
  %v1965 = vpop.f32.mrb[0].mxu0
  %v1966 = vadd.f32 %v1677, %v1965
  %v1967 = vpop.f32.mrb[0].mxu0
  %1968 = vmatprep.mubr.bf16.mxu0 %v1302
  %1969 = vmatmul.mubr.bf16.gmra.mrb[0].mxu0 %v1301
  %v1970 = vpop.f32.mrb[0].mxu0
  %v1971 = vadd.f32 %v1682, %v1970
  %v1972 = vpop.f32.mrb[0].mxu0
  %v1973 = vpop.f32.mrb[0].mxu0
  %v1974 = vadd.f32 %v1685, %v1973
  %v1975 = vpop.f32.mrb[0].mxu0
  %1976 = vmatprep.mubr.bf16.mxu0 %v1306
  %1977 = vmatmul.mubr.bf16.gmra.mrb[0].mxu0 %v1305
  %v1978 = vpop.f32.mrb[0].mxu0
  %v1979 = vadd.f32 %v1690, %v1978
  %v1980 = vpop.f32.mrb[0].mxu0
  %v1981 = vpop.f32.mrb[0].mxu0
  %v1982 = vadd.f32 %v1693, %v1981
  %v1983 = vpop.f32.mrb[0].mxu0
  %1984 = vmatprep.mubr.bf16.mxu0 %v1310
  %1985 = vmatmul.mubr.bf16.gmra.mrb[0].mxu0 %v1309
  %v1986 = vpop.f32.mrb[0].mxu0
  %v1987 = vadd.f32 %v1698, %v1986
  %v1988 = vpop.f32.mrb[0].mxu0
  %v1989 = vpop.f32.mrb[0].mxu0
  %v1990 = vadd.f32 %v1701, %v1989
  %v1991 = vpop.f32.mrb[0].mxu0
  %1992 = vmatprep.mubr.bf16.mxu0 %v1314
  %1993 = vmatmul.mubr.bf16.gmra.mrb[0].mxu0 %v1313
  %v1994 = vpop.f32.mrb[0].mxu0
  %v1995 = vadd.f32 %v1706, %v1994
  %v1996 = vpop.f32.mrb[0].mxu0
  %v1997 = vpop.f32.mrb[0].mxu0
  %v1998 = vadd.f32 %v1709, %v1997
  %v1999 = vpop.f32.mrb[0].mxu0
  %2000 = vmatprep.mubr.bf16.mxu0 %v1318
  %2001 = vmatmul.mubr.bf16.gmra.mrb[0].mxu0 %v1317
  %v2002 = vpop.f32.mrb[0].mxu0
  %v2003 = vadd.f32 %v1714, %v2002
  %v2004 = vpop.f32.mrb[0].mxu0
  %v2005 = vpop.f32.mrb[0].mxu0
  %v2006 = vadd.f32 %v1717, %v2005
  %v2007 = vpop.f32.mrb[0].mxu0
  %2008 = vmatprep.mubr.bf16.mxu0 %v1322
  %2009 = vmatmul.mubr.bf16.gmra.mrb[0].mxu0 %v1321
  %v2010 = vpop.f32.mrb[0].mxu0
  %v2011 = vadd.f32 %v1722, %v2010
  %v2012 = vpop.f32.mrb[0].mxu0
  %v2013 = vpop.f32.mrb[0].mxu0
  %v2014 = vadd.f32 %v1725, %v2013
  %v2015 = vpop.f32.mrb[0].mxu0
  %2016 = vmatprep.mubr.bf16.mxu0 %v1326
  %2017 = vmatmul.mubr.bf16.gmra.mrb[0].mxu0 %v1325
  %v2018 = vpop.f32.mrb[0].mxu0
  %v2019 = vadd.f32 %v1730, %v2018
  %v2020 = vpop.f32.mrb[0].mxu0
  %v2021 = vpop.f32.mrb[0].mxu0
  %v2022 = vadd.f32 %v1733, %v2021
  %v2023 = vpop.f32.mrb[0].mxu0
  %2024 = vmatprep.mubr.bf16.mxu0 %v1330
  %2025 = vmatmul.mubr.bf16.gmra.mrb[0].mxu0 %v1329
  %v2026 = vpop.f32.mrb[0].mxu0
  %v2027 = vadd.f32 %v1738, %v2026
  %v2028 = vpop.f32.mrb[0].mxu0
  %v2029 = vpop.f32.mrb[0].mxu0
  %v2030 = vadd.f32 %v1741, %v2029
  %v2031 = vpop.f32.mrb[0].mxu0
  %2032 = vmatprep.mubr.bf16.mxu0 %v1334
  %2033 = vmatmul.mubr.bf16.gmra.mrb[0].mxu0 %v1333
  %v2034 = vpop.f32.mrb[0].mxu0
  %v2035 = vadd.f32 %v1746, %v2034
  %v2036 = vpop.f32.mrb[0].mxu0
  %v2037 = vpop.f32.mrb[0].mxu0
  %v2038 = vadd.f32 %v1749, %v2037
  %v2039 = vpop.f32.mrb[0].mxu0
  %2040 = vdwg.mxu0
  %v2041 = vmax.f32 %v1787, 0.0
  %v2042 = vmax.f32 %v1790, 0.0
  %v2043 = vmax.f32 %v1795, 0.0
  %v2044 = vmax.f32 %v1798, 0.0
  %v2045 = vmax.f32 %v1803, 0.0
  %v2046 = vmax.f32 %v1806, 0.0
  %v2047 = vmax.f32 %v1811, 0.0
  %v2048 = vmax.f32 %v1814, 0.0
  %v2049 = vmax.f32 %v1819, 0.0
  %v2050 = vmax.f32 %v1822, 0.0
  %v2051 = vmax.f32 %v1827, 0.0
  %v2052 = vmax.f32 %v1830, 0.0
  %v2053 = vmax.f32 %v1835, 0.0
  %v2054 = vmax.f32 %v1838, 0.0
  %v2055 = vmax.f32 %v1843, 0.0
  %v2056 = vmax.f32 %v1846, 0.0
  %v2057 = vmax.f32 %v1851, 0.0
  %v2058 = vmax.f32 %v1854, 0.0
  %v2059 = vmax.f32 %v1859, 0.0
  %v2060 = vmax.f32 %v1862, 0.0
  %v2061 = vmax.f32 %v1867, 0.0
  %v2062 = vmax.f32 %v1870, 0.0
  %v2063 = vmax.f32 %v1875, 0.0
  %v2064 = vmax.f32 %v1878, 0.0
  %v2065 = vmax.f32 %v1883, 0.0
  %v2066 = vmax.f32 %v1886, 0.0
  %v2067 = vmax.f32 %v1891, 0.0
  %v2068 = vmax.f32 %v1894, 0.0
  %v2069 = vmax.f32 %v1899, 0.0
  %v2070 = vmax.f32 %v1902, 0.0
  %v2071 = vmax.f32 %v1907, 0.0
  %v2072 = vmax.f32 %v1910, 0.0
  %v2073 = vmax.f32 %v1915, 0.0
  %v2074 = vmax.f32 %v1918, 0.0
  %v2075 = vmax.f32 %v1923, 0.0
  %v2076 = vmax.f32 %v1926, 0.0
  %v2077 = vmax.f32 %v1931, 0.0
  %v2078 = vmax.f32 %v1934, 0.0
  %v2079 = vmax.f32 %v1939, 0.0
  %v2080 = vmax.f32 %v1942, 0.0
  %v2081 = vmax.f32 %v1947, 0.0
  %v2082 = vmax.f32 %v1950, 0.0
  %v2083 = vmax.f32 %v1955, 0.0
  %v2084 = vmax.f32 %v1958, 0.0
  %v2085 = vmax.f32 %v1963, 0.0
  %v2086 = vmax.f32 %v1966, 0.0
  %v2087 = vmax.f32 %v1971, 0.0
  %v2088 = vmax.f32 %v1974, 0.0
  %v2089 = vmax.f32 %v1979, 0.0
  %v2090 = vmax.f32 %v1982, 0.0
  %v2091 = vmax.f32 %v1987, 0.0
  %v2092 = vmax.f32 %v1990, 0.0
  %v2093 = vmax.f32 %v1995, 0.0
  %v2094 = vmax.f32 %v1998, 0.0
  %v2095 = vmax.f32 %v2003, 0.0
  %v2096 = vmax.f32 %v2006, 0.0
  %v2097 = vmax.f32 %v2011, 0.0
  %v2098 = vmax.f32 %v2014, 0.0
  %v2099 = vmax.f32 %v2019, 0.0
  %v2100 = vmax.f32 %v2022, 0.0
  %v2101 = vmax.f32 %v2027, 0.0
  %v2102 = vmax.f32 %v2030, 0.0
  %v2103 = vmax.f32 %v2035, 0.0
  %v2104 = vmax.f32 %v2038, 0.0
  %v2105 = vpack.c.bf16 %v2042, %v2041
  %v2106 = vpack.c.bf16 %v2044, %v2043
  %v2107 = vpack.c.bf16 %v2046, %v2045
  %v2108 = vpack.c.bf16 %v2048, %v2047
  %v2109 = vpack.c.bf16 %v2050, %v2049
  %v2110 = vpack.c.bf16 %v2052, %v2051
  %v2111 = vpack.c.bf16 %v2054, %v2053
  %v2112 = vpack.c.bf16 %v2056, %v2055
  %v2113 = vpack.c.bf16 %v2058, %v2057
  %v2114 = vpack.c.bf16 %v2060, %v2059
  %v2115 = vpack.c.bf16 %v2062, %v2061
  %v2116 = vpack.c.bf16 %v2064, %v2063
  %v2117 = vpack.c.bf16 %v2066, %v2065
  %v2118 = vpack.c.bf16 %v2068, %v2067
  %v2119 = vpack.c.bf16 %v2070, %v2069
  %v2120 = vpack.c.bf16 %v2072, %v2071
  %v2121 = vpack.c.bf16 %v2074, %v2073
  %v2122 = vpack.c.bf16 %v2076, %v2075
  %v2123 = vpack.c.bf16 %v2078, %v2077
  %v2124 = vpack.c.bf16 %v2080, %v2079
  %v2125 = vpack.c.bf16 %v2082, %v2081
  %v2126 = vpack.c.bf16 %v2084, %v2083
  %v2127 = vpack.c.bf16 %v2086, %v2085
  %v2128 = vpack.c.bf16 %v2088, %v2087
  %v2129 = vpack.c.bf16 %v2090, %v2089
  %v2130 = vpack.c.bf16 %v2092, %v2091
  %v2131 = vpack.c.bf16 %v2094, %v2093
  %v2132 = vpack.c.bf16 %v2096, %v2095
  %v2133 = vpack.c.bf16 %v2098, %v2097
  %v2134 = vpack.c.bf16 %v2100, %v2099
  %v2135 = vpack.c.bf16 %v2102, %v2101
  %v2136 = vpack.c.bf16 %v2104, %v2103
  %v2137 = vld [vmem:[%s4] sm:$0xf]
  %v2138 = vld [vmem:[%s4 + $0x4] sm:$0xf]
  %v2139 = vld [vmem:[%s4 + $0x8] sm:$0xf]
  %v2140 = vld [vmem:[%s4 + $0xc] sm:$0xf]
  %v2145 = vunpack.c.l.b16 %v2137
  %v2146 = vunpack.c.l.b16 %v2138
  %v2147 = vunpack.c.l.b16 %v2139
  %v2148 = vunpack.c.l.b16 %v2140
  %v2149 = vpack.c.b16 %v2146, %v2145
  %v2150 = vpack.c.b16 %v2148, %v2147
  %v2154 = vsel %vm398, %v2105, 0
  %v2157 = vsel %vm398, %v2106, 0
  %v2160 = vsel %vm398, %v2107, 0
  %v2163 = vsel %vm398, %v2108, 0
  %v2166 = vsel %vm398, %v2109, 0
  %v2169 = vsel %vm398, %v2110, 0
  %v2172 = vsel %vm398, %v2111, 0
  %v2175 = vsel %vm398, %v2112, 0
  %v2178 = vsel %vm398, %v2113, 0
  %v2181 = vsel %vm398, %v2114, 0
  %v2184 = vsel %vm398, %v2115, 0
  %v2187 = vsel %vm398, %v2116, 0
  %v2190 = vsel %vm398, %v2117, 0
  %v2193 = vsel %vm398, %v2118, 0
  %v2196 = vsel %vm398, %v2119, 0
  %v2199 = vsel %vm398, %v2120, 0
  %v2202 = vsel %vm398, %v2121, 0
  %v2205 = vsel %vm398, %v2122, 0
  %v2208 = vsel %vm398, %v2123, 0
  %v2211 = vsel %vm398, %v2124, 0
  %v2214 = vsel %vm398, %v2125, 0
  %v2217 = vsel %vm398, %v2126, 0
  %v2220 = vsel %vm398, %v2127, 0
  %v2223 = vsel %vm398, %v2128, 0
  %v2226 = vsel %vm398, %v2129, 0
  %v2229 = vsel %vm398, %v2130, 0
  %v2232 = vsel %vm398, %v2131, 0
  %v2235 = vsel %vm398, %v2132, 0
  %v2238 = vsel %vm398, %v2133, 0
  %v2241 = vsel %vm398, %v2134, 0
  %v2244 = vsel %vm398, %v2135, 0
  %v2247 = vsel %vm398, %v2136, 0
  %2249 = vmatprep.subr.bf16.mxu0 0
  %2250 = vmatpush1.bf16.msra.mxu0 %v2149
  %2251 = vmatprep.subr.bf16.mxu0 0
  %2252 = vmatpush1.bf16.msra.mxu0 %v2150
  %2253 = vmatprep.subr.bf16.mxu0 0
  %2254 = vmatpush1.bf16.msra.mxu0 0
  %2255 = vmatprep.subr.bf16.mxu0 0
  %2256 = vmatpush1.bf16.msra.mxu0 0
  %2257 = vmatprep.subr.bf16.mxu0 0
  %2258 = vmatpush1.bf16.msra.mxu0 0
  %2259 = vmatprep.subr.bf16.mxu0 0
  %2260 = vmatpush1.bf16.msra.mxu0 0
  %2261 = vmatprep.subr.bf16.mxu0 0
  %2262 = vmatpush1.bf16.msra.mxu0 0
  %2263 = vmatprep.subr.bf16.mxu0 0
  %2264 = vmatpush1.bf16.msra.mxu0 0
  %2265 = vmatprep.subr.bf16.mxu0 0
  %2266 = vmatpush1.bf16.msra.mxu0 0
  %2267 = vmatprep.subr.bf16.mxu0 0
  %2268 = vmatpush1.bf16.msra.mxu0 0
  %2269 = vmatprep.subr.bf16.mxu0 0
  %2270 = vmatpush1.bf16.msra.mxu0 0
  %2271 = vmatprep.subr.bf16.mxu0 0
  %2272 = vmatpush1.bf16.msra.mxu0 0
  %2273 = vmatprep.subr.bf16.mxu0 0
  %2274 = vmatpush1.bf16.msra.mxu0 0
  %2275 = vmatprep.subr.bf16.mxu0 0
  %2276 = vmatpush1.bf16.msra.mxu0 0
  %2277 = vmatprep.subr.bf16.mxu0 0
  %2278 = vmatpush1.bf16.msra.mxu0 0
  %2279 = vmatprep.subr.bf16.mxu0 0
  %2280 = vmatpush1.bf16.msra.mxu0 0
  %2281 = vmatprep.mubr.bf16.mxu0 0
  %2282 = vmatmul.mubr.bf16.gmra.mrb[0].mxu0 %v2154
  %v2283 = vpop.f32.mrb[0].mxu0
  %v2284 = vadd.f32 0.0, %v2283
  %v2285 = vpop.f32.mrb[0].mxu0
  %v2286 = vpop.f32.mrb[0].mxu0
  %v2287 = vadd.f32 0.0, %v2286
  %v2288 = vpop.f32.mrb[0].mxu0
  %2289 = vmatprep.mubr.bf16.mxu0 0
  %2290 = vmatmul.mubr.bf16.gmra.mrb[0].mxu0 %v2157
  %v2291 = vpop.f32.mrb[0].mxu0
  %v2292 = vadd.f32 0.0, %v2291
  %v2293 = vpop.f32.mrb[0].mxu0
  %v2294 = vpop.f32.mrb[0].mxu0
  %v2295 = vadd.f32 0.0, %v2294
  %v2296 = vpop.f32.mrb[0].mxu0
  %2297 = vmatprep.mubr.bf16.mxu0 0
  %2298 = vmatmul.mubr.bf16.gmra.mrb[0].mxu0 %v2160
  %v2299 = vpop.f32.mrb[0].mxu0
  %v2300 = vadd.f32 0.0, %v2299
  %v2301 = vpop.f32.mrb[0].mxu0
  %v2302 = vpop.f32.mrb[0].mxu0
  %v2303 = vadd.f32 0.0, %v2302
  %v2304 = vpop.f32.mrb[0].mxu0
  %2305 = vmatprep.mubr.bf16.mxu0 0
  %2306 = vmatmul.mubr.bf16.gmra.mrb[0].mxu0 %v2163
  %v2307 = vpop.f32.mrb[0].mxu0
  %v2308 = vadd.f32 0.0, %v2307
  %v2309 = vpop.f32.mrb[0].mxu0
  %v2310 = vpop.f32.mrb[0].mxu0
  %v2311 = vadd.f32 0.0, %v2310
  %v2312 = vpop.f32.mrb[0].mxu0
  %2313 = vmatprep.mubr.bf16.mxu0 0
  %2314 = vmatmul.mubr.bf16.gmra.mrb[0].mxu0 %v2166
  %v2315 = vpop.f32.mrb[0].mxu0
  %v2316 = vadd.f32 0.0, %v2315
  %v2317 = vpop.f32.mrb[0].mxu0
  %v2318 = vpop.f32.mrb[0].mxu0
  %v2319 = vadd.f32 0.0, %v2318
  %v2320 = vpop.f32.mrb[0].mxu0
  %2321 = vmatprep.mubr.bf16.mxu0 0
  %2322 = vmatmul.mubr.bf16.gmra.mrb[0].mxu0 %v2169
  %v2323 = vpop.f32.mrb[0].mxu0
  %v2324 = vadd.f32 0.0, %v2323
  %v2325 = vpop.f32.mrb[0].mxu0
  %v2326 = vpop.f32.mrb[0].mxu0
  %v2327 = vadd.f32 0.0, %v2326
  %v2328 = vpop.f32.mrb[0].mxu0
  %2329 = vmatprep.mubr.bf16.mxu0 0
  %2330 = vmatmul.mubr.bf16.gmra.mrb[0].mxu0 %v2172
  %v2331 = vpop.f32.mrb[0].mxu0
  %v2332 = vadd.f32 0.0, %v2331
  %v2333 = vpop.f32.mrb[0].mxu0
  %v2334 = vpop.f32.mrb[0].mxu0
  %v2335 = vadd.f32 0.0, %v2334
  %v2336 = vpop.f32.mrb[0].mxu0
  %2337 = vmatprep.mubr.bf16.mxu0 0
  %2338 = vmatmul.mubr.bf16.gmra.mrb[0].mxu0 %v2175
  %v2339 = vpop.f32.mrb[0].mxu0
  %v2340 = vadd.f32 0.0, %v2339
  %v2341 = vpop.f32.mrb[0].mxu0
  %v2342 = vpop.f32.mrb[0].mxu0
  %v2343 = vadd.f32 0.0, %v2342
  %v2344 = vpop.f32.mrb[0].mxu0
  %2345 = vmatprep.mubr.bf16.mxu0 0
  %2346 = vmatmul.mubr.bf16.gmra.mrb[0].mxu0 %v2178
  %v2347 = vpop.f32.mrb[0].mxu0
  %v2348 = vadd.f32 0.0, %v2347
  %v2349 = vpop.f32.mrb[0].mxu0
  %v2350 = vpop.f32.mrb[0].mxu0
  %v2351 = vadd.f32 0.0, %v2350
  %v2352 = vpop.f32.mrb[0].mxu0
  %2353 = vmatprep.mubr.bf16.mxu0 0
  %2354 = vmatmul.mubr.bf16.gmra.mrb[0].mxu0 %v2181
  %v2355 = vpop.f32.mrb[0].mxu0
  %v2356 = vadd.f32 0.0, %v2355
  %v2357 = vpop.f32.mrb[0].mxu0
  %v2358 = vpop.f32.mrb[0].mxu0
  %v2359 = vadd.f32 0.0, %v2358
  %v2360 = vpop.f32.mrb[0].mxu0
  %2361 = vmatprep.mubr.bf16.mxu0 0
  %2362 = vmatmul.mubr.bf16.gmra.mrb[0].mxu0 %v2184
  %v2363 = vpop.f32.mrb[0].mxu0
  %v2364 = vadd.f32 0.0, %v2363
  %v2365 = vpop.f32.mrb[0].mxu0
  %v2366 = vpop.f32.mrb[0].mxu0
  %v2367 = vadd.f32 0.0, %v2366
  %v2368 = vpop.f32.mrb[0].mxu0
  %2369 = vmatprep.mubr.bf16.mxu0 0
  %2370 = vmatmul.mubr.bf16.gmra.mrb[0].mxu0 %v2187
  %v2371 = vpop.f32.mrb[0].mxu0
  %v2372 = vadd.f32 0.0, %v2371
  %v2373 = vpop.f32.mrb[0].mxu0
  %v2374 = vpop.f32.mrb[0].mxu0
  %v2375 = vadd.f32 0.0, %v2374
  %v2376 = vpop.f32.mrb[0].mxu0
  %2377 = vmatprep.mubr.bf16.mxu0 0
  %2378 = vmatmul.mubr.bf16.gmra.mrb[0].mxu0 %v2190
  %v2379 = vpop.f32.mrb[0].mxu0
  %v2380 = vadd.f32 0.0, %v2379
  %v2381 = vpop.f32.mrb[0].mxu0
  %v2382 = vpop.f32.mrb[0].mxu0
  %v2383 = vadd.f32 0.0, %v2382
  %v2384 = vpop.f32.mrb[0].mxu0
  %2385 = vmatprep.mubr.bf16.mxu0 0
  %2386 = vmatmul.mubr.bf16.gmra.mrb[0].mxu0 %v2193
  %v2387 = vpop.f32.mrb[0].mxu0
  %v2388 = vadd.f32 0.0, %v2387
  %v2389 = vpop.f32.mrb[0].mxu0
  %v2390 = vpop.f32.mrb[0].mxu0
  %v2391 = vadd.f32 0.0, %v2390
  %v2392 = vpop.f32.mrb[0].mxu0
  %2393 = vmatprep.mubr.bf16.mxu0 0
  %2394 = vmatmul.mubr.bf16.gmra.mrb[0].mxu0 %v2196
  %v2395 = vpop.f32.mrb[0].mxu0
  %v2396 = vadd.f32 0.0, %v2395
  %v2397 = vpop.f32.mrb[0].mxu0
  %v2398 = vpop.f32.mrb[0].mxu0
  %v2399 = vadd.f32 0.0, %v2398
  %v2400 = vpop.f32.mrb[0].mxu0
  %2401 = vmatprep.mubr.bf16.mxu0 0
  %2402 = vmatmul.mubr.bf16.gmra.mrb[0].mxu0 %v2199
  %v2403 = vpop.f32.mrb[0].mxu0
  %v2404 = vadd.f32 0.0, %v2403
  %v2405 = vpop.f32.mrb[0].mxu0
  %v2406 = vpop.f32.mrb[0].mxu0
  %v2407 = vadd.f32 0.0, %v2406
  %v2408 = vpop.f32.mrb[0].mxu0
  %2409 = vmatprep.mubr.bf16.mxu0 0
  %2410 = vmatmul.mubr.bf16.gmra.mrb[0].mxu0 %v2202
  %v2411 = vpop.f32.mrb[0].mxu0
  %v2412 = vadd.f32 0.0, %v2411
  %v2413 = vpop.f32.mrb[0].mxu0
  %v2414 = vpop.f32.mrb[0].mxu0
  %v2415 = vadd.f32 0.0, %v2414
  %v2416 = vpop.f32.mrb[0].mxu0
  %2417 = vmatprep.mubr.bf16.mxu0 0
  %2418 = vmatmul.mubr.bf16.gmra.mrb[0].mxu0 %v2205
  %v2419 = vpop.f32.mrb[0].mxu0
  %v2420 = vadd.f32 0.0, %v2419
  %v2421 = vpop.f32.mrb[0].mxu0
  %v2422 = vpop.f32.mrb[0].mxu0
  %v2423 = vadd.f32 0.0, %v2422
  %v2424 = vpop.f32.mrb[0].mxu0
  %2425 = vmatprep.mubr.bf16.mxu0 0
  %2426 = vmatmul.mubr.bf16.gmra.mrb[0].mxu0 %v2208
  %v2427 = vpop.f32.mrb[0].mxu0
  %v2428 = vadd.f32 0.0, %v2427
  %v2429 = vpop.f32.mrb[0].mxu0
  %v2430 = vpop.f32.mrb[0].mxu0
  %v2431 = vadd.f32 0.0, %v2430
  %v2432 = vpop.f32.mrb[0].mxu0
  %2433 = vmatprep.mubr.bf16.mxu0 0
  %2434 = vmatmul.mubr.bf16.gmra.mrb[0].mxu0 %v2211
  %v2435 = vpop.f32.mrb[0].mxu0
  %v2436 = vadd.f32 0.0, %v2435
  %v2437 = vpop.f32.mrb[0].mxu0
  %v2438 = vpop.f32.mrb[0].mxu0
  %v2439 = vadd.f32 0.0, %v2438
  %v2440 = vpop.f32.mrb[0].mxu0
  %2441 = vmatprep.mubr.bf16.mxu0 0
  %2442 = vmatmul.mubr.bf16.gmra.mrb[0].mxu0 %v2214
  %v2443 = vpop.f32.mrb[0].mxu0
  %v2444 = vadd.f32 0.0, %v2443
  %v2445 = vpop.f32.mrb[0].mxu0
  %v2446 = vpop.f32.mrb[0].mxu0
  %v2447 = vadd.f32 0.0, %v2446
  %v2448 = vpop.f32.mrb[0].mxu0
  %2449 = vmatprep.mubr.bf16.mxu0 0
  %2450 = vmatmul.mubr.bf16.gmra.mrb[0].mxu0 %v2217
  %v2451 = vpop.f32.mrb[0].mxu0
  %v2452 = vadd.f32 0.0, %v2451
  %v2453 = vpop.f32.mrb[0].mxu0
  %v2454 = vpop.f32.mrb[0].mxu0
  %v2455 = vadd.f32 0.0, %v2454
  %v2456 = vpop.f32.mrb[0].mxu0
  %2457 = vmatprep.mubr.bf16.mxu0 0
  %2458 = vmatmul.mubr.bf16.gmra.mrb[0].mxu0 %v2220
  %v2459 = vpop.f32.mrb[0].mxu0
  %v2460 = vadd.f32 0.0, %v2459
  %v2461 = vpop.f32.mrb[0].mxu0
  %v2462 = vpop.f32.mrb[0].mxu0
  %v2463 = vadd.f32 0.0, %v2462
  %v2464 = vpop.f32.mrb[0].mxu0
  %2465 = vmatprep.mubr.bf16.mxu0 0
  %2466 = vmatmul.mubr.bf16.gmra.mrb[0].mxu0 %v2223
  %v2467 = vpop.f32.mrb[0].mxu0
  %v2468 = vadd.f32 0.0, %v2467
  %v2469 = vpop.f32.mrb[0].mxu0
  %v2470 = vpop.f32.mrb[0].mxu0
  %v2471 = vadd.f32 0.0, %v2470
  %v2472 = vpop.f32.mrb[0].mxu0
  %2473 = vmatprep.mubr.bf16.mxu0 0
  %2474 = vmatmul.mubr.bf16.gmra.mrb[0].mxu0 %v2226
  %v2475 = vpop.f32.mrb[0].mxu0
  %v2476 = vadd.f32 0.0, %v2475
  %v2477 = vpop.f32.mrb[0].mxu0
  %v2478 = vpop.f32.mrb[0].mxu0
  %v2479 = vadd.f32 0.0, %v2478
  %v2480 = vpop.f32.mrb[0].mxu0
  %2481 = vmatprep.mubr.bf16.mxu0 0
  %2482 = vmatmul.mubr.bf16.gmra.mrb[0].mxu0 %v2229
  %v2483 = vpop.f32.mrb[0].mxu0
  %v2484 = vadd.f32 0.0, %v2483
  %v2485 = vpop.f32.mrb[0].mxu0
  %v2486 = vpop.f32.mrb[0].mxu0
  %v2487 = vadd.f32 0.0, %v2486
  %v2488 = vpop.f32.mrb[0].mxu0
  %2489 = vmatprep.mubr.bf16.mxu0 0
  %2490 = vmatmul.mubr.bf16.gmra.mrb[0].mxu0 %v2232
  %v2491 = vpop.f32.mrb[0].mxu0
  %v2492 = vadd.f32 0.0, %v2491
  %v2493 = vpop.f32.mrb[0].mxu0
  %v2494 = vpop.f32.mrb[0].mxu0
  %v2495 = vadd.f32 0.0, %v2494
  %v2496 = vpop.f32.mrb[0].mxu0
  %2497 = vmatprep.mubr.bf16.mxu0 0
  %2498 = vmatmul.mubr.bf16.gmra.mrb[0].mxu0 %v2235
  %v2499 = vpop.f32.mrb[0].mxu0
  %v2500 = vadd.f32 0.0, %v2499
  %v2501 = vpop.f32.mrb[0].mxu0
  %v2502 = vpop.f32.mrb[0].mxu0
  %v2503 = vadd.f32 0.0, %v2502
  %v2504 = vpop.f32.mrb[0].mxu0
  %2505 = vmatprep.mubr.bf16.mxu0 0
  %2506 = vmatmul.mubr.bf16.gmra.mrb[0].mxu0 %v2238
  %v2507 = vpop.f32.mrb[0].mxu0
  %v2508 = vadd.f32 0.0, %v2507
  %v2509 = vpop.f32.mrb[0].mxu0
  %v2510 = vpop.f32.mrb[0].mxu0
  %v2511 = vadd.f32 0.0, %v2510
  %v2512 = vpop.f32.mrb[0].mxu0
  %2513 = vmatprep.mubr.bf16.mxu0 0
  %2514 = vmatmul.mubr.bf16.gmra.mrb[0].mxu0 %v2241
  %v2515 = vpop.f32.mrb[0].mxu0
  %v2516 = vadd.f32 0.0, %v2515
  %v2517 = vpop.f32.mrb[0].mxu0
  %v2518 = vpop.f32.mrb[0].mxu0
  %v2519 = vadd.f32 0.0, %v2518
  %v2520 = vpop.f32.mrb[0].mxu0
  %2521 = vmatprep.mubr.bf16.mxu0 0
  %2522 = vmatmul.mubr.bf16.gmra.mrb[0].mxu0 %v2244
  %v2523 = vpop.f32.mrb[0].mxu0
  %v2524 = vadd.f32 0.0, %v2523
  %v2525 = vpop.f32.mrb[0].mxu0
  %v2526 = vpop.f32.mrb[0].mxu0
  %v2527 = vadd.f32 0.0, %v2526
  %v2528 = vpop.f32.mrb[0].mxu0
  %2529 = vmatprep.mubr.bf16.mxu0 0
  %2530 = vmatmul.mubr.bf16.gmra.mrb[0].mxu0 %v2247
  %v2531 = vpop.f32.mrb[0].mxu0
  %v2532 = vadd.f32 0.0, %v2531
  %v2533 = vpop.f32.mrb[0].mxu0
  %v2534 = vpop.f32.mrb[0].mxu0
  %v2535 = vadd.f32 0.0, %v2534
  %v2536 = vpop.f32.mrb[0].mxu0
  %2537 = vdwg.mxu0
  %v2538 = vpack.c.bf16 %v2287, %v2284
  %v2539 = vpack.c.bf16 %v2295, %v2292
  %v2540 = vpack.c.bf16 %v2303, %v2300
  %v2541 = vpack.c.bf16 %v2311, %v2308
  %v2542 = vpack.c.bf16 %v2319, %v2316
  %v2543 = vpack.c.bf16 %v2327, %v2324
  %v2544 = vpack.c.bf16 %v2335, %v2332
  %v2545 = vpack.c.bf16 %v2343, %v2340
  %v2546 = vpack.c.bf16 %v2351, %v2348
  %v2547 = vpack.c.bf16 %v2359, %v2356
  %v2548 = vpack.c.bf16 %v2367, %v2364
  %v2549 = vpack.c.bf16 %v2375, %v2372
  %v2550 = vpack.c.bf16 %v2383, %v2380
  %v2551 = vpack.c.bf16 %v2391, %v2388
  %v2552 = vpack.c.bf16 %v2399, %v2396
  %v2553 = vpack.c.bf16 %v2407, %v2404
  %v2554 = vpack.c.bf16 %v2415, %v2412
  %v2555 = vpack.c.bf16 %v2423, %v2420
  %v2556 = vpack.c.bf16 %v2431, %v2428
  %v2557 = vpack.c.bf16 %v2439, %v2436
  %v2558 = vpack.c.bf16 %v2447, %v2444
  %v2559 = vpack.c.bf16 %v2455, %v2452
  %v2560 = vpack.c.bf16 %v2463, %v2460
  %v2561 = vpack.c.bf16 %v2471, %v2468
  %v2562 = vpack.c.bf16 %v2479, %v2476
  %v2563 = vpack.c.bf16 %v2487, %v2484
  %v2564 = vpack.c.bf16 %v2495, %v2492
  %v2565 = vpack.c.bf16 %v2503, %v2500
  %v2566 = vpack.c.bf16 %v2511, %v2508
  %v2567 = vpack.c.bf16 %v2519, %v2516
  %v2568 = vpack.c.bf16 %v2527, %v2524
  %v2569 = vpack.c.bf16 %v2535, %v2532
  %v2570 = vld [vmem:[%s5] sm:$0x1]
  %v2572 = vlaneseq
  %v2573 = vshrl.u32 %v2572, 7
  %v2574 = vsub.s32 0, %v2573
  %v2575 = vrot.slane %v2570, %v2574
  %2577 = vmatprep.subr.bf16.mxu0 0
  %2578 = vmatpush1.bf16.msra.mxu0 %v2538
  %2579 = vmatprep.subr.bf16.mxu0 0
  %2580 = vmatpush1.bf16.msra.mxu0 %v2539
  %2581 = vmatprep.subr.bf16.mxu0 0
  %2582 = vmatpush1.bf16.msra.mxu0 %v2540
  %2583 = vmatprep.subr.bf16.mxu0 0
  %2584 = vmatpush1.bf16.msra.mxu0 %v2541
  %2585 = vmatprep.subr.bf16.mxu0 0
  %2586 = vmatpush1.bf16.msra.mxu0 %v2542
  %2587 = vmatprep.subr.bf16.mxu0 0
  %2588 = vmatpush1.bf16.msra.mxu0 %v2543
  %2589 = vmatprep.subr.bf16.mxu0 0
  %2590 = vmatpush1.bf16.msra.mxu0 %v2544
  %2591 = vmatprep.subr.bf16.mxu0 0
  %2592 = vmatpush1.bf16.msra.mxu0 %v2545
  %2593 = vmatprep.subr.bf16.mxu0 0
  %2594 = vmatpush1.bf16.msra.mxu0 %v2546
  %2595 = vmatprep.subr.bf16.mxu0 0
  %2596 = vmatpush1.bf16.msra.mxu0 %v2547
  %2597 = vmatprep.subr.bf16.mxu0 0
  %2598 = vmatpush1.bf16.msra.mxu0 %v2548
  %2599 = vmatprep.subr.bf16.mxu0 0
  %2600 = vmatpush1.bf16.msra.mxu0 %v2549
  %2601 = vmatprep.subr.bf16.mxu0 0
  %2602 = vmatpush1.bf16.msra.mxu0 %v2550
  %2603 = vmatprep.subr.bf16.mxu0 0
  %2604 = vmatpush1.bf16.msra.mxu0 %v2551
  %2605 = vmatprep.subr.bf16.mxu0 0
  %2606 = vmatpush1.bf16.msra.mxu0 %v2552
  %2607 = vmatprep.subr.bf16.mxu0 0
  %2608 = vmatpush1.bf16.msra.mxu0 %v2553
  %2609 = vmatprep.mubr.bf16.mxu0 %v1208
  %2610 = vmatmul.mubr.bf16.gmra.mrb[0].mxu0 %v1207
  %v2611 = vpop.f32.mrb[0].mxu0
  %v2612 = vadd.f32 %v2575, %v2611
  %v2613 = vpop.f32.mrb[0].mxu0
  %v2614 = vpop.f32.mrb[0].mxu0
  %v2615 = vadd.f32 %v2575, %v2614
  %v2616 = vpop.f32.mrb[0].mxu0
  %2617 = vmatprep.mubr.bf16.mxu0 %v1212
  %2618 = vmatmul.mubr.bf16.gmra.mrb[0].mxu0 %v1211
  %v2619 = vpop.f32.mrb[0].mxu0
  %v2620 = vadd.f32 %v2575, %v2619
  %v2621 = vpop.f32.mrb[0].mxu0
  %v2622 = vpop.f32.mrb[0].mxu0
  %v2623 = vadd.f32 %v2575, %v2622
  %v2624 = vpop.f32.mrb[0].mxu0
  %2625 = vmatprep.mubr.bf16.mxu0 %v1216
  %2626 = vmatmul.mubr.bf16.gmra.mrb[0].mxu0 %v1215
  %v2627 = vpop.f32.mrb[0].mxu0
  %v2628 = vadd.f32 %v2575, %v2627
  %v2629 = vpop.f32.mrb[0].mxu0
  %v2630 = vpop.f32.mrb[0].mxu0
  %v2631 = vadd.f32 %v2575, %v2630
  %v2632 = vpop.f32.mrb[0].mxu0
  %2633 = vmatprep.mubr.bf16.mxu0 %v1220
  %2634 = vmatmul.mubr.bf16.gmra.mrb[0].mxu0 %v1219
  %v2635 = vpop.f32.mrb[0].mxu0
  %v2636 = vadd.f32 %v2575, %v2635
  %v2637 = vpop.f32.mrb[0].mxu0
  %v2638 = vpop.f32.mrb[0].mxu0
  %v2639 = vadd.f32 %v2575, %v2638
  %v2640 = vpop.f32.mrb[0].mxu0
  %2641 = vmatprep.mubr.bf16.mxu0 %v1224
  %2642 = vmatmul.mubr.bf16.gmra.mrb[0].mxu0 %v1223
  %v2643 = vpop.f32.mrb[0].mxu0
  %v2644 = vadd.f32 %v2575, %v2643
  %v2645 = vpop.f32.mrb[0].mxu0
  %v2646 = vpop.f32.mrb[0].mxu0
  %v2647 = vadd.f32 %v2575, %v2646
  %v2648 = vpop.f32.mrb[0].mxu0
  %2649 = vmatprep.mubr.bf16.mxu0 %v1228
  %2650 = vmatmul.mubr.bf16.gmra.mrb[0].mxu0 %v1227
  %v2651 = vpop.f32.mrb[0].mxu0
  %v2652 = vadd.f32 %v2575, %v2651
  %v2653 = vpop.f32.mrb[0].mxu0
  %v2654 = vpop.f32.mrb[0].mxu0
  %v2655 = vadd.f32 %v2575, %v2654
  %v2656 = vpop.f32.mrb[0].mxu0
  %2657 = vmatprep.mubr.bf16.mxu0 %v1232
  %2658 = vmatmul.mubr.bf16.gmra.mrb[0].mxu0 %v1231
  %v2659 = vpop.f32.mrb[0].mxu0
  %v2660 = vadd.f32 %v2575, %v2659
  %v2661 = vpop.f32.mrb[0].mxu0
  %v2662 = vpop.f32.mrb[0].mxu0
  %v2663 = vadd.f32 %v2575, %v2662
  %v2664 = vpop.f32.mrb[0].mxu0
  %2665 = vmatprep.mubr.bf16.mxu0 %v1236
  %2666 = vmatmul.mubr.bf16.gmra.mrb[0].mxu0 %v1235
  %v2667 = vpop.f32.mrb[0].mxu0
  %v2668 = vadd.f32 %v2575, %v2667
  %v2669 = vpop.f32.mrb[0].mxu0
  %v2670 = vpop.f32.mrb[0].mxu0
  %v2671 = vadd.f32 %v2575, %v2670
  %v2672 = vpop.f32.mrb[0].mxu0
  %2673 = vmatprep.mubr.bf16.mxu0 %v1240
  %2674 = vmatmul.mubr.bf16.gmra.mrb[0].mxu0 %v1239
  %v2675 = vpop.f32.mrb[0].mxu0
  %v2676 = vadd.f32 %v2575, %v2675
  %v2677 = vpop.f32.mrb[0].mxu0
  %v2678 = vpop.f32.mrb[0].mxu0
  %v2679 = vadd.f32 %v2575, %v2678
  %v2680 = vpop.f32.mrb[0].mxu0
  %2681 = vmatprep.mubr.bf16.mxu0 %v1244
  %2682 = vmatmul.mubr.bf16.gmra.mrb[0].mxu0 %v1243
  %v2683 = vpop.f32.mrb[0].mxu0
  %v2684 = vadd.f32 %v2575, %v2683
  %v2685 = vpop.f32.mrb[0].mxu0
  %v2686 = vpop.f32.mrb[0].mxu0
  %v2687 = vadd.f32 %v2575, %v2686
  %v2688 = vpop.f32.mrb[0].mxu0
  %2689 = vmatprep.mubr.bf16.mxu0 %v1248
  %2690 = vmatmul.mubr.bf16.gmra.mrb[0].mxu0 %v1247
  %v2691 = vpop.f32.mrb[0].mxu0
  %v2692 = vadd.f32 %v2575, %v2691
  %v2693 = vpop.f32.mrb[0].mxu0
  %v2694 = vpop.f32.mrb[0].mxu0
  %v2695 = vadd.f32 %v2575, %v2694
  %v2696 = vpop.f32.mrb[0].mxu0
  %2697 = vmatprep.mubr.bf16.mxu0 %v1252
  %2698 = vmatmul.mubr.bf16.gmra.mrb[0].mxu0 %v1251
  %v2699 = vpop.f32.mrb[0].mxu0
  %v2700 = vadd.f32 %v2575, %v2699
  %v2701 = vpop.f32.mrb[0].mxu0
  %v2702 = vpop.f32.mrb[0].mxu0
  %v2703 = vadd.f32 %v2575, %v2702
  %v2704 = vpop.f32.mrb[0].mxu0
  %2705 = vmatprep.mubr.bf16.mxu0 %v1256
  %2706 = vmatmul.mubr.bf16.gmra.mrb[0].mxu0 %v1255
  %v2707 = vpop.f32.mrb[0].mxu0
  %v2708 = vadd.f32 %v2575, %v2707
  %v2709 = vpop.f32.mrb[0].mxu0
  %v2710 = vpop.f32.mrb[0].mxu0
  %v2711 = vadd.f32 %v2575, %v2710
  %v2712 = vpop.f32.mrb[0].mxu0
  %2713 = vmatprep.mubr.bf16.mxu0 %v1260
  %2714 = vmatmul.mubr.bf16.gmra.mrb[0].mxu0 %v1259
  %v2715 = vpop.f32.mrb[0].mxu0
  %v2716 = vadd.f32 %v2575, %v2715
  %v2717 = vpop.f32.mrb[0].mxu0
  %v2718 = vpop.f32.mrb[0].mxu0
  %v2719 = vadd.f32 %v2575, %v2718
  %v2720 = vpop.f32.mrb[0].mxu0
  %2721 = vmatprep.mubr.bf16.mxu0 %v1264
  %2722 = vmatmul.mubr.bf16.gmra.mrb[0].mxu0 %v1263
  %v2723 = vpop.f32.mrb[0].mxu0
  %v2724 = vadd.f32 %v2575, %v2723
  %v2725 = vpop.f32.mrb[0].mxu0
  %v2726 = vpop.f32.mrb[0].mxu0
  %v2727 = vadd.f32 %v2575, %v2726
  %v2728 = vpop.f32.mrb[0].mxu0
  %2729 = vmatprep.mubr.bf16.mxu0 %v1268
  %2730 = vmatmul.mubr.bf16.gmra.mrb[0].mxu0 %v1267
  %v2731 = vpop.f32.mrb[0].mxu0
  %v2732 = vadd.f32 %v2575, %v2731
  %v2733 = vpop.f32.mrb[0].mxu0
  %v2734 = vpop.f32.mrb[0].mxu0
  %v2735 = vadd.f32 %v2575, %v2734
  %v2736 = vpop.f32.mrb[0].mxu0
  %2737 = vmatprep.mubr.bf16.mxu0 %v1272
  %2738 = vmatmul.mubr.bf16.gmra.mrb[0].mxu0 %v1271
  %v2739 = vpop.f32.mrb[0].mxu0
  %v2740 = vadd.f32 %v2575, %v2739
  %v2741 = vpop.f32.mrb[0].mxu0
  %v2742 = vpop.f32.mrb[0].mxu0
  %v2743 = vadd.f32 %v2575, %v2742
  %v2744 = vpop.f32.mrb[0].mxu0
  %2745 = vmatprep.mubr.bf16.mxu0 %v1276
  %2746 = vmatmul.mubr.bf16.gmra.mrb[0].mxu0 %v1275
  %v2747 = vpop.f32.mrb[0].mxu0
  %v2748 = vadd.f32 %v2575, %v2747
  %v2749 = vpop.f32.mrb[0].mxu0
  %v2750 = vpop.f32.mrb[0].mxu0
  %v2751 = vadd.f32 %v2575, %v2750
  %v2752 = vpop.f32.mrb[0].mxu0
  %2753 = vmatprep.mubr.bf16.mxu0 %v1280
  %2754 = vmatmul.mubr.bf16.gmra.mrb[0].mxu0 %v1279
  %v2755 = vpop.f32.mrb[0].mxu0
  %v2756 = vadd.f32 %v2575, %v2755
  %v2757 = vpop.f32.mrb[0].mxu0
  %v2758 = vpop.f32.mrb[0].mxu0
  %v2759 = vadd.f32 %v2575, %v2758
  %v2760 = vpop.f32.mrb[0].mxu0
  %2761 = vmatprep.mubr.bf16.mxu0 %v1284
  %2762 = vmatmul.mubr.bf16.gmra.mrb[0].mxu0 %v1283
  %v2763 = vpop.f32.mrb[0].mxu0
  %v2764 = vadd.f32 %v2575, %v2763
  %v2765 = vpop.f32.mrb[0].mxu0
  %v2766 = vpop.f32.mrb[0].mxu0
  %v2767 = vadd.f32 %v2575, %v2766
  %v2768 = vpop.f32.mrb[0].mxu0
  %2769 = vmatprep.mubr.bf16.mxu0 %v1288
  %2770 = vmatmul.mubr.bf16.gmra.mrb[0].mxu0 %v1287
  %v2771 = vpop.f32.mrb[0].mxu0
  %v2772 = vadd.f32 %v2575, %v2771
  %v2773 = vpop.f32.mrb[0].mxu0
  %v2774 = vpop.f32.mrb[0].mxu0
  %v2775 = vadd.f32 %v2575, %v2774
  %v2776 = vpop.f32.mrb[0].mxu0
  %2777 = vmatprep.mubr.bf16.mxu0 %v1292
  %2778 = vmatmul.mubr.bf16.gmra.mrb[0].mxu0 %v1291
  %v2779 = vpop.f32.mrb[0].mxu0
  %v2780 = vadd.f32 %v2575, %v2779
  %v2781 = vpop.f32.mrb[0].mxu0
  %v2782 = vpop.f32.mrb[0].mxu0
  %v2783 = vadd.f32 %v2575, %v2782
  %v2784 = vpop.f32.mrb[0].mxu0
  %2785 = vmatprep.mubr.bf16.mxu0 %v1296
  %2786 = vmatmul.mubr.bf16.gmra.mrb[0].mxu0 %v1295
  %v2787 = vpop.f32.mrb[0].mxu0
  %v2788 = vadd.f32 %v2575, %v2787
  %v2789 = vpop.f32.mrb[0].mxu0
  %v2790 = vpop.f32.mrb[0].mxu0
  %v2791 = vadd.f32 %v2575, %v2790
  %v2792 = vpop.f32.mrb[0].mxu0
  %2793 = vmatprep.mubr.bf16.mxu0 %v1300
  %2794 = vmatmul.mubr.bf16.gmra.mrb[0].mxu0 %v1299
  %v2795 = vpop.f32.mrb[0].mxu0
  %v2796 = vadd.f32 %v2575, %v2795
  %v2797 = vpop.f32.mrb[0].mxu0
  %v2798 = vpop.f32.mrb[0].mxu0
  %v2799 = vadd.f32 %v2575, %v2798
  %v2800 = vpop.f32.mrb[0].mxu0
  %2801 = vmatprep.mubr.bf16.mxu0 %v1304
  %2802 = vmatmul.mubr.bf16.gmra.mrb[0].mxu0 %v1303
  %v2803 = vpop.f32.mrb[0].mxu0
  %v2804 = vadd.f32 %v2575, %v2803
  %v2805 = vpop.f32.mrb[0].mxu0
  %v2806 = vpop.f32.mrb[0].mxu0
  %v2807 = vadd.f32 %v2575, %v2806
  %v2808 = vpop.f32.mrb[0].mxu0
  %2809 = vmatprep.mubr.bf16.mxu0 %v1308
  %2810 = vmatmul.mubr.bf16.gmra.mrb[0].mxu0 %v1307
  %v2811 = vpop.f32.mrb[0].mxu0
  %v2812 = vadd.f32 %v2575, %v2811
  %v2813 = vpop.f32.mrb[0].mxu0
  %v2814 = vpop.f32.mrb[0].mxu0
  %v2815 = vadd.f32 %v2575, %v2814
  %v2816 = vpop.f32.mrb[0].mxu0
  %2817 = vmatprep.mubr.bf16.mxu0 %v1312
  %2818 = vmatmul.mubr.bf16.gmra.mrb[0].mxu0 %v1311
  %v2819 = vpop.f32.mrb[0].mxu0
  %v2820 = vadd.f32 %v2575, %v2819
  %v2821 = vpop.f32.mrb[0].mxu0
  %v2822 = vpop.f32.mrb[0].mxu0
  %v2823 = vadd.f32 %v2575, %v2822
  %v2824 = vpop.f32.mrb[0].mxu0
  %2825 = vmatprep.mubr.bf16.mxu0 %v1316
  %2826 = vmatmul.mubr.bf16.gmra.mrb[0].mxu0 %v1315
  %v2827 = vpop.f32.mrb[0].mxu0
  %v2828 = vadd.f32 %v2575, %v2827
  %v2829 = vpop.f32.mrb[0].mxu0
  %v2830 = vpop.f32.mrb[0].mxu0
  %v2831 = vadd.f32 %v2575, %v2830
  %v2832 = vpop.f32.mrb[0].mxu0
  %2833 = vmatprep.mubr.bf16.mxu0 %v1320
  %2834 = vmatmul.mubr.bf16.gmra.mrb[0].mxu0 %v1319
  %v2835 = vpop.f32.mrb[0].mxu0
  %v2836 = vadd.f32 %v2575, %v2835
  %v2837 = vpop.f32.mrb[0].mxu0
  %v2838 = vpop.f32.mrb[0].mxu0
  %v2839 = vadd.f32 %v2575, %v2838
  %v2840 = vpop.f32.mrb[0].mxu0
  %2841 = vmatprep.mubr.bf16.mxu0 %v1324
  %2842 = vmatmul.mubr.bf16.gmra.mrb[0].mxu0 %v1323
  %v2843 = vpop.f32.mrb[0].mxu0
  %v2844 = vadd.f32 %v2575, %v2843
  %v2845 = vpop.f32.mrb[0].mxu0
  %v2846 = vpop.f32.mrb[0].mxu0
  %v2847 = vadd.f32 %v2575, %v2846
  %v2848 = vpop.f32.mrb[0].mxu0
  %2849 = vmatprep.mubr.bf16.mxu0 %v1328
  %2850 = vmatmul.mubr.bf16.gmra.mrb[0].mxu0 %v1327
  %v2851 = vpop.f32.mrb[0].mxu0
  %v2852 = vadd.f32 %v2575, %v2851
  %v2853 = vpop.f32.mrb[0].mxu0
  %v2854 = vpop.f32.mrb[0].mxu0
  %v2855 = vadd.f32 %v2575, %v2854
  %v2856 = vpop.f32.mrb[0].mxu0
  %2857 = vmatprep.mubr.bf16.mxu0 %v1332
  %2858 = vmatmul.mubr.bf16.gmra.mrb[0].mxu0 %v1331
  %v2859 = vpop.f32.mrb[0].mxu0
  %v2860 = vadd.f32 %v2575, %v2859
  %v2861 = vpop.f32.mrb[0].mxu0
  %v2862 = vpop.f32.mrb[0].mxu0
  %v2863 = vadd.f32 %v2575, %v2862
  %v2864 = vpop.f32.mrb[0].mxu0
  %2865 = vdwg.mxu0
  %2866 = vmatprep.subr.bf16.mxu0 0
  %2867 = vmatpush1.bf16.msra.mxu0 %v2554
  %2868 = vmatprep.subr.bf16.mxu0 0
  %2869 = vmatpush1.bf16.msra.mxu0 %v2555
  %2870 = vmatprep.subr.bf16.mxu0 0
  %2871 = vmatpush1.bf16.msra.mxu0 %v2556
  %2872 = vmatprep.subr.bf16.mxu0 0
  %2873 = vmatpush1.bf16.msra.mxu0 %v2557
  %2874 = vmatprep.subr.bf16.mxu0 0
  %2875 = vmatpush1.bf16.msra.mxu0 %v2558
  %2876 = vmatprep.subr.bf16.mxu0 0
  %2877 = vmatpush1.bf16.msra.mxu0 %v2559
  %2878 = vmatprep.subr.bf16.mxu0 0
  %2879 = vmatpush1.bf16.msra.mxu0 %v2560
  %2880 = vmatprep.subr.bf16.mxu0 0
  %2881 = vmatpush1.bf16.msra.mxu0 %v2561
  %2882 = vmatprep.subr.bf16.mxu0 0
  %2883 = vmatpush1.bf16.msra.mxu0 %v2562
  %2884 = vmatprep.subr.bf16.mxu0 0
  %2885 = vmatpush1.bf16.msra.mxu0 %v2563
  %2886 = vmatprep.subr.bf16.mxu0 0
  %2887 = vmatpush1.bf16.msra.mxu0 %v2564
  %2888 = vmatprep.subr.bf16.mxu0 0
  %2889 = vmatpush1.bf16.msra.mxu0 %v2565
  %2890 = vmatprep.subr.bf16.mxu0 0
  %2891 = vmatpush1.bf16.msra.mxu0 %v2566
  %2892 = vmatprep.subr.bf16.mxu0 0
  %2893 = vmatpush1.bf16.msra.mxu0 %v2567
  %2894 = vmatprep.subr.bf16.mxu0 0
  %2895 = vmatpush1.bf16.msra.mxu0 %v2568
  %2896 = vmatprep.subr.bf16.mxu0 0
  %2897 = vmatpush1.bf16.msra.mxu0 %v2569
  %2898 = vmatprep.mubr.bf16.mxu0 %v1210
  %2899 = vmatmul.mubr.bf16.gmra.mrb[0].mxu0 %v1209
  %v2900 = vpop.f32.mrb[0].mxu0
  %v2901 = vadd.f32 %v2612, %v2900
  %v2902 = vpop.f32.mrb[0].mxu0
  %v2903 = vpop.f32.mrb[0].mxu0
  %v2904 = vadd.f32 %v2615, %v2903
  %v2905 = vpop.f32.mrb[0].mxu0
  %2906 = vmatprep.mubr.bf16.mxu0 %v1214
  %2907 = vmatmul.mubr.bf16.gmra.mrb[0].mxu0 %v1213
  %v2908 = vpop.f32.mrb[0].mxu0
  %v2909 = vadd.f32 %v2620, %v2908
  %v2910 = vpop.f32.mrb[0].mxu0
  %v2911 = vpop.f32.mrb[0].mxu0
  %v2912 = vadd.f32 %v2623, %v2911
  %v2913 = vpop.f32.mrb[0].mxu0
  %2914 = vmatprep.mubr.bf16.mxu0 %v1218
  %2915 = vmatmul.mubr.bf16.gmra.mrb[0].mxu0 %v1217
  %v2916 = vpop.f32.mrb[0].mxu0
  %v2917 = vadd.f32 %v2628, %v2916
  %v2918 = vpop.f32.mrb[0].mxu0
  %v2919 = vpop.f32.mrb[0].mxu0
  %v2920 = vadd.f32 %v2631, %v2919
  %v2921 = vpop.f32.mrb[0].mxu0
  %2922 = vmatprep.mubr.bf16.mxu0 %v1222
  %2923 = vmatmul.mubr.bf16.gmra.mrb[0].mxu0 %v1221
  %v2924 = vpop.f32.mrb[0].mxu0
  %v2925 = vadd.f32 %v2636, %v2924
  %v2926 = vpop.f32.mrb[0].mxu0
  %v2927 = vpop.f32.mrb[0].mxu0
  %v2928 = vadd.f32 %v2639, %v2927
  %v2929 = vpop.f32.mrb[0].mxu0
  %2930 = vmatprep.mubr.bf16.mxu0 %v1226
  %2931 = vmatmul.mubr.bf16.gmra.mrb[0].mxu0 %v1225
  %v2932 = vpop.f32.mrb[0].mxu0
  %v2933 = vadd.f32 %v2644, %v2932
  %v2934 = vpop.f32.mrb[0].mxu0
  %v2935 = vpop.f32.mrb[0].mxu0
  %v2936 = vadd.f32 %v2647, %v2935
  %v2937 = vpop.f32.mrb[0].mxu0
  %2938 = vmatprep.mubr.bf16.mxu0 %v1230
  %2939 = vmatmul.mubr.bf16.gmra.mrb[0].mxu0 %v1229
  %v2940 = vpop.f32.mrb[0].mxu0
  %v2941 = vadd.f32 %v2652, %v2940
  %v2942 = vpop.f32.mrb[0].mxu0
  %v2943 = vpop.f32.mrb[0].mxu0
  %v2944 = vadd.f32 %v2655, %v2943
  %v2945 = vpop.f32.mrb[0].mxu0
  %2946 = vmatprep.mubr.bf16.mxu0 %v1234
  %2947 = vmatmul.mubr.bf16.gmra.mrb[0].mxu0 %v1233
  %v2948 = vpop.f32.mrb[0].mxu0
  %v2949 = vadd.f32 %v2660, %v2948
  %v2950 = vpop.f32.mrb[0].mxu0
  %v2951 = vpop.f32.mrb[0].mxu0
  %v2952 = vadd.f32 %v2663, %v2951
  %v2953 = vpop.f32.mrb[0].mxu0
  %2954 = vmatprep.mubr.bf16.mxu0 %v1238
  %2955 = vmatmul.mubr.bf16.gmra.mrb[0].mxu0 %v1237
  %v2956 = vpop.f32.mrb[0].mxu0
  %v2957 = vadd.f32 %v2668, %v2956
  %v2958 = vpop.f32.mrb[0].mxu0
  %v2959 = vpop.f32.mrb[0].mxu0
  %v2960 = vadd.f32 %v2671, %v2959
  %v2961 = vpop.f32.mrb[0].mxu0
  %2962 = vmatprep.mubr.bf16.mxu0 %v1242
  %2963 = vmatmul.mubr.bf16.gmra.mrb[0].mxu0 %v1241
  %v2964 = vpop.f32.mrb[0].mxu0
  %v2965 = vadd.f32 %v2676, %v2964
  %v2966 = vpop.f32.mrb[0].mxu0
  %v2967 = vpop.f32.mrb[0].mxu0
  %v2968 = vadd.f32 %v2679, %v2967
  %v2969 = vpop.f32.mrb[0].mxu0
  %2970 = vmatprep.mubr.bf16.mxu0 %v1246
  %2971 = vmatmul.mubr.bf16.gmra.mrb[0].mxu0 %v1245
  %v2972 = vpop.f32.mrb[0].mxu0
  %v2973 = vadd.f32 %v2684, %v2972
  %v2974 = vpop.f32.mrb[0].mxu0
  %v2975 = vpop.f32.mrb[0].mxu0
  %v2976 = vadd.f32 %v2687, %v2975
  %v2977 = vpop.f32.mrb[0].mxu0
  %2978 = vmatprep.mubr.bf16.mxu0 %v1250
  %2979 = vmatmul.mubr.bf16.gmra.mrb[0].mxu0 %v1249
  %v2980 = vpop.f32.mrb[0].mxu0
  %v2981 = vadd.f32 %v2692, %v2980
  %v2982 = vpop.f32.mrb[0].mxu0
  %v2983 = vpop.f32.mrb[0].mxu0
  %v2984 = vadd.f32 %v2695, %v2983
  %v2985 = vpop.f32.mrb[0].mxu0
  %2986 = vmatprep.mubr.bf16.mxu0 %v1254
  %2987 = vmatmul.mubr.bf16.gmra.mrb[0].mxu0 %v1253
  %v2988 = vpop.f32.mrb[0].mxu0
  %v2989 = vadd.f32 %v2700, %v2988
  %v2990 = vpop.f32.mrb[0].mxu0
  %v2991 = vpop.f32.mrb[0].mxu0
  %v2992 = vadd.f32 %v2703, %v2991
  %v2993 = vpop.f32.mrb[0].mxu0
  %2994 = vmatprep.mubr.bf16.mxu0 %v1258
  %2995 = vmatmul.mubr.bf16.gmra.mrb[0].mxu0 %v1257
  %v2996 = vpop.f32.mrb[0].mxu0
  %v2997 = vadd.f32 %v2708, %v2996
  %v2998 = vpop.f32.mrb[0].mxu0
  %v2999 = vpop.f32.mrb[0].mxu0
  %v3000 = vadd.f32 %v2711, %v2999
  %v3001 = vpop.f32.mrb[0].mxu0
  %3002 = vmatprep.mubr.bf16.mxu0 %v1262
  %3003 = vmatmul.mubr.bf16.gmra.mrb[0].mxu0 %v1261
  %v3004 = vpop.f32.mrb[0].mxu0
  %v3005 = vadd.f32 %v2716, %v3004
  %v3006 = vpop.f32.mrb[0].mxu0
  %v3007 = vpop.f32.mrb[0].mxu0
  %v3008 = vadd.f32 %v2719, %v3007
  %v3009 = vpop.f32.mrb[0].mxu0
  %3010 = vmatprep.mubr.bf16.mxu0 %v1266
  %3011 = vmatmul.mubr.bf16.gmra.mrb[0].mxu0 %v1265
  %v3012 = vpop.f32.mrb[0].mxu0
  %v3013 = vadd.f32 %v2724, %v3012
  %v3014 = vpop.f32.mrb[0].mxu0
  %v3015 = vpop.f32.mrb[0].mxu0
  %v3016 = vadd.f32 %v2727, %v3015
  %v3017 = vpop.f32.mrb[0].mxu0
  %3018 = vmatprep.mubr.bf16.mxu0 %v1270
  %3019 = vmatmul.mubr.bf16.gmra.mrb[0].mxu0 %v1269
  %v3020 = vpop.f32.mrb[0].mxu0
  %v3021 = vadd.f32 %v2732, %v3020
  %v3022 = vpop.f32.mrb[0].mxu0
  %v3023 = vpop.f32.mrb[0].mxu0
  %v3024 = vadd.f32 %v2735, %v3023
  %v3025 = vpop.f32.mrb[0].mxu0
  %3026 = vmatprep.mubr.bf16.mxu0 %v1274
  %3027 = vmatmul.mubr.bf16.gmra.mrb[0].mxu0 %v1273
  %v3028 = vpop.f32.mrb[0].mxu0
  %v3029 = vadd.f32 %v2740, %v3028
  %v3030 = vpop.f32.mrb[0].mxu0
  %v3031 = vpop.f32.mrb[0].mxu0
  %v3032 = vadd.f32 %v2743, %v3031
  %v3033 = vpop.f32.mrb[0].mxu0
  %3034 = vmatprep.mubr.bf16.mxu0 %v1278
  %3035 = vmatmul.mubr.bf16.gmra.mrb[0].mxu0 %v1277
  %v3036 = vpop.f32.mrb[0].mxu0
  %v3037 = vadd.f32 %v2748, %v3036
  %v3038 = vpop.f32.mrb[0].mxu0
  %v3039 = vpop.f32.mrb[0].mxu0
  %v3040 = vadd.f32 %v2751, %v3039
  %v3041 = vpop.f32.mrb[0].mxu0
  %3042 = vmatprep.mubr.bf16.mxu0 %v1282
  %3043 = vmatmul.mubr.bf16.gmra.mrb[0].mxu0 %v1281
  %v3044 = vpop.f32.mrb[0].mxu0
  %v3045 = vadd.f32 %v2756, %v3044
  %v3046 = vpop.f32.mrb[0].mxu0
  %v3047 = vpop.f32.mrb[0].mxu0
  %v3048 = vadd.f32 %v2759, %v3047
  %v3049 = vpop.f32.mrb[0].mxu0
  %3050 = vmatprep.mubr.bf16.mxu0 %v1286
  %3051 = vmatmul.mubr.bf16.gmra.mrb[0].mxu0 %v1285
  %v3052 = vpop.f32.mrb[0].mxu0
  %v3053 = vadd.f32 %v2764, %v3052
  %v3054 = vpop.f32.mrb[0].mxu0
  %v3055 = vpop.f32.mrb[0].mxu0
  %v3056 = vadd.f32 %v2767, %v3055
  %v3057 = vpop.f32.mrb[0].mxu0
  %3058 = vmatprep.mubr.bf16.mxu0 %v1290
  %3059 = vmatmul.mubr.bf16.gmra.mrb[0].mxu0 %v1289
  %v3060 = vpop.f32.mrb[0].mxu0
  %v3061 = vadd.f32 %v2772, %v3060
  %v3062 = vpop.f32.mrb[0].mxu0
  %v3063 = vpop.f32.mrb[0].mxu0
  %v3064 = vadd.f32 %v2775, %v3063
  %v3065 = vpop.f32.mrb[0].mxu0
  %3066 = vmatprep.mubr.bf16.mxu0 %v1294
  %3067 = vmatmul.mubr.bf16.gmra.mrb[0].mxu0 %v1293
  %v3068 = vpop.f32.mrb[0].mxu0
  %v3069 = vadd.f32 %v2780, %v3068
  %v3070 = vpop.f32.mrb[0].mxu0
  %v3071 = vpop.f32.mrb[0].mxu0
  %v3072 = vadd.f32 %v2783, %v3071
  %v3073 = vpop.f32.mrb[0].mxu0
  %3074 = vmatprep.mubr.bf16.mxu0 %v1298
  %3075 = vmatmul.mubr.bf16.gmra.mrb[0].mxu0 %v1297
  %v3076 = vpop.f32.mrb[0].mxu0
  %v3077 = vadd.f32 %v2788, %v3076
  %v3078 = vpop.f32.mrb[0].mxu0
  %v3079 = vpop.f32.mrb[0].mxu0
  %v3080 = vadd.f32 %v2791, %v3079
  %v3081 = vpop.f32.mrb[0].mxu0
  %3082 = vmatprep.mubr.bf16.mxu0 %v1302
  %3083 = vmatmul.mubr.bf16.gmra.mrb[0].mxu0 %v1301
  %v3084 = vpop.f32.mrb[0].mxu0
  %v3085 = vadd.f32 %v2796, %v3084
  %v3086 = vpop.f32.mrb[0].mxu0
  %v3087 = vpop.f32.mrb[0].mxu0
  %v3088 = vadd.f32 %v2799, %v3087
  %v3089 = vpop.f32.mrb[0].mxu0
  %3090 = vmatprep.mubr.bf16.mxu0 %v1306
  %3091 = vmatmul.mubr.bf16.gmra.mrb[0].mxu0 %v1305
  %v3092 = vpop.f32.mrb[0].mxu0
  %v3093 = vadd.f32 %v2804, %v3092
  %v3094 = vpop.f32.mrb[0].mxu0
  %v3095 = vpop.f32.mrb[0].mxu0
  %v3096 = vadd.f32 %v2807, %v3095
  %v3097 = vpop.f32.mrb[0].mxu0
  %3098 = vmatprep.mubr.bf16.mxu0 %v1310
  %3099 = vmatmul.mubr.bf16.gmra.mrb[0].mxu0 %v1309
  %v3100 = vpop.f32.mrb[0].mxu0
  %v3101 = vadd.f32 %v2812, %v3100
  %v3102 = vpop.f32.mrb[0].mxu0
  %v3103 = vpop.f32.mrb[0].mxu0
  %v3104 = vadd.f32 %v2815, %v3103
  %v3105 = vpop.f32.mrb[0].mxu0
  %3106 = vmatprep.mubr.bf16.mxu0 %v1314
  %3107 = vmatmul.mubr.bf16.gmra.mrb[0].mxu0 %v1313
  %v3108 = vpop.f32.mrb[0].mxu0
  %v3109 = vadd.f32 %v2820, %v3108
  %v3110 = vpop.f32.mrb[0].mxu0
  %v3111 = vpop.f32.mrb[0].mxu0
  %v3112 = vadd.f32 %v2823, %v3111
  %v3113 = vpop.f32.mrb[0].mxu0
  %3114 = vmatprep.mubr.bf16.mxu0 %v1318
  %3115 = vmatmul.mubr.bf16.gmra.mrb[0].mxu0 %v1317
  %v3116 = vpop.f32.mrb[0].mxu0
  %v3117 = vadd.f32 %v2828, %v3116
  %v3118 = vpop.f32.mrb[0].mxu0
  %v3119 = vpop.f32.mrb[0].mxu0
  %v3120 = vadd.f32 %v2831, %v3119
  %v3121 = vpop.f32.mrb[0].mxu0
  %3122 = vmatprep.mubr.bf16.mxu0 %v1322
  %3123 = vmatmul.mubr.bf16.gmra.mrb[0].mxu0 %v1321
  %v3124 = vpop.f32.mrb[0].mxu0
  %v3125 = vadd.f32 %v2836, %v3124
  %v3126 = vpop.f32.mrb[0].mxu0
  %v3127 = vpop.f32.mrb[0].mxu0
  %v3128 = vadd.f32 %v2839, %v3127
  %v3129 = vpop.f32.mrb[0].mxu0
  %3130 = vmatprep.mubr.bf16.mxu0 %v1326
  %3131 = vmatmul.mubr.bf16.gmra.mrb[0].mxu0 %v1325
  %v3132 = vpop.f32.mrb[0].mxu0
  %v3133 = vadd.f32 %v2844, %v3132
  %v3134 = vpop.f32.mrb[0].mxu0
  %v3135 = vpop.f32.mrb[0].mxu0
  %v3136 = vadd.f32 %v2847, %v3135
  %v3137 = vpop.f32.mrb[0].mxu0
  %3138 = vmatprep.mubr.bf16.mxu0 %v1330
  %3139 = vmatmul.mubr.bf16.gmra.mrb[0].mxu0 %v1329
  %v3140 = vpop.f32.mrb[0].mxu0
  %v3141 = vadd.f32 %v2852, %v3140
  %v3142 = vpop.f32.mrb[0].mxu0
  %v3143 = vpop.f32.mrb[0].mxu0
  %v3144 = vadd.f32 %v2855, %v3143
  %v3145 = vpop.f32.mrb[0].mxu0
  %3146 = vmatprep.mubr.bf16.mxu0 %v1334
  %3147 = vmatmul.mubr.bf16.gmra.mrb[0].mxu0 %v1333
  %v3148 = vpop.f32.mrb[0].mxu0
  %v3149 = vadd.f32 %v2860, %v3148
  %v3150 = vpop.f32.mrb[0].mxu0
  %v3151 = vpop.f32.mrb[0].mxu0
  %v3152 = vadd.f32 %v2863, %v3151
  %v3153 = vpop.f32.mrb[0].mxu0
  %3154 = vdwg.mxu0
  %v3155 = vmax.f32 %v2901, 0.0
  %v3156 = vmax.f32 %v2904, 0.0
  %v3157 = vmax.f32 %v2909, 0.0
  %v3158 = vmax.f32 %v2912, 0.0
  %v3159 = vmax.f32 %v2917, 0.0
  %v3160 = vmax.f32 %v2920, 0.0
  %v3161 = vmax.f32 %v2925, 0.0
  %v3162 = vmax.f32 %v2928, 0.0
  %v3163 = vmax.f32 %v2933, 0.0
  %v3164 = vmax.f32 %v2936, 0.0
  %v3165 = vmax.f32 %v2941, 0.0
  %v3166 = vmax.f32 %v2944, 0.0
  %v3167 = vmax.f32 %v2949, 0.0
  %v3168 = vmax.f32 %v2952, 0.0
  %v3169 = vmax.f32 %v2957, 0.0
  %v3170 = vmax.f32 %v2960, 0.0
  %v3171 = vmax.f32 %v2965, 0.0
  %v3172 = vmax.f32 %v2968, 0.0
  %v3173 = vmax.f32 %v2973, 0.0
  %v3174 = vmax.f32 %v2976, 0.0
  %v3175 = vmax.f32 %v2981, 0.0
  %v3176 = vmax.f32 %v2984, 0.0
  %v3177 = vmax.f32 %v2989, 0.0
  %v3178 = vmax.f32 %v2992, 0.0
  %v3179 = vmax.f32 %v2997, 0.0
  %v3180 = vmax.f32 %v3000, 0.0
  %v3181 = vmax.f32 %v3005, 0.0
  %v3182 = vmax.f32 %v3008, 0.0
  %v3183 = vmax.f32 %v3013, 0.0
  %v3184 = vmax.f32 %v3016, 0.0
  %v3185 = vmax.f32 %v3021, 0.0
  %v3186 = vmax.f32 %v3024, 0.0
  %v3187 = vmax.f32 %v3029, 0.0
  %v3188 = vmax.f32 %v3032, 0.0
  %v3189 = vmax.f32 %v3037, 0.0
  %v3190 = vmax.f32 %v3040, 0.0
  %v3191 = vmax.f32 %v3045, 0.0
  %v3192 = vmax.f32 %v3048, 0.0
  %v3193 = vmax.f32 %v3053, 0.0
  %v3194 = vmax.f32 %v3056, 0.0
  %v3195 = vmax.f32 %v3061, 0.0
  %v3196 = vmax.f32 %v3064, 0.0
  %v3197 = vmax.f32 %v3069, 0.0
  %v3198 = vmax.f32 %v3072, 0.0
  %v3199 = vmax.f32 %v3077, 0.0
  %v3200 = vmax.f32 %v3080, 0.0
  %v3201 = vmax.f32 %v3085, 0.0
  %v3202 = vmax.f32 %v3088, 0.0
  %v3203 = vmax.f32 %v3093, 0.0
  %v3204 = vmax.f32 %v3096, 0.0
  %v3205 = vmax.f32 %v3101, 0.0
  %v3206 = vmax.f32 %v3104, 0.0
  %v3207 = vmax.f32 %v3109, 0.0
  %v3208 = vmax.f32 %v3112, 0.0
  %v3209 = vmax.f32 %v3117, 0.0
  %v3210 = vmax.f32 %v3120, 0.0
  %v3211 = vmax.f32 %v3125, 0.0
  %v3212 = vmax.f32 %v3128, 0.0
  %v3213 = vmax.f32 %v3133, 0.0
  %v3214 = vmax.f32 %v3136, 0.0
  %v3215 = vmax.f32 %v3141, 0.0
  %v3216 = vmax.f32 %v3144, 0.0
  %v3217 = vmax.f32 %v3149, 0.0
  %v3218 = vmax.f32 %v3152, 0.0
  %v3219 = vpack.c.bf16 %v3156, %v3155
  %v3220 = vpack.c.bf16 %v3158, %v3157
  %v3221 = vpack.c.bf16 %v3160, %v3159
  %v3222 = vpack.c.bf16 %v3162, %v3161
  %v3223 = vpack.c.bf16 %v3164, %v3163
  %v3224 = vpack.c.bf16 %v3166, %v3165
  %v3225 = vpack.c.bf16 %v3168, %v3167
  %v3226 = vpack.c.bf16 %v3170, %v3169
  %v3227 = vpack.c.bf16 %v3172, %v3171
  %v3228 = vpack.c.bf16 %v3174, %v3173
  %v3229 = vpack.c.bf16 %v3176, %v3175
  %v3230 = vpack.c.bf16 %v3178, %v3177
  %v3231 = vpack.c.bf16 %v3180, %v3179
  %v3232 = vpack.c.bf16 %v3182, %v3181
  %v3233 = vpack.c.bf16 %v3184, %v3183
  %v3234 = vpack.c.bf16 %v3186, %v3185
  %v3235 = vpack.c.bf16 %v3188, %v3187
  %v3236 = vpack.c.bf16 %v3190, %v3189
  %v3237 = vpack.c.bf16 %v3192, %v3191
  %v3238 = vpack.c.bf16 %v3194, %v3193
  %v3239 = vpack.c.bf16 %v3196, %v3195
  %v3240 = vpack.c.bf16 %v3198, %v3197
  %v3241 = vpack.c.bf16 %v3200, %v3199
  %v3242 = vpack.c.bf16 %v3202, %v3201
  %v3243 = vpack.c.bf16 %v3204, %v3203
  %v3244 = vpack.c.bf16 %v3206, %v3205
  %v3245 = vpack.c.bf16 %v3208, %v3207
  %v3246 = vpack.c.bf16 %v3210, %v3209
  %v3247 = vpack.c.bf16 %v3212, %v3211
  %v3248 = vpack.c.bf16 %v3214, %v3213
  %v3249 = vpack.c.bf16 %v3216, %v3215
  %v3250 = vpack.c.bf16 %v3218, %v3217
  %v3251 = vld [vmem:[%s6] sm:$0xf]
  %v3252 = vld [vmem:[%s6 + $0x4] sm:$0xf]
  %v3253 = vld [vmem:[%s6 + $0x8] sm:$0xf]
  %v3254 = vld [vmem:[%s6 + $0xc] sm:$0xf]
  %v3255 = vld [vmem:[%s7] sm:$0x1]
  %v3257 = vlaneseq
  %v3258 = vshrl.u32 %v3257, 7
  %v3259 = vsub.s32 0, %v3258
  %v3260 = vrot.slane %v3255, %v3259
  %v3266 = vunpack.c.l.b16 %v3251
  %v3267 = vunpack.c.l.b16 %v3252
  %v3268 = vunpack.c.l.b16 %v3253
  %v3269 = vunpack.c.l.b16 %v3254
  %v3270 = vpack.c.b16 %v3267, %v3266
  %v3271 = vpack.c.b16 %v3269, %v3268
  %v3275 = vsel %vm398, %v3219, 0
  %v3278 = vsel %vm398, %v3220, 0
  %v3281 = vsel %vm398, %v3221, 0
  %v3284 = vsel %vm398, %v3222, 0
  %v3287 = vsel %vm398, %v3223, 0
  %v3290 = vsel %vm398, %v3224, 0
  %v3293 = vsel %vm398, %v3225, 0
  %v3296 = vsel %vm398, %v3226, 0
  %v3299 = vsel %vm398, %v3227, 0
  %v3302 = vsel %vm398, %v3228, 0
  %v3305 = vsel %vm398, %v3229, 0
  %v3308 = vsel %vm398, %v3230, 0
  %v3311 = vsel %vm398, %v3231, 0
  %v3314 = vsel %vm398, %v3232, 0
  %v3317 = vsel %vm398, %v3233, 0
  %v3320 = vsel %vm398, %v3234, 0
  %v3323 = vsel %vm398, %v3235, 0
  %v3326 = vsel %vm398, %v3236, 0
  %v3329 = vsel %vm398, %v3237, 0
  %v3332 = vsel %vm398, %v3238, 0
  %v3335 = vsel %vm398, %v3239, 0
  %v3338 = vsel %vm398, %v3240, 0
  %v3341 = vsel %vm398, %v3241, 0
  %v3344 = vsel %vm398, %v3242, 0
  %v3347 = vsel %vm398, %v3243, 0
  %v3350 = vsel %vm398, %v3244, 0
  %v3353 = vsel %vm398, %v3245, 0
  %v3356 = vsel %vm398, %v3246, 0
  %v3359 = vsel %vm398, %v3247, 0
  %v3362 = vsel %vm398, %v3248, 0
  %v3365 = vsel %vm398, %v3249, 0
  %v3368 = vsel %vm398, %v3250, 0
  %3370 = vmatprep.subr.bf16.mxu0 0
  %3371 = vmatpush1.bf16.msra.mxu0 %v3270
  %3372 = vmatprep.subr.bf16.mxu0 0
  %3373 = vmatpush1.bf16.msra.mxu0 %v3271
  %3374 = vmatprep.subr.bf16.mxu0 0
  %3375 = vmatpush1.bf16.msra.mxu0 0
  %3376 = vmatprep.subr.bf16.mxu0 0
  %3377 = vmatpush1.bf16.msra.mxu0 0
  %3378 = vmatprep.subr.bf16.mxu0 0
  %3379 = vmatpush1.bf16.msra.mxu0 0
  %3380 = vmatprep.subr.bf16.mxu0 0
  %3381 = vmatpush1.bf16.msra.mxu0 0
  %3382 = vmatprep.subr.bf16.mxu0 0
  %3383 = vmatpush1.bf16.msra.mxu0 0
  %3384 = vmatprep.subr.bf16.mxu0 0
  %3385 = vmatpush1.bf16.msra.mxu0 0
  %3386 = vmatprep.subr.bf16.mxu0 0
  %3387 = vmatpush1.bf16.msra.mxu0 0
  %3388 = vmatprep.subr.bf16.mxu0 0
  %3389 = vmatpush1.bf16.msra.mxu0 0
  %3390 = vmatprep.subr.bf16.mxu0 0
  %3391 = vmatpush1.bf16.msra.mxu0 0
  %3392 = vmatprep.subr.bf16.mxu0 0
  %3393 = vmatpush1.bf16.msra.mxu0 0
  %3394 = vmatprep.subr.bf16.mxu0 0
  %3395 = vmatpush1.bf16.msra.mxu0 0
  %3396 = vmatprep.subr.bf16.mxu0 0
  %3397 = vmatpush1.bf16.msra.mxu0 0
  %3398 = vmatprep.subr.bf16.mxu0 0
  %3399 = vmatpush1.bf16.msra.mxu0 0
  %3400 = vmatprep.subr.bf16.mxu0 0
  %3401 = vmatpush1.bf16.msra.mxu0 0
  %3402 = vmatprep.mubr.bf16.mxu0 0
  %3403 = vmatmul.mubr.bf16.gmra.mrb[0].mxu0 %v3275
  %v3404 = vpop.f32.mrb[0].mxu0
  %v3405 = vadd.f32 %v3260, %v3404
  %v3406 = vpop.f32.mrb[0].mxu0
  %v3407 = vpop.f32.mrb[0].mxu0
  %v3408 = vadd.f32 %v3260, %v3407
  %v3409 = vpop.f32.mrb[0].mxu0
  %3410 = vmatprep.mubr.bf16.mxu0 0
  %3411 = vmatmul.mubr.bf16.gmra.mrb[0].mxu0 %v3278
  %v3412 = vpop.f32.mrb[0].mxu0
  %v3413 = vadd.f32 %v3260, %v3412
  %v3414 = vpop.f32.mrb[0].mxu0
  %v3415 = vpop.f32.mrb[0].mxu0
  %v3416 = vadd.f32 %v3260, %v3415
  %v3417 = vpop.f32.mrb[0].mxu0
  %3418 = vmatprep.mubr.bf16.mxu0 0
  %3419 = vmatmul.mubr.bf16.gmra.mrb[0].mxu0 %v3281
  %v3420 = vpop.f32.mrb[0].mxu0
  %v3421 = vadd.f32 %v3260, %v3420
  %v3422 = vpop.f32.mrb[0].mxu0
  %v3423 = vpop.f32.mrb[0].mxu0
  %v3424 = vadd.f32 %v3260, %v3423
  %v3425 = vpop.f32.mrb[0].mxu0
  %3426 = vmatprep.mubr.bf16.mxu0 0
  %3427 = vmatmul.mubr.bf16.gmra.mrb[0].mxu0 %v3284
  %v3428 = vpop.f32.mrb[0].mxu0
  %v3429 = vadd.f32 %v3260, %v3428
  %v3430 = vpop.f32.mrb[0].mxu0
  %v3431 = vpop.f32.mrb[0].mxu0
  %v3432 = vadd.f32 %v3260, %v3431
  %v3433 = vpop.f32.mrb[0].mxu0
  %3434 = vmatprep.mubr.bf16.mxu0 0
  %3435 = vmatmul.mubr.bf16.gmra.mrb[0].mxu0 %v3287
  %v3436 = vpop.f32.mrb[0].mxu0
  %v3437 = vadd.f32 %v3260, %v3436
  %v3438 = vpop.f32.mrb[0].mxu0
  %v3439 = vpop.f32.mrb[0].mxu0
  %v3440 = vadd.f32 %v3260, %v3439
  %v3441 = vpop.f32.mrb[0].mxu0
  %3442 = vmatprep.mubr.bf16.mxu0 0
  %3443 = vmatmul.mubr.bf16.gmra.mrb[0].mxu0 %v3290
  %v3444 = vpop.f32.mrb[0].mxu0
  %v3445 = vadd.f32 %v3260, %v3444
  %v3446 = vpop.f32.mrb[0].mxu0
  %v3447 = vpop.f32.mrb[0].mxu0
  %v3448 = vadd.f32 %v3260, %v3447
  %v3449 = vpop.f32.mrb[0].mxu0
  %3450 = vmatprep.mubr.bf16.mxu0 0
  %3451 = vmatmul.mubr.bf16.gmra.mrb[0].mxu0 %v3293
  %v3452 = vpop.f32.mrb[0].mxu0
  %v3453 = vadd.f32 %v3260, %v3452
  %v3454 = vpop.f32.mrb[0].mxu0
  %v3455 = vpop.f32.mrb[0].mxu0
  %v3456 = vadd.f32 %v3260, %v3455
  %v3457 = vpop.f32.mrb[0].mxu0
  %3458 = vmatprep.mubr.bf16.mxu0 0
  %3459 = vmatmul.mubr.bf16.gmra.mrb[0].mxu0 %v3296
  %v3460 = vpop.f32.mrb[0].mxu0
  %v3461 = vadd.f32 %v3260, %v3460
  %v3462 = vpop.f32.mrb[0].mxu0
  %v3463 = vpop.f32.mrb[0].mxu0
  %v3464 = vadd.f32 %v3260, %v3463
  %v3465 = vpop.f32.mrb[0].mxu0
  %3466 = vmatprep.mubr.bf16.mxu0 0
  %3467 = vmatmul.mubr.bf16.gmra.mrb[0].mxu0 %v3299
  %v3468 = vpop.f32.mrb[0].mxu0
  %v3469 = vadd.f32 %v3260, %v3468
  %v3470 = vpop.f32.mrb[0].mxu0
  %v3471 = vpop.f32.mrb[0].mxu0
  %v3472 = vadd.f32 %v3260, %v3471
  %v3473 = vpop.f32.mrb[0].mxu0
  %3474 = vmatprep.mubr.bf16.mxu0 0
  %3475 = vmatmul.mubr.bf16.gmra.mrb[0].mxu0 %v3302
  %v3476 = vpop.f32.mrb[0].mxu0
  %v3477 = vadd.f32 %v3260, %v3476
  %v3478 = vpop.f32.mrb[0].mxu0
  %v3479 = vpop.f32.mrb[0].mxu0
  %v3480 = vadd.f32 %v3260, %v3479
  %v3481 = vpop.f32.mrb[0].mxu0
  %3482 = vmatprep.mubr.bf16.mxu0 0
  %3483 = vmatmul.mubr.bf16.gmra.mrb[0].mxu0 %v3305
  %v3484 = vpop.f32.mrb[0].mxu0
  %v3485 = vadd.f32 %v3260, %v3484
  %v3486 = vpop.f32.mrb[0].mxu0
  %v3487 = vpop.f32.mrb[0].mxu0
  %v3488 = vadd.f32 %v3260, %v3487
  %v3489 = vpop.f32.mrb[0].mxu0
  %3490 = vmatprep.mubr.bf16.mxu0 0
  %3491 = vmatmul.mubr.bf16.gmra.mrb[0].mxu0 %v3308
  %v3492 = vpop.f32.mrb[0].mxu0
  %v3493 = vadd.f32 %v3260, %v3492
  %v3494 = vpop.f32.mrb[0].mxu0
  %v3495 = vpop.f32.mrb[0].mxu0
  %v3496 = vadd.f32 %v3260, %v3495
  %v3497 = vpop.f32.mrb[0].mxu0
  %3498 = vmatprep.mubr.bf16.mxu0 0
  %3499 = vmatmul.mubr.bf16.gmra.mrb[0].mxu0 %v3311
  %v3500 = vpop.f32.mrb[0].mxu0
  %v3501 = vadd.f32 %v3260, %v3500
  %v3502 = vpop.f32.mrb[0].mxu0
  %v3503 = vpop.f32.mrb[0].mxu0
  %v3504 = vadd.f32 %v3260, %v3503
  %v3505 = vpop.f32.mrb[0].mxu0
  %3506 = vmatprep.mubr.bf16.mxu0 0
  %3507 = vmatmul.mubr.bf16.gmra.mrb[0].mxu0 %v3314
  %v3508 = vpop.f32.mrb[0].mxu0
  %v3509 = vadd.f32 %v3260, %v3508
  %v3510 = vpop.f32.mrb[0].mxu0
  %v3511 = vpop.f32.mrb[0].mxu0
  %v3512 = vadd.f32 %v3260, %v3511
  %v3513 = vpop.f32.mrb[0].mxu0
  %3514 = vmatprep.mubr.bf16.mxu0 0
  %3515 = vmatmul.mubr.bf16.gmra.mrb[0].mxu0 %v3317
  %v3516 = vpop.f32.mrb[0].mxu0
  %v3517 = vadd.f32 %v3260, %v3516
  %v3518 = vpop.f32.mrb[0].mxu0
  %v3519 = vpop.f32.mrb[0].mxu0
  %v3520 = vadd.f32 %v3260, %v3519
  %v3521 = vpop.f32.mrb[0].mxu0
  %3522 = vmatprep.mubr.bf16.mxu0 0
  %3523 = vmatmul.mubr.bf16.gmra.mrb[0].mxu0 %v3320
  %v3524 = vpop.f32.mrb[0].mxu0
  %v3525 = vadd.f32 %v3260, %v3524
  %v3526 = vpop.f32.mrb[0].mxu0
  %v3527 = vpop.f32.mrb[0].mxu0
  %v3528 = vadd.f32 %v3260, %v3527
  %v3529 = vpop.f32.mrb[0].mxu0
  %3530 = vmatprep.mubr.bf16.mxu0 0
  %3531 = vmatmul.mubr.bf16.gmra.mrb[0].mxu0 %v3323
  %v3532 = vpop.f32.mrb[0].mxu0
  %v3533 = vadd.f32 %v3260, %v3532
  %v3534 = vpop.f32.mrb[0].mxu0
  %v3535 = vpop.f32.mrb[0].mxu0
  %v3536 = vadd.f32 %v3260, %v3535
  %v3537 = vpop.f32.mrb[0].mxu0
  %3538 = vmatprep.mubr.bf16.mxu0 0
  %3539 = vmatmul.mubr.bf16.gmra.mrb[0].mxu0 %v3326
  %v3540 = vpop.f32.mrb[0].mxu0
  %v3541 = vadd.f32 %v3260, %v3540
  %v3542 = vpop.f32.mrb[0].mxu0
  %v3543 = vpop.f32.mrb[0].mxu0
  %v3544 = vadd.f32 %v3260, %v3543
  %v3545 = vpop.f32.mrb[0].mxu0
  %3546 = vmatprep.mubr.bf16.mxu0 0
  %3547 = vmatmul.mubr.bf16.gmra.mrb[0].mxu0 %v3329
  %v3548 = vpop.f32.mrb[0].mxu0
  %v3549 = vadd.f32 %v3260, %v3548
  %v3550 = vpop.f32.mrb[0].mxu0
  %v3551 = vpop.f32.mrb[0].mxu0
  %v3552 = vadd.f32 %v3260, %v3551
  %v3553 = vpop.f32.mrb[0].mxu0
  %3554 = vmatprep.mubr.bf16.mxu0 0
  %3555 = vmatmul.mubr.bf16.gmra.mrb[0].mxu0 %v3332
  %v3556 = vpop.f32.mrb[0].mxu0
  %v3557 = vadd.f32 %v3260, %v3556
  %v3558 = vpop.f32.mrb[0].mxu0
  %v3559 = vpop.f32.mrb[0].mxu0
  %v3560 = vadd.f32 %v3260, %v3559
  %v3561 = vpop.f32.mrb[0].mxu0
  %3562 = vmatprep.mubr.bf16.mxu0 0
  %3563 = vmatmul.mubr.bf16.gmra.mrb[0].mxu0 %v3335
  %v3564 = vpop.f32.mrb[0].mxu0
  %v3565 = vadd.f32 %v3260, %v3564
  %v3566 = vpop.f32.mrb[0].mxu0
  %v3567 = vpop.f32.mrb[0].mxu0
  %v3568 = vadd.f32 %v3260, %v3567
  %v3569 = vpop.f32.mrb[0].mxu0
  %3570 = vmatprep.mubr.bf16.mxu0 0
  %3571 = vmatmul.mubr.bf16.gmra.mrb[0].mxu0 %v3338
  %v3572 = vpop.f32.mrb[0].mxu0
  %v3573 = vadd.f32 %v3260, %v3572
  %v3574 = vpop.f32.mrb[0].mxu0
  %v3575 = vpop.f32.mrb[0].mxu0
  %v3576 = vadd.f32 %v3260, %v3575
  %v3577 = vpop.f32.mrb[0].mxu0
  %3578 = vmatprep.mubr.bf16.mxu0 0
  %3579 = vmatmul.mubr.bf16.gmra.mrb[0].mxu0 %v3341
  %v3580 = vpop.f32.mrb[0].mxu0
  %v3581 = vadd.f32 %v3260, %v3580
  %v3582 = vpop.f32.mrb[0].mxu0
  %v3583 = vpop.f32.mrb[0].mxu0
  %v3584 = vadd.f32 %v3260, %v3583
  %v3585 = vpop.f32.mrb[0].mxu0
  %3586 = vmatprep.mubr.bf16.mxu0 0
  %3587 = vmatmul.mubr.bf16.gmra.mrb[0].mxu0 %v3344
  %v3588 = vpop.f32.mrb[0].mxu0
  %v3589 = vadd.f32 %v3260, %v3588
  %v3590 = vpop.f32.mrb[0].mxu0
  %v3591 = vpop.f32.mrb[0].mxu0
  %v3592 = vadd.f32 %v3260, %v3591
  %v3593 = vpop.f32.mrb[0].mxu0
  %3594 = vmatprep.mubr.bf16.mxu0 0
  %3595 = vmatmul.mubr.bf16.gmra.mrb[0].mxu0 %v3347
  %v3596 = vpop.f32.mrb[0].mxu0
  %v3597 = vadd.f32 %v3260, %v3596
  %v3598 = vpop.f32.mrb[0].mxu0
  %v3599 = vpop.f32.mrb[0].mxu0
  %v3600 = vadd.f32 %v3260, %v3599
  %v3601 = vpop.f32.mrb[0].mxu0
  %3602 = vmatprep.mubr.bf16.mxu0 0
  %3603 = vmatmul.mubr.bf16.gmra.mrb[0].mxu0 %v3350
  %v3604 = vpop.f32.mrb[0].mxu0
  %v3605 = vadd.f32 %v3260, %v3604
  %v3606 = vpop.f32.mrb[0].mxu0
  %v3607 = vpop.f32.mrb[0].mxu0
  %v3608 = vadd.f32 %v3260, %v3607
  %v3609 = vpop.f32.mrb[0].mxu0
  %3610 = vmatprep.mubr.bf16.mxu0 0
  %3611 = vmatmul.mubr.bf16.gmra.mrb[0].mxu0 %v3353
  %v3612 = vpop.f32.mrb[0].mxu0
  %v3613 = vadd.f32 %v3260, %v3612
  %v3614 = vpop.f32.mrb[0].mxu0
  %v3615 = vpop.f32.mrb[0].mxu0
  %v3616 = vadd.f32 %v3260, %v3615
  %v3617 = vpop.f32.mrb[0].mxu0
  %3618 = vmatprep.mubr.bf16.mxu0 0
  %3619 = vmatmul.mubr.bf16.gmra.mrb[0].mxu0 %v3356
  %v3620 = vpop.f32.mrb[0].mxu0
  %v3621 = vadd.f32 %v3260, %v3620
  %v3622 = vpop.f32.mrb[0].mxu0
  %v3623 = vpop.f32.mrb[0].mxu0
  %v3624 = vadd.f32 %v3260, %v3623
  %v3625 = vpop.f32.mrb[0].mxu0
  %3626 = vmatprep.mubr.bf16.mxu0 0
  %3627 = vmatmul.mubr.bf16.gmra.mrb[0].mxu0 %v3359
  %v3628 = vpop.f32.mrb[0].mxu0
  %v3629 = vadd.f32 %v3260, %v3628
  %v3630 = vpop.f32.mrb[0].mxu0
  %v3631 = vpop.f32.mrb[0].mxu0
  %v3632 = vadd.f32 %v3260, %v3631
  %v3633 = vpop.f32.mrb[0].mxu0
  %3634 = vmatprep.mubr.bf16.mxu0 0
  %3635 = vmatmul.mubr.bf16.gmra.mrb[0].mxu0 %v3362
  %v3636 = vpop.f32.mrb[0].mxu0
  %v3637 = vadd.f32 %v3260, %v3636
  %v3638 = vpop.f32.mrb[0].mxu0
  %v3639 = vpop.f32.mrb[0].mxu0
  %v3640 = vadd.f32 %v3260, %v3639
  %v3641 = vpop.f32.mrb[0].mxu0
  %3642 = vmatprep.mubr.bf16.mxu0 0
  %3643 = vmatmul.mubr.bf16.gmra.mrb[0].mxu0 %v3365
  %v3644 = vpop.f32.mrb[0].mxu0
  %v3645 = vadd.f32 %v3260, %v3644
  %v3646 = vpop.f32.mrb[0].mxu0
  %v3647 = vpop.f32.mrb[0].mxu0
  %v3648 = vadd.f32 %v3260, %v3647
  %v3649 = vpop.f32.mrb[0].mxu0
  %3650 = vmatprep.mubr.bf16.mxu0 0
  %3651 = vmatmul.mubr.bf16.gmra.mrb[0].mxu0 %v3368
  %v3652 = vpop.f32.mrb[0].mxu0
  %v3653 = vadd.f32 %v3260, %v3652
  %v3654 = vpop.f32.mrb[0].mxu0
  %v3655 = vpop.f32.mrb[0].mxu0
  %v3656 = vadd.f32 %v3260, %v3655
  %v3657 = vpop.f32.mrb[0].mxu0
  %3658 = vdwg.mxu0
  %vm3659 = vcmask 64512
  %3660 = vst.msk [vmem:[%s8] sm:$0xff] %vm3659, %v3405
  %3661 = vst.msk [vmem:[%s8 + $0x8] sm:$0xff] %vm3659, %v3408
  %3662 = vst.msk [vmem:[%s8 + $0x10] sm:$0xff] %vm3659, %v3413
  %3663 = vst.msk [vmem:[%s8 + $0x18] sm:$0xff] %vm3659, %v3416
  %3664 = vst.msk [vmem:[%s8 + $0x20] sm:$0xff] %vm3659, %v3421
  %3665 = vst.msk [vmem:[%s8 + $0x28] sm:$0xff] %vm3659, %v3424
  %3666 = vst.msk [vmem:[%s8 + $0x30] sm:$0xff] %vm3659, %v3429
  %3667 = vst.msk [vmem:[%s8 + $0x38] sm:$0xff] %vm3659, %v3432
  %3668 = vst.msk [vmem:[%s8 + $0x40] sm:$0xff] %vm3659, %v3437
  %3669 = vst.msk [vmem:[%s8 + $0x48] sm:$0xff] %vm3659, %v3440
  %3670 = vst.msk [vmem:[%s8 + $0x50] sm:$0xff] %vm3659, %v3445
  %3671 = vst.msk [vmem:[%s8 + $0x58] sm:$0xff] %vm3659, %v3448
  %3672 = vst.msk [vmem:[%s8 + $0x60] sm:$0xff] %vm3659, %v3453
  %3673 = vst.msk [vmem:[%s8 + $0x68] sm:$0xff] %vm3659, %v3456
  %3674 = vst.msk [vmem:[%s8 + $0x70] sm:$0xff] %vm3659, %v3461
  %3675 = vst.msk [vmem:[%s8 + $0x78] sm:$0xff] %vm3659, %v3464
  %3676 = vst.msk [vmem:[%s8 + $0x80] sm:$0xff] %vm3659, %v3469
  %3677 = vst.msk [vmem:[%s8 + $0x88] sm:$0xff] %vm3659, %v3472
  %3678 = vst.msk [vmem:[%s8 + $0x90] sm:$0xff] %vm3659, %v3477
  %3679 = vst.msk [vmem:[%s8 + $0x98] sm:$0xff] %vm3659, %v3480
  %3680 = vst.msk [vmem:[%s8 + $0xa0] sm:$0xff] %vm3659, %v3485
  %3681 = vst.msk [vmem:[%s8 + $0xa8] sm:$0xff] %vm3659, %v3488
  %3682 = vst.msk [vmem:[%s8 + $0xb0] sm:$0xff] %vm3659, %v3493
  %3683 = vst.msk [vmem:[%s8 + $0xb8] sm:$0xff] %vm3659, %v3496
  %3684 = vst.msk [vmem:[%s8 + $0xc0] sm:$0xff] %vm3659, %v3501
  %3685 = vst.msk [vmem:[%s8 + $0xc8] sm:$0xff] %vm3659, %v3504
  %3686 = vst.msk [vmem:[%s8 + $0xd0] sm:$0xff] %vm3659, %v3509
  %3687 = vst.msk [vmem:[%s8 + $0xd8] sm:$0xff] %vm3659, %v3512
  %3688 = vst.msk [vmem:[%s8 + $0xe0] sm:$0xff] %vm3659, %v3517
  %3689 = vst.msk [vmem:[%s8 + $0xe8] sm:$0xff] %vm3659, %v3520
  %3690 = vst.msk [vmem:[%s8 + $0xf0] sm:$0xff] %vm3659, %v3525
  %3691 = vst.msk [vmem:[%s8 + $0xf8] sm:$0xff] %vm3659, %v3528
  %3692 = vst.msk [vmem:[%s8 + $0x100] sm:$0xff] %vm3659, %v3533
  %3693 = vst.msk [vmem:[%s8 + $0x108] sm:$0xff] %vm3659, %v3536
  %3694 = vst.msk [vmem:[%s8 + $0x110] sm:$0xff] %vm3659, %v3541
  %3695 = vst.msk [vmem:[%s8 + $0x118] sm:$0xff] %vm3659, %v3544
  %3696 = vst.msk [vmem:[%s8 + $0x120] sm:$0xff] %vm3659, %v3549
  %3697 = vst.msk [vmem:[%s8 + $0x128] sm:$0xff] %vm3659, %v3552
  %3698 = vst.msk [vmem:[%s8 + $0x130] sm:$0xff] %vm3659, %v3557
  %3699 = vst.msk [vmem:[%s8 + $0x138] sm:$0xff] %vm3659, %v3560
  %3700 = vst.msk [vmem:[%s8 + $0x140] sm:$0xff] %vm3659, %v3565
  %3701 = vst.msk [vmem:[%s8 + $0x148] sm:$0xff] %vm3659, %v3568
  %3702 = vst.msk [vmem:[%s8 + $0x150] sm:$0xff] %vm3659, %v3573
  %3703 = vst.msk [vmem:[%s8 + $0x158] sm:$0xff] %vm3659, %v3576
  %3704 = vst.msk [vmem:[%s8 + $0x160] sm:$0xff] %vm3659, %v3581
  %3705 = vst.msk [vmem:[%s8 + $0x168] sm:$0xff] %vm3659, %v3584
  %3706 = vst.msk [vmem:[%s8 + $0x170] sm:$0xff] %vm3659, %v3589
  %3707 = vst.msk [vmem:[%s8 + $0x178] sm:$0xff] %vm3659, %v3592
  %3708 = vst.msk [vmem:[%s8 + $0x180] sm:$0xff] %vm3659, %v3597
  %3709 = vst.msk [vmem:[%s8 + $0x188] sm:$0xff] %vm3659, %v3600
  %3710 = vst.msk [vmem:[%s8 + $0x190] sm:$0xff] %vm3659, %v3605
  %3711 = vst.msk [vmem:[%s8 + $0x198] sm:$0xff] %vm3659, %v3608
  %3712 = vst.msk [vmem:[%s8 + $0x1a0] sm:$0xff] %vm3659, %v3613
  %3713 = vst.msk [vmem:[%s8 + $0x1a8] sm:$0xff] %vm3659, %v3616
  %3714 = vst.msk [vmem:[%s8 + $0x1b0] sm:$0xff] %vm3659, %v3621
  %3715 = vst.msk [vmem:[%s8 + $0x1b8] sm:$0xff] %vm3659, %v3624
  %3716 = vst.msk [vmem:[%s8 + $0x1c0] sm:$0xff] %vm3659, %v3629
  %3717 = vst.msk [vmem:[%s8 + $0x1c8] sm:$0xff] %vm3659, %v3632
  %3718 = vst.msk [vmem:[%s8 + $0x1d0] sm:$0xff] %vm3659, %v3637
  %3719 = vst.msk [vmem:[%s8 + $0x1d8] sm:$0xff] %vm3659, %v3640
  %3720 = vst.msk [vmem:[%s8 + $0x1e0] sm:$0xff] %vm3659, %v3645
  %3721 = vst.msk [vmem:[%s8 + $0x1e8] sm:$0xff] %vm3659, %v3648
  %3722 = vst.msk [vmem:[%s8 + $0x1f0] sm:$0xff] %vm3659, %v3653
  %3723 = vst.msk [vmem:[%s8 + $0x1f8] sm:$0xff] %vm3659, %v3656
  // Predicated region
  $region34: #{sgmae_forward.1} parent=0 // pred_check
    _
  $region35: #{sgmae_forward.1} parent=0 // pred_check_branch
    %3725 = sbr.rel (0) target = $region37
  $region36: #{sgmae_forward.1} parent=0 // pred_region
    _
  $region37: #{sgmae_forward.1} parent=0 // pred_fallthru
    _
  // Predicated region
  $region38: #{sgmae_forward.1} parent=0 // pred_check
    _
  $region39: #{sgmae_forward.1} parent=0 // pred_check_branch
    %3727 = sbr.rel (0) target = $region41
  $region40: #{sgmae_forward.1} parent=0 // pred_region
    _
  $region41: #{sgmae_forward.1} parent=0 // pred_fallthru
    _

</llo_original>
